<compile_context>
chip_gen: v6e
topology: v6e:2x2x1
jax: 0.10.0
libtpu: 0.0.40
codegen_flags: <defaults>
</compile_context>

<pallas_src>
import jax
import jax.numpy as jnp
from jax import lax
from jax.experimental import pallas as pl
from jax.experimental.pallas import tpu as pltpu

LN_EPS = 1e-5          # nn.LayerNorm default eps
LEAKY_SLOPE = 0.2      # nn.LeakyReLU(negative_slope=0.2)


# ----------------------------------------------------------------------------
# Host-side: exact conv -> dense matrix expansion (gather + mask, no matmul).
#   Returns T of shape (Ci*H*W, Co*Ho*Wo) such that, per sample,
#   x_flat @ T == flatten(conv2d(x))   (torch (C,H,W) row-major flattening).
# ----------------------------------------------------------------------------
def conv_to_dense_t(w, H, W, stride, pad):
    Co, Ci, Kh, Kw = w.shape
    Ho = (H + 2 * pad - Kh) // stride + 1
    Wo = (W + 2 * pad - Kw) // stride + 1

    oh = jnp.arange(Ho)
    ih = jnp.arange(H)
    kh = ih[None, :] - (stride * oh[:, None] - pad)            # (Ho, H)
    ow = jnp.arange(Wo)
    iw = jnp.arange(W)
    kw = iw[None, :] - (stride * ow[:, None] - pad)            # (Wo, W)
    vh = (kh >= 0) & (kh < Kh)
    vw = (kw >= 0) & (kw < Kw)

    gathered = w[:, :,
                 jnp.clip(kh, 0, Kh - 1)[:, :, None, None],
                 jnp.clip(kw, 0, Kw - 1)[None, None, :, :]]    # (Co,Ci,Ho,H,Wo,W)
    mask = vh[:, :, None, None] & vw[None, None, :, :]         # (Ho,H,Wo,W)
    dense = jnp.where(mask[None, None], gathered, 0.0)
    dense = dense.transpose(0, 2, 4, 1, 3, 5)                  # (Co,Ho,Wo,Ci,H,W)
    dense = dense.reshape(Co * Ho * Wo, Ci * H * W)
    return dense.T, Ho, Wo


# ----------------------------------------------------------------------------
# Fused Pallas kernel: whole discriminator forward for one batch tile.
#   Activations: (bt, F) with features on the lane axis (lane-dense).
# ----------------------------------------------------------------------------
def _disc_fused_kernel(x_ref,
                       t1_ref, b1_ref, g1_ref, be1_ref,
                       t2_ref, b2_ref, g2_ref, be2_ref,
                       t3_ref, b3_ref, g3_ref, be3_ref,
                       t4_ref, b4_ref,
                       o_ref):
    def conv_ln_lrelu(a, t_ref, b_ref, g_ref, be_ref):
        z = jnp.dot(a, t_ref[...], preferred_element_type=jnp.float32)
        z = z + b_ref[...]                                     # conv bias
        # Per-sample LayerNorm over the whole (C,H,W) slab == per-row here.
        mean = jnp.mean(z, axis=-1, keepdims=True)
        var = jnp.mean(jnp.square(z - mean), axis=-1, keepdims=True)
        zn = (z - mean) * lax.rsqrt(var + LN_EPS)
        y = zn * g_ref[...] + be_ref[...]                      # elementwise affine
        return jnp.where(y >= 0, y, LEAKY_SLOPE * y)           # LeakyReLU(0.2)

    a = x_ref[...]
    a = conv_ln_lrelu(a, t1_ref, b1_ref, g1_ref, be1_ref)
    a = conv_ln_lrelu(a, t2_ref, b2_ref, g2_ref, be2_ref)
    a = conv_ln_lrelu(a, t3_ref, b3_ref, g3_ref, be3_ref)
    # Final 1x1 conv + Flatten fused in.
    o_ref[...] = (jnp.dot(a, t4_ref[...], preferred_element_type=jnp.float32)
                  + b4_ref[...])


def _round_up(x, m):
    return (x + m - 1) // m * m


# ----------------------------------------------------------------------------
# Forward pass
# ----------------------------------------------------------------------------
def discriminator_forward(params, x_nchw, *, batch_tile=None, min_grid_steps=2):
    B, Ci, H, W = x_nchw.shape
    x_flat = x_nchw.reshape(B, Ci * H * W).astype(jnp.float32)

    w1, b1 = params["conv1"]; g1, be1 = params["ln1"]
    w2, b2 = params["conv2"]; g2, be2 = params["ln2"]
    w3, b3 = params["conv3"]; g3, be3 = params["ln3"]
    w4, b4 = params["conv4"]

    t1, H1, _ = conv_to_dense_t(w1, H, W, stride=2, pad=1)
    t2, H2, _ = conv_to_dense_t(w2, H1, H1, stride=2, pad=1)
    t3, H3, _ = conv_to_dense_t(w3, H2, H2, stride=1, pad=0)
    t4, _, _ = conv_to_dense_t(w4, H3, H3, stride=1, pad=0)

    def row(v):
        return v.reshape(1, -1).astype(jnp.float32)

    b1f = row(jnp.repeat(b1, H1 * H1)); g1f = row(g1); be1f = row(be1)
    b2f = row(jnp.repeat(b2, H2 * H2)); g2f = row(g2); be2f = row(be2)
    b3f = row(jnp.repeat(b3, H3 * H3)); g3f = row(g3); be3f = row(be3)
    b4f = b4.reshape(1, 1).astype(jnp.float32)

    # Batch tiling: sublane-aligned tiles; keep >=2 grid steps (v7x megacore).
    if batch_tile is None:
        batch_tile = max(8, min(256, _round_up(pl.cdiv(B, min_grid_steps), 8)))
    bt = batch_tile
    steps = max(min_grid_steps, pl.cdiv(B, bt))
    Bp = steps * bt
    if Bp != B:
        x_flat = jnp.pad(x_flat, ((0, Bp - B), (0, 0)))

    F0 = x_flat.shape[1]

    def const2d(arr):
        return pl.BlockSpec(arr.shape, lambda i: (0, 0))

    grid_spec = pltpu.PrefetchScalarGridSpec(
        num_scalar_prefetch=0,
        grid=(steps,),
        in_specs=[
            pl.BlockSpec((bt, F0), lambda i: (i, 0)),
            const2d(t1), const2d(b1f), const2d(g1f), const2d(be1f),
            const2d(t2), const2d(b2f), const2d(g2f), const2d(be2f),
            const2d(t3), const2d(b3f), const2d(g3f), const2d(be3f),
            const2d(t4), const2d(b4f),
        ],
        out_specs=pl.BlockSpec((bt, 1), lambda i: (i, 0)),
    )

    out = pl.pallas_call(
        _disc_fused_kernel,
        out_shape=jax.ShapeDtypeStruct((Bp, 1), jnp.float32),
        grid_spec=grid_spec,
        compiler_params=pltpu.CompilerParams(
            dimension_semantics=("parallel",),
            vmem_limit_bytes=32 * 1024 * 1024,
        ),
    )(x_flat, t1, b1f, g1f, be1f, t2, b2f, g2f, be2f, t3, b3f, g3f, be3f, t4, b4f)

    return out[:B]                                             # (B, 1) == Flatten out


# ----------------------------------------------------------------------------
# Parameters (deterministic init; shapes dictated by Discriminator.__init__)
# ----------------------------------------------------------------------------
def init_params(key, input_channels, features, img_size):
    f4, f2 = features // 4, features // 2
    h2, h4 = img_size // 2, img_size // 4
    keys = jax.random.split(key, 4)

    def conv_init(k, co, ci, kh, kw):
        fan_in = ci * kh * kw
        bound = 1.0 / (fan_in ** 0.5)
        kw_, kb = jax.random.split(k)
        w = jax.random.uniform(kw_, (co, ci, kh, kw), jnp.float32, -bound, bound)
        b = jax.random.uniform(kb, (co,), jnp.float32, -bound, bound)
        return w, b

    return {
        "conv1": conv_init(keys[0], f4, input_channels, 4, 4),
        "ln1": (jnp.ones((f4, h2, h2), jnp.float32),
                jnp.zeros((f4, h2, h2), jnp.float32)),
        "conv2": conv_init(keys[1], f2, f4, 4, 4),
        "ln2": (jnp.ones((f2, h4, h4), jnp.float32),
                jnp.zeros((f2, h4, h4), jnp.float32)),
        "conv3": conv_init(keys[2], features, f2, 7, 7),
        "ln3": (jnp.ones((features, 1, 1), jnp.float32),
                jnp.zeros((features, 1, 1), jnp.float32)),
        "conv4": conv_init(keys[3], 1, features, 1, 1),
    }


# ----------------------------------------------------------------------------
# Pure-JAX reference for verification
# ----------------------------------------------------------------------------
def reference_forward(params, x_nchw):
    x = x_nchw.astype(jnp.float32)

    def conv(x, w, b, stride, pad):
        y = lax.conv_general_dilated(
            x, w, (stride, stride), [(pad, pad), (pad, pad)],
            dimension_numbers=("NCHW", "OIHW", "NCHW"),
            precision=lax.Precision.HIGHEST)
        return y + b.reshape(1, -1, 1, 1)

    def ln(x, g, bt):
        mean = jnp.mean(x, axis=(1, 2, 3), keepdims=True)
        var = jnp.mean(jnp.square(x - mean), axis=(1, 2, 3), keepdims=True)
        return (x - mean) / jnp.sqrt(var + LN_EPS) * g[None] + bt[None]

    def lrelu(x):
        return jnp.where(x >= 0, x, LEAKY_SLOPE * x)

    x = lrelu(ln(conv(x, *params["conv1"], 2, 1), *params["ln1"]))
    x = lrelu(ln(conv(x, *params["conv2"], 2, 1), *params["ln2"]))
    x = lrelu(ln(conv(x, *params["conv3"], 1, 0), *params["ln3"]))
    x = conv(x, *params["conv4"], 1, 0)
    return x.reshape(x.shape[0], -1)


if __name__ == "__main__":
    # img_size must be 28: the third conv (k=7, s=1, p=0) requires H=7 -> 1.
    B, C, IMG, FEATURES = 2, 1, 28, 16
    key = jax.random.PRNGKey(0)
    kp, kx = jax.random.split(key)
    params = init_params(kp, C, FEATURES, IMG)
    x = jax.random.normal(kx, (B, C, IMG, IMG), jnp.float32)

    fwd = jax.jit(discriminator_forward)
    out = jax.block_until_ready(fwd(params, x))
    assert out.shape == (B, 1), out.shape

    ref = reference_forward(params, x)
    if not jnp.allclose(out, ref, atol=2e-4, rtol=2e-4):
        raise AssertionError(f"mismatch: pallas={out} ref={ref}")

    print("KERNEL_OK")
</pallas_src>

<mosaic_0001>
module attributes {stable_mosaic.version = 11 : i64} {
  func.func @_disc_fused_kernel(%arg0: i32, %arg1: memref<8x784xf32, #tpu.memory_space<vmem>>, %arg2: memref<784x784xf32, #tpu.memory_space<vmem>>, %arg3: memref<1x784xf32, #tpu.memory_space<vmem>>, %arg4: memref<1x784xf32, #tpu.memory_space<vmem>>, %arg5: memref<1x784xf32, #tpu.memory_space<vmem>>, %arg6: memref<784x392xf32, #tpu.memory_space<vmem>>, %arg7: memref<1x392xf32, #tpu.memory_space<vmem>>, %arg8: memref<1x392xf32, #tpu.memory_space<vmem>>, %arg9: memref<1x392xf32, #tpu.memory_space<vmem>>, %arg10: memref<392x16xf32, #tpu.memory_space<vmem>>, %arg11: memref<1x16xf32, #tpu.memory_space<vmem>>, %arg12: memref<1x16xf32, #tpu.memory_space<vmem>>, %arg13: memref<1x16xf32, #tpu.memory_space<vmem>>, %arg14: memref<16x1xf32, #tpu.memory_space<vmem>>, %arg15: memref<1x1xf32, #tpu.memory_space<vmem>>, %arg16: memref<8x1xf32, #tpu.memory_space<vmem>>) attributes {dimension_semantics = [#tpu.dimension_semantics<parallel>], iteration_bounds = array<i64: 2>, scalar_prefetch = 0 : i64, scratch_operands = 0 : i64, tpu.core_type = #tpu.core_type<tc>, window_params = [{transform_indices = @transform_0, window_bounds = array<i64: 8, 784>}, {pipeline_mode = #tpu.pipeline_mode<synchronous>, transform_indices = @transform_1, window_bounds = array<i64: 784, 784>}, {pipeline_mode = #tpu.pipeline_mode<synchronous>, transform_indices = @transform_2, window_bounds = array<i64: 1, 784>}, {pipeline_mode = #tpu.pipeline_mode<synchronous>, transform_indices = @transform_3, window_bounds = array<i64: 1, 784>}, {pipeline_mode = #tpu.pipeline_mode<synchronous>, transform_indices = @transform_4, window_bounds = array<i64: 1, 784>}, {pipeline_mode = #tpu.pipeline_mode<synchronous>, transform_indices = @transform_5, window_bounds = array<i64: 784, 392>}, {pipeline_mode = #tpu.pipeline_mode<synchronous>, transform_indices = @transform_6, window_bounds = array<i64: 1, 392>}, {pipeline_mode = #tpu.pipeline_mode<synchronous>, transform_indices = @transform_7, window_bounds = array<i64: 1, 392>}, {pipeline_mode = #tpu.pipeline_mode<synchronous>, transform_indices = @transform_8, window_bounds = array<i64: 1, 392>}, {pipeline_mode = #tpu.pipeline_mode<synchronous>, transform_indices = @transform_9, window_bounds = array<i64: 392, 16>}, {pipeline_mode = #tpu.pipeline_mode<synchronous>, transform_indices = @transform_10, window_bounds = array<i64: 1, 16>}, {pipeline_mode = #tpu.pipeline_mode<synchronous>, transform_indices = @transform_11, window_bounds = array<i64: 1, 16>}, {pipeline_mode = #tpu.pipeline_mode<synchronous>, transform_indices = @transform_12, window_bounds = array<i64: 1, 16>}, {pipeline_mode = #tpu.pipeline_mode<synchronous>, transform_indices = @transform_13, window_bounds = array<i64: 16, 1>}, {pipeline_mode = #tpu.pipeline_mode<synchronous>, transform_indices = @transform_14, window_bounds = array<i64: 1, 1>}, {transform_indices = @transform_15, window_bounds = array<i64: 8, 1>}]} {
    %c0 = arith.constant 0 : index
    %c0_0 = arith.constant 0 : index
    %0 = vector.load %arg1[%c0, %c0_0] : memref<8x784xf32, #tpu.memory_space<vmem>>, vector<8x784xf32>
    %c0_1 = arith.constant 0 : index
    %c0_2 = arith.constant 0 : index
    %1 = vector.load %arg2[%c0_1, %c0_2] : memref<784x784xf32, #tpu.memory_space<vmem>>, vector<784x784xf32>
    %cst = arith.constant dense<0.000000e+00> : vector<8x784xf32>
    %2 = tpu.matmul %0, %1, %cst {dimension_numbers = #tpu.dot_dimension_numbers<[1], [0], [0], [1], [0, 0, 1, 1], [], []>} : vector<8x784xf32>, vector<784x784xf32>, vector<8x784xf32> -> vector<8x784xf32>
    %c0_3 = arith.constant 0 : index
    %c0_4 = arith.constant 0 : index
    %3 = vector.load %arg3[%c0_3, %c0_4] : memref<1x784xf32, #tpu.memory_space<vmem>>, vector<1x784xf32>
    %4 = vector.broadcast %3 : vector<1x784xf32> to vector<8x784xf32>
    %5 = arith.addf %2, %4 : vector<8x784xf32>
    %cst_5 = arith.constant dense<0.000000e+00> : vector<8xf32>
    %6 = vector.multi_reduction <add>, %5, %cst_5 [1] : vector<8x784xf32> to vector<8xf32>
    %7 = vector.shape_cast %6 : vector<8xf32> to vector<8x1xf32>
    %cst_6 = arith.constant 7.840000e+02 : f32
    %8 = vector.broadcast %cst_6 : f32 to vector<8x1xf32>
    %9 = arith.divf %7, %8 : vector<8x1xf32>
    %10 = vector.broadcast %9 : vector<8x1xf32> to vector<8x784xf32>
    %11 = arith.subf %5, %10 : vector<8x784xf32>
    %12 = arith.mulf %11, %11 : vector<8x784xf32>
    %cst_7 = arith.constant dense<0.000000e+00> : vector<8xf32>
    %13 = vector.multi_reduction <add>, %12, %cst_7 [1] : vector<8x784xf32> to vector<8xf32>
    %14 = vector.shape_cast %13 : vector<8xf32> to vector<8x1xf32>
    %cst_8 = arith.constant 7.840000e+02 : f32
    %15 = vector.broadcast %cst_8 : f32 to vector<8x1xf32>
    %16 = arith.divf %14, %15 : vector<8x1xf32>
    %17 = vector.broadcast %9 : vector<8x1xf32> to vector<8x784xf32>
    %18 = arith.subf %5, %17 : vector<8x784xf32>
    %cst_9 = arith.constant 9.99999974E-6 : f32
    %19 = vector.broadcast %cst_9 : f32 to vector<8x1xf32>
    %20 = arith.addf %16, %19 : vector<8x1xf32>
    %21 = math.rsqrt %20 : vector<8x1xf32>
    %22 = vector.broadcast %21 : vector<8x1xf32> to vector<8x784xf32>
    %23 = arith.mulf %18, %22 : vector<8x784xf32>
    %c0_10 = arith.constant 0 : index
    %c0_11 = arith.constant 0 : index
    %24 = vector.load %arg4[%c0_10, %c0_11] : memref<1x784xf32, #tpu.memory_space<vmem>>, vector<1x784xf32>
    %25 = vector.broadcast %24 : vector<1x784xf32> to vector<8x784xf32>
    %26 = arith.mulf %23, %25 : vector<8x784xf32>
    %c0_12 = arith.constant 0 : index
    %c0_13 = arith.constant 0 : index
    %27 = vector.load %arg5[%c0_12, %c0_13] : memref<1x784xf32, #tpu.memory_space<vmem>>, vector<1x784xf32>
    %28 = vector.broadcast %27 : vector<1x784xf32> to vector<8x784xf32>
    %29 = arith.addf %26, %28 : vector<8x784xf32>
    %cst_14 = arith.constant 0.000000e+00 : f32
    %30 = vector.broadcast %cst_14 : f32 to vector<8x784xf32>
    %31 = arith.cmpf oge, %29, %30 : vector<8x784xf32>
    %cst_15 = arith.constant 2.000000e-01 : f32
    %32 = vector.broadcast %cst_15 : f32 to vector<8x784xf32>
    %33 = arith.mulf %32, %29 : vector<8x784xf32>
    %34 = arith.select %31, %29, %33 : vector<8x784xi1>, vector<8x784xf32>
    %c0_16 = arith.constant 0 : index
    %c0_17 = arith.constant 0 : index
    %35 = vector.load %arg6[%c0_16, %c0_17] : memref<784x392xf32, #tpu.memory_space<vmem>>, vector<784x392xf32>
    %cst_18 = arith.constant dense<0.000000e+00> : vector<8x392xf32>
    %36 = tpu.matmul %34, %35, %cst_18 {dimension_numbers = #tpu.dot_dimension_numbers<[1], [0], [0], [1], [0, 0, 1, 1], [], []>} : vector<8x784xf32>, vector<784x392xf32>, vector<8x392xf32> -> vector<8x392xf32>
    %c0_19 = arith.constant 0 : index
    %c0_20 = arith.constant 0 : index
    %37 = vector.load %arg7[%c0_19, %c0_20] : memref<1x392xf32, #tpu.memory_space<vmem>>, vector<1x392xf32>
    %38 = vector.broadcast %37 : vector<1x392xf32> to vector<8x392xf32>
    %39 = arith.addf %36, %38 : vector<8x392xf32>
    %cst_21 = arith.constant dense<0.000000e+00> : vector<8xf32>
    %40 = vector.multi_reduction <add>, %39, %cst_21 [1] : vector<8x392xf32> to vector<8xf32>
    %41 = vector.shape_cast %40 : vector<8xf32> to vector<8x1xf32>
    %cst_22 = arith.constant 3.920000e+02 : f32
    %42 = vector.broadcast %cst_22 : f32 to vector<8x1xf32>
    %43 = arith.divf %41, %42 : vector<8x1xf32>
    %44 = vector.broadcast %43 : vector<8x1xf32> to vector<8x392xf32>
    %45 = arith.subf %39, %44 : vector<8x392xf32>
    %46 = arith.mulf %45, %45 : vector<8x392xf32>
    %cst_23 = arith.constant dense<0.000000e+00> : vector<8xf32>
    %47 = vector.multi_reduction <add>, %46, %cst_23 [1] : vector<8x392xf32> to vector<8xf32>
    %48 = vector.shape_cast %47 : vector<8xf32> to vector<8x1xf32>
    %cst_24 = arith.constant 3.920000e+02 : f32
    %49 = vector.broadcast %cst_24 : f32 to vector<8x1xf32>
    %50 = arith.divf %48, %49 : vector<8x1xf32>
    %51 = vector.broadcast %43 : vector<8x1xf32> to vector<8x392xf32>
    %52 = arith.subf %39, %51 : vector<8x392xf32>
    %cst_25 = arith.constant 9.99999974E-6 : f32
    %53 = vector.broadcast %cst_25 : f32 to vector<8x1xf32>
    %54 = arith.addf %50, %53 : vector<8x1xf32>
    %55 = math.rsqrt %54 : vector<8x1xf32>
    %56 = vector.broadcast %55 : vector<8x1xf32> to vector<8x392xf32>
    %57 = arith.mulf %52, %56 : vector<8x392xf32>
    %c0_26 = arith.constant 0 : index
    %c0_27 = arith.constant 0 : index
    %58 = vector.load %arg8[%c0_26, %c0_27] : memref<1x392xf32, #tpu.memory_space<vmem>>, vector<1x392xf32>
    %59 = vector.broadcast %58 : vector<1x392xf32> to vector<8x392xf32>
    %60 = arith.mulf %57, %59 : vector<8x392xf32>
    %c0_28 = arith.constant 0 : index
    %c0_29 = arith.constant 0 : index
    %61 = vector.load %arg9[%c0_28, %c0_29] : memref<1x392xf32, #tpu.memory_space<vmem>>, vector<1x392xf32>
    %62 = vector.broadcast %61 : vector<1x392xf32> to vector<8x392xf32>
    %63 = arith.addf %60, %62 : vector<8x392xf32>
    %cst_30 = arith.constant 0.000000e+00 : f32
    %64 = vector.broadcast %cst_30 : f32 to vector<8x392xf32>
    %65 = arith.cmpf oge, %63, %64 : vector<8x392xf32>
    %cst_31 = arith.constant 2.000000e-01 : f32
    %66 = vector.broadcast %cst_31 : f32 to vector<8x392xf32>
    %67 = arith.mulf %66, %63 : vector<8x392xf32>
    %68 = arith.select %65, %63, %67 : vector<8x392xi1>, vector<8x392xf32>
    %c0_32 = arith.constant 0 : index
    %c0_33 = arith.constant 0 : index
    %69 = vector.load %arg10[%c0_32, %c0_33] : memref<392x16xf32, #tpu.memory_space<vmem>>, vector<392x16xf32>
    %cst_34 = arith.constant dense<0.000000e+00> : vector<8x16xf32>
    %70 = tpu.matmul %68, %69, %cst_34 {dimension_numbers = #tpu.dot_dimension_numbers<[1], [0], [0], [1], [0, 0, 1, 1], [], []>} : vector<8x392xf32>, vector<392x16xf32>, vector<8x16xf32> -> vector<8x16xf32>
    %c0_35 = arith.constant 0 : index
    %c0_36 = arith.constant 0 : index
    %71 = vector.load %arg11[%c0_35, %c0_36] : memref<1x16xf32, #tpu.memory_space<vmem>>, vector<1x16xf32>
    %72 = vector.broadcast %71 : vector<1x16xf32> to vector<8x16xf32>
    %73 = arith.addf %70, %72 : vector<8x16xf32>
    %cst_37 = arith.constant dense<0.000000e+00> : vector<8xf32>
    %74 = vector.multi_reduction <add>, %73, %cst_37 [1] : vector<8x16xf32> to vector<8xf32>
    %75 = vector.shape_cast %74 : vector<8xf32> to vector<8x1xf32>
    %cst_38 = arith.constant 1.600000e+01 : f32
    %76 = vector.broadcast %cst_38 : f32 to vector<8x1xf32>
    %77 = arith.divf %75, %76 : vector<8x1xf32>
    %78 = vector.broadcast %77 : vector<8x1xf32> to vector<8x16xf32>
    %79 = arith.subf %73, %78 : vector<8x16xf32>
    %80 = arith.mulf %79, %79 : vector<8x16xf32>
    %cst_39 = arith.constant dense<0.000000e+00> : vector<8xf32>
    %81 = vector.multi_reduction <add>, %80, %cst_39 [1] : vector<8x16xf32> to vector<8xf32>
    %82 = vector.shape_cast %81 : vector<8xf32> to vector<8x1xf32>
    %cst_40 = arith.constant 1.600000e+01 : f32
    %83 = vector.broadcast %cst_40 : f32 to vector<8x1xf32>
    %84 = arith.divf %82, %83 : vector<8x1xf32>
    %85 = vector.broadcast %77 : vector<8x1xf32> to vector<8x16xf32>
    %86 = arith.subf %73, %85 : vector<8x16xf32>
    %cst_41 = arith.constant 9.99999974E-6 : f32
    %87 = vector.broadcast %cst_41 : f32 to vector<8x1xf32>
    %88 = arith.addf %84, %87 : vector<8x1xf32>
    %89 = math.rsqrt %88 : vector<8x1xf32>
    %90 = vector.broadcast %89 : vector<8x1xf32> to vector<8x16xf32>
    %91 = arith.mulf %86, %90 : vector<8x16xf32>
    %c0_42 = arith.constant 0 : index
    %c0_43 = arith.constant 0 : index
    %92 = vector.load %arg12[%c0_42, %c0_43] : memref<1x16xf32, #tpu.memory_space<vmem>>, vector<1x16xf32>
    %93 = vector.broadcast %92 : vector<1x16xf32> to vector<8x16xf32>
    %94 = arith.mulf %91, %93 : vector<8x16xf32>
    %c0_44 = arith.constant 0 : index
    %c0_45 = arith.constant 0 : index
    %95 = vector.load %arg13[%c0_44, %c0_45] : memref<1x16xf32, #tpu.memory_space<vmem>>, vector<1x16xf32>
    %96 = vector.broadcast %95 : vector<1x16xf32> to vector<8x16xf32>
    %97 = arith.addf %94, %96 : vector<8x16xf32>
    %cst_46 = arith.constant 0.000000e+00 : f32
    %98 = vector.broadcast %cst_46 : f32 to vector<8x16xf32>
    %99 = arith.cmpf oge, %97, %98 : vector<8x16xf32>
    %cst_47 = arith.constant 2.000000e-01 : f32
    %100 = vector.broadcast %cst_47 : f32 to vector<8x16xf32>
    %101 = arith.mulf %100, %97 : vector<8x16xf32>
    %102 = arith.select %99, %97, %101 : vector<8x16xi1>, vector<8x16xf32>
    %c0_48 = arith.constant 0 : index
    %c0_49 = arith.constant 0 : index
    %103 = vector.load %arg14[%c0_48, %c0_49] : memref<16x1xf32, #tpu.memory_space<vmem>>, vector<16x1xf32>
    %cst_50 = arith.constant dense<0.000000e+00> : vector<8x1xf32>
    %104 = tpu.matmul %102, %103, %cst_50 {dimension_numbers = #tpu.dot_dimension_numbers<[1], [0], [0], [1], [0, 0, 1, 1], [], []>} : vector<8x16xf32>, vector<16x1xf32>, vector<8x1xf32> -> vector<8x1xf32>
    %c0_51 = arith.constant 0 : index
    %c0_52 = arith.constant 0 : index
    %105 = vector.load %arg15[%c0_51, %c0_52] : memref<1x1xf32, #tpu.memory_space<vmem>>, vector<1x1xf32>
    %106 = vector.broadcast %105 : vector<1x1xf32> to vector<8x1xf32>
    %107 = arith.addf %104, %106 : vector<8x1xf32>
    %c0_53 = arith.constant 0 : index
    %c0_54 = arith.constant 0 : index
    %108 = vector.load %arg16[%c0_53, %c0_54] : memref<8x1xf32, #tpu.memory_space<vmem>>, vector<8x1xf32>
    tpu.vector_store %arg16[%c0_53, %c0_54], %107 {strides = array<i32>} : memref<8x1xf32, #tpu.memory_space<vmem>>, vector<8x1xf32>,
    return
  }
  func.func @transform_0(%arg0: i32) -> (i32, i32) {
    %c0_i32 = arith.constant 0 : i32
    %c0_i32_0 = arith.constant 0 : i32
    return %arg0, %c0_i32 : i32, i32
  }
  func.func @transform_1(%arg0: i32) -> (i32, i32) {
    %c0_i32 = arith.constant 0 : i32
    %c0_i32_0 = arith.constant 0 : i32
    %c0_i32_1 = arith.constant 0 : i32
    return %c0_i32, %c0_i32_0 : i32, i32
  }
  func.func @transform_2(%arg0: i32) -> (i32, i32) {
    %c0_i32 = arith.constant 0 : i32
    %c0_i32_0 = arith.constant 0 : i32
    %c0_i32_1 = arith.constant 0 : i32
    return %c0_i32, %c0_i32_0 : i32, i32
  }
  func.func @transform_3(%arg0: i32) -> (i32, i32) {
    %c0_i32 = arith.constant 0 : i32
    %c0_i32_0 = arith.constant 0 : i32
    %c0_i32_1 = arith.constant 0 : i32
    return %c0_i32, %c0_i32_0 : i32, i32
  }
  func.func @transform_4(%arg0: i32) -> (i32, i32) {
    %c0_i32 = arith.constant 0 : i32
    %c0_i32_0 = arith.constant 0 : i32
    %c0_i32_1 = arith.constant 0 : i32
    return %c0_i32, %c0_i32_0 : i32, i32
  }
  func.func @transform_5(%arg0: i32) -> (i32, i32) {
    %c0_i32 = arith.constant 0 : i32
    %c0_i32_0 = arith.constant 0 : i32
    %c0_i32_1 = arith.constant 0 : i32
    return %c0_i32, %c0_i32_0 : i32, i32
  }
  func.func @transform_6(%arg0: i32) -> (i32, i32) {
    %c0_i32 = arith.constant 0 : i32
    %c0_i32_0 = arith.constant 0 : i32
    %c0_i32_1 = arith.constant 0 : i32
    return %c0_i32, %c0_i32_0 : i32, i32
  }
  func.func @transform_7(%arg0: i32) -> (i32, i32) {
    %c0_i32 = arith.constant 0 : i32
    %c0_i32_0 = arith.constant 0 : i32
    %c0_i32_1 = arith.constant 0 : i32
    return %c0_i32, %c0_i32_0 : i32, i32
  }
  func.func @transform_8(%arg0: i32) -> (i32, i32) {
    %c0_i32 = arith.constant 0 : i32
    %c0_i32_0 = arith.constant 0 : i32
    %c0_i32_1 = arith.constant 0 : i32
    return %c0_i32, %c0_i32_0 : i32, i32
  }
  func.func @transform_9(%arg0: i32) -> (i32, i32) {
    %c0_i32 = arith.constant 0 : i32
    %c0_i32_0 = arith.constant 0 : i32
    %c0_i32_1 = arith.constant 0 : i32
    return %c0_i32, %c0_i32_0 : i32, i32
  }
  func.func @transform_10(%arg0: i32) -> (i32, i32) {
    %c0_i32 = arith.constant 0 : i32
    %c0_i32_0 = arith.constant 0 : i32
    %c0_i32_1 = arith.constant 0 : i32
    return %c0_i32, %c0_i32_0 : i32, i32
  }
  func.func @transform_11(%arg0: i32) -> (i32, i32) {
    %c0_i32 = arith.constant 0 : i32
    %c0_i32_0 = arith.constant 0 : i32
    %c0_i32_1 = arith.constant 0 : i32
    return %c0_i32, %c0_i32_0 : i32, i32
  }
  func.func @transform_12(%arg0: i32) -> (i32, i32) {
    %c0_i32 = arith.constant 0 : i32
    %c0_i32_0 = arith.constant 0 : i32
    %c0_i32_1 = arith.constant 0 : i32
    return %c0_i32, %c0_i32_0 : i32, i32
  }
  func.func @transform_13(%arg0: i32) -> (i32, i32) {
    %c0_i32 = arith.constant 0 : i32
    %c0_i32_0 = arith.constant 0 : i32
    %c0_i32_1 = arith.constant 0 : i32
    return %c0_i32, %c0_i32_0 : i32, i32
  }
  func.func @transform_14(%arg0: i32) -> (i32, i32) {
    %c0_i32 = arith.constant 0 : i32
    %c0_i32_0 = arith.constant 0 : i32
    %c0_i32_1 = arith.constant 0 : i32
    return %c0_i32, %c0_i32_0 : i32, i32
  }
  func.func @transform_15(%arg0: i32) -> (i32, i32) {
    %c0_i32 = arith.constant 0 : i32
    %c0_i32_0 = arith.constant 0 : i32
    return %arg0, %c0_i32 : i32, i32
  }
}

</mosaic_0001>

<llo_original>
// kernel: discriminator_forward.1
$region0: #{discriminator_forward.1}
  #allocation0 [shape = 'u32[]', space=smem, size = 0x4, offset = 0x4, fixed_abs, tag = 'smem constant byte address 0x4 - core index']
  #allocation1 [shape = 'u32[144,128]{1,0:T(1,128)}', space=vmem, size = 0x12000, scoped, tag = 'internal scratch']
  #allocation2 [shape = 'f32[1,1]{1,0:T(1,128)S(1)}', space=vmem, size = 0x200, scoped, tag = 'scoped memory for discriminator_forward.1']
  %s0 = inlined_call_operand.vmem [shape: f32[16,784], index: 0, kind: input, shape index: {}]
  %s1 = inlined_call_operand.vmem [shape: f32[784,784], index: 1, kind: input, shape index: {}]
  %s2 = inlined_call_operand.vmem [shape: f32[1,784], index: 2, kind: input, shape index: {}]
  %s3 = inlined_call_operand.vmem [shape: f32[1,784], index: 3, kind: input, shape index: {}]
  %s4 = inlined_call_operand.vmem [shape: f32[1,784], index: 4, kind: input, shape index: {}]
  %s5 = inlined_call_operand.vmem [shape: f32[784,392], index: 5, kind: input, shape index: {}]
  %s6 = inlined_call_operand.vmem [shape: f32[1,392], index: 6, kind: input, shape index: {}]
  %s7 = inlined_call_operand.vmem [shape: f32[1,392], index: 7, kind: input, shape index: {}]
  %s8 = inlined_call_operand.vmem [shape: f32[1,392], index: 8, kind: input, shape index: {}]
  %s9 = inlined_call_operand.vmem [shape: f32[392,16], index: 9, kind: input, shape index: {}]
  %s10 = inlined_call_operand.vmem [shape: f32[1,16], index: 10, kind: input, shape index: {}]
  %s11 = inlined_call_operand.vmem [shape: f32[1,16], index: 11, kind: input, shape index: {}]
  %s12 = inlined_call_operand.vmem [shape: f32[1,16], index: 12, kind: input, shape index: {}]
  %s13 = inlined_call_operand.vmem [shape: f32[16,1], index: 13, kind: input, shape index: {}]
  %s14 = inlined_call_operand.<no memory space> [shape: f32[1,1], index: 14, kind: input, shape index: {}]
  %s15 = inlined_call_operand.vmem [shape: f32[16,1], index: 15, kind: output, shape index: {}]
  %s16 = sld [smem:[#allocation0]]
  $region93: #{discriminator_forward.1} parent=0
    _
  %s18 = ssub.s32 1, %s16
  %s19 = scalar_select 0, %s18, %s16
  %v20 = vstv %s14
  %21 = vst [vmem:[#allocation2] sm:$0x1] %v20
  loop: start=0, step=1, limit=4
  $region2: #{discriminator_forward.1} parent=0 // loop_pre_header
    _
  $region3: #{discriminator_forward.1} parent=0 // loop_header
    %s23 = sphi 0, %s27
    %p24 = scmp.ge.s32.totalorder %s23, 4
    %s33 = sphi 0, %s35
    %s36 = sphi 0, %s33
    %s37 = sphi 0, %s36
    %s53 = sphi 0, %s37
    %s57 = sphi 0, %s57
    %s59 = sphi 0, %s57
    %s60 = sphi 0, %s59
    %s74 = sphi 0, %s60
    %s78 = sphi 0, %s78
    %s80 = sphi 0, %s78
    %s81 = sphi 0, %s80
    %s95 = sphi 0, %s81
    %s99 = sphi 0, %s99
    %s101 = sphi 0, %s99
    %s102 = sphi 0, %s101
    %s116 = sphi 0, %s102
    %s120 = sphi 0, %s120
    %s122 = sphi 0, %s120
    %s123 = sphi 0, %s122
    %s137 = sphi 0, %s123
    %s141 = sphi 0, %s141
    %s143 = sphi 0, %s141
    %s144 = sphi 0, %s143
    %s158 = sphi 0, %s144
    %s162 = sphi 0, %s162
    %s164 = sphi 0, %s162
    %s165 = sphi 0, %s164
    %s179 = sphi 0, %s165
    %s183 = sphi 0, %s183
    %s185 = sphi 0, %s183
    %s186 = sphi 0, %s185
    %s200 = sphi 0, %s186
    %s204 = sphi 0, %s204
    %s206 = sphi 0, %s204
    %s207 = sphi 0, %s206
    %s221 = sphi 0, %s207
    %s225 = sphi 0, %s225
    %s227 = sphi 0, %s225
    %s228 = sphi 0, %s227
    %s242 = sphi 0, %s228
    %s246 = sphi 0, %s246
    %s248 = sphi 0, %s246
    %s249 = sphi 0, %s248
    %s263 = sphi 0, %s249
    %s267 = sphi 0, %s267
    %s269 = sphi 0, %s267
    %s270 = sphi 0, %s269
    %s284 = sphi 0, %s270
    %s288 = sphi 0, %s288
    %s290 = sphi 0, %s288
    %s291 = sphi 0, %s290
    %s305 = sphi 0, %s291
    %s309 = sphi 0, %s309
    %s311 = sphi 0, %s309
    %s312 = sphi 0, %s311
    %s326 = sphi 0, %s312
    %s330 = sphi 0, %s330
    %s332 = sphi 0, %s330
    %s333 = sphi 0, %s332
    %s347 = sphi 0, %s333
    %s353 = sphi 0, %s355
    %s356 = sphi 0, %s353
    %s357 = sphi 0, %s356
    %s373 = sphi 0, %s357
  $region4: #{discriminator_forward.1} parent=0 // loop_header_branch
    %26 = sbr.rel (%p24) target = $region8
  $region5: #{discriminator_forward.1} parent=0 // loop_body
    %s28 = ssub.s32 %s23, 1
    %s29 = ssub.s32 %s23, 2
    %s30 = sadd.s32 %s23, 1
    %s31 = ssub.s32 %s23, %s30
    %p32 = scmp.eq.s32.totalorder %s31, 0
    %s34 = sadd.s32 %s33, 1
    %s35 = scalar_select %p32, %s33, %s34
    %p38 = pneg %p32
    %p39 = scmp.eq.s32.totalorder %s23, 1
    %p40 = por %p38, %p39
    %p41 = scmp.ne.s32.totalorder %s33, %s36
    %p42 = scmp.eq.s32.totalorder %s23, 0
    %p43 = por %p41, %p42
    %p44 = scmp.ne.s32.totalorder %s33, %s36
    %p45 = scmp.eq.s32.totalorder %s28, 1
    %p46 = por %p44, %p45
    %p47 = scmp.ne.s32.totalorder %s36, %s37
    %p48 = scmp.eq.s32.totalorder %s28, 0
    %p49 = por %p47, %p48
    %p50 = scmp.ne.s32.totalorder %s36, %s37
    %p51 = scmp.eq.s32.totalorder %s29, 1
    %p52 = por %p50, %p51
    %p54 = scmp.ne.s32.totalorder %s37, %s53
    %p55 = scmp.eq.s32.totalorder %s29, 0
    %p56 = por %p54, %p55
    %s58 = sadd.s32 %s57, 1
    %p61 = scmp.eq.s32.totalorder %s23, 1
    %p62 = scmp.ne.s32.totalorder %s57, %s59
    %p63 = scmp.eq.s32.totalorder %s23, 0
    %p64 = por %p62, %p63
    %p65 = scmp.ne.s32.totalorder %s57, %s59
    %p66 = scmp.eq.s32.totalorder %s28, 1
    %p67 = por %p65, %p66
    %p68 = scmp.ne.s32.totalorder %s59, %s60
    %p69 = scmp.eq.s32.totalorder %s28, 0
    %p70 = por %p68, %p69
    %p71 = scmp.ne.s32.totalorder %s59, %s60
    %p72 = scmp.eq.s32.totalorder %s29, 1
    %p73 = por %p71, %p72
    %p75 = scmp.ne.s32.totalorder %s60, %s74
    %p76 = scmp.eq.s32.totalorder %s29, 0
    %p77 = por %p75, %p76
    %s79 = sadd.s32 %s78, 1
    %p82 = scmp.eq.s32.totalorder %s23, 1
    %p83 = scmp.ne.s32.totalorder %s78, %s80
    %p84 = scmp.eq.s32.totalorder %s23, 0
    %p85 = por %p83, %p84
    %p86 = scmp.ne.s32.totalorder %s78, %s80
    %p87 = scmp.eq.s32.totalorder %s28, 1
    %p88 = por %p86, %p87
    %p89 = scmp.ne.s32.totalorder %s80, %s81
    %p90 = scmp.eq.s32.totalorder %s28, 0
    %p91 = por %p89, %p90
    %p92 = scmp.ne.s32.totalorder %s80, %s81
    %p93 = scmp.eq.s32.totalorder %s29, 1
    %p94 = por %p92, %p93
    %p96 = scmp.ne.s32.totalorder %s81, %s95
    %p97 = scmp.eq.s32.totalorder %s29, 0
    %p98 = por %p96, %p97
    %s100 = sadd.s32 %s99, 1
    %p103 = scmp.eq.s32.totalorder %s23, 1
    %p104 = scmp.ne.s32.totalorder %s99, %s101
    %p105 = scmp.eq.s32.totalorder %s23, 0
    %p106 = por %p104, %p105
    %p107 = scmp.ne.s32.totalorder %s99, %s101
    %p108 = scmp.eq.s32.totalorder %s28, 1
    %p109 = por %p107, %p108
    %p110 = scmp.ne.s32.totalorder %s101, %s102
    %p111 = scmp.eq.s32.totalorder %s28, 0
    %p112 = por %p110, %p111
    %p113 = scmp.ne.s32.totalorder %s101, %s102
    %p114 = scmp.eq.s32.totalorder %s29, 1
    %p115 = por %p113, %p114
    %p117 = scmp.ne.s32.totalorder %s102, %s116
    %p118 = scmp.eq.s32.totalorder %s29, 0
    %p119 = por %p117, %p118
    %s121 = sadd.s32 %s120, 1
    %p124 = scmp.eq.s32.totalorder %s23, 1
    %p125 = scmp.ne.s32.totalorder %s120, %s122
    %p126 = scmp.eq.s32.totalorder %s23, 0
    %p127 = por %p125, %p126
    %p128 = scmp.ne.s32.totalorder %s120, %s122
    %p129 = scmp.eq.s32.totalorder %s28, 1
    %p130 = por %p128, %p129
    %p131 = scmp.ne.s32.totalorder %s122, %s123
    %p132 = scmp.eq.s32.totalorder %s28, 0
    %p133 = por %p131, %p132
    %p134 = scmp.ne.s32.totalorder %s122, %s123
    %p135 = scmp.eq.s32.totalorder %s29, 1
    %p136 = por %p134, %p135
    %p138 = scmp.ne.s32.totalorder %s123, %s137
    %p139 = scmp.eq.s32.totalorder %s29, 0
    %p140 = por %p138, %p139
    %s142 = sadd.s32 %s141, 1
    %p145 = scmp.eq.s32.totalorder %s23, 1
    %p146 = scmp.ne.s32.totalorder %s141, %s143
    %p147 = scmp.eq.s32.totalorder %s23, 0
    %p148 = por %p146, %p147
    %p149 = scmp.ne.s32.totalorder %s141, %s143
    %p150 = scmp.eq.s32.totalorder %s28, 1
    %p151 = por %p149, %p150
    %p152 = scmp.ne.s32.totalorder %s143, %s144
    %p153 = scmp.eq.s32.totalorder %s28, 0
    %p154 = por %p152, %p153
    %p155 = scmp.ne.s32.totalorder %s143, %s144
    %p156 = scmp.eq.s32.totalorder %s29, 1
    %p157 = por %p155, %p156
    %p159 = scmp.ne.s32.totalorder %s144, %s158
    %p160 = scmp.eq.s32.totalorder %s29, 0
    %p161 = por %p159, %p160
    %s163 = sadd.s32 %s162, 1
    %p166 = scmp.eq.s32.totalorder %s23, 1
    %p167 = scmp.ne.s32.totalorder %s162, %s164
    %p168 = scmp.eq.s32.totalorder %s23, 0
    %p169 = por %p167, %p168
    %p170 = scmp.ne.s32.totalorder %s162, %s164
    %p171 = scmp.eq.s32.totalorder %s28, 1
    %p172 = por %p170, %p171
    %p173 = scmp.ne.s32.totalorder %s164, %s165
    %p174 = scmp.eq.s32.totalorder %s28, 0
    %p175 = por %p173, %p174
    %p176 = scmp.ne.s32.totalorder %s164, %s165
    %p177 = scmp.eq.s32.totalorder %s29, 1
    %p178 = por %p176, %p177
    %p180 = scmp.ne.s32.totalorder %s165, %s179
    %p181 = scmp.eq.s32.totalorder %s29, 0
    %p182 = por %p180, %p181
    %s184 = sadd.s32 %s183, 1
    %p187 = scmp.eq.s32.totalorder %s23, 1
    %p188 = scmp.ne.s32.totalorder %s183, %s185
    %p189 = scmp.eq.s32.totalorder %s23, 0
    %p190 = por %p188, %p189
    %p191 = scmp.ne.s32.totalorder %s183, %s185
    %p192 = scmp.eq.s32.totalorder %s28, 1
    %p193 = por %p191, %p192
    %p194 = scmp.ne.s32.totalorder %s185, %s186
    %p195 = scmp.eq.s32.totalorder %s28, 0
    %p196 = por %p194, %p195
    %p197 = scmp.ne.s32.totalorder %s185, %s186
    %p198 = scmp.eq.s32.totalorder %s29, 1
    %p199 = por %p197, %p198
    %p201 = scmp.ne.s32.totalorder %s186, %s200
    %p202 = scmp.eq.s32.totalorder %s29, 0
    %p203 = por %p201, %p202
    %s205 = sadd.s32 %s204, 1
    %p208 = scmp.eq.s32.totalorder %s23, 1
    %p209 = scmp.ne.s32.totalorder %s204, %s206
    %p210 = scmp.eq.s32.totalorder %s23, 0
    %p211 = por %p209, %p210
    %p212 = scmp.ne.s32.totalorder %s204, %s206
    %p213 = scmp.eq.s32.totalorder %s28, 1
    %p214 = por %p212, %p213
    %p215 = scmp.ne.s32.totalorder %s206, %s207
    %p216 = scmp.eq.s32.totalorder %s28, 0
    %p217 = por %p215, %p216
    %p218 = scmp.ne.s32.totalorder %s206, %s207
    %p219 = scmp.eq.s32.totalorder %s29, 1
    %p220 = por %p218, %p219
    %p222 = scmp.ne.s32.totalorder %s207, %s221
    %p223 = scmp.eq.s32.totalorder %s29, 0
    %p224 = por %p222, %p223
    %s226 = sadd.s32 %s225, 1
    %p229 = scmp.eq.s32.totalorder %s23, 1
    %p230 = scmp.ne.s32.totalorder %s225, %s227
    %p231 = scmp.eq.s32.totalorder %s23, 0
    %p232 = por %p230, %p231
    %p233 = scmp.ne.s32.totalorder %s225, %s227
    %p234 = scmp.eq.s32.totalorder %s28, 1
    %p235 = por %p233, %p234
    %p236 = scmp.ne.s32.totalorder %s227, %s228
    %p237 = scmp.eq.s32.totalorder %s28, 0
    %p238 = por %p236, %p237
    %p239 = scmp.ne.s32.totalorder %s227, %s228
    %p240 = scmp.eq.s32.totalorder %s29, 1
    %p241 = por %p239, %p240
    %p243 = scmp.ne.s32.totalorder %s228, %s242
    %p244 = scmp.eq.s32.totalorder %s29, 0
    %p245 = por %p243, %p244
    %s247 = sadd.s32 %s246, 1
    %p250 = scmp.eq.s32.totalorder %s23, 1
    %p251 = scmp.ne.s32.totalorder %s246, %s248
    %p252 = scmp.eq.s32.totalorder %s23, 0
    %p253 = por %p251, %p252
    %p254 = scmp.ne.s32.totalorder %s246, %s248
    %p255 = scmp.eq.s32.totalorder %s28, 1
    %p256 = por %p254, %p255
    %p257 = scmp.ne.s32.totalorder %s248, %s249
    %p258 = scmp.eq.s32.totalorder %s28, 0
    %p259 = por %p257, %p258
    %p260 = scmp.ne.s32.totalorder %s248, %s249
    %p261 = scmp.eq.s32.totalorder %s29, 1
    %p262 = por %p260, %p261
    %p264 = scmp.ne.s32.totalorder %s249, %s263
    %p265 = scmp.eq.s32.totalorder %s29, 0
    %p266 = por %p264, %p265
    %s268 = sadd.s32 %s267, 1
    %p271 = scmp.eq.s32.totalorder %s23, 1
    %p272 = scmp.ne.s32.totalorder %s267, %s269
    %p273 = scmp.eq.s32.totalorder %s23, 0
    %p274 = por %p272, %p273
    %p275 = scmp.ne.s32.totalorder %s267, %s269
    %p276 = scmp.eq.s32.totalorder %s28, 1
    %p277 = por %p275, %p276
    %p278 = scmp.ne.s32.totalorder %s269, %s270
    %p279 = scmp.eq.s32.totalorder %s28, 0
    %p280 = por %p278, %p279
    %p281 = scmp.ne.s32.totalorder %s269, %s270
    %p282 = scmp.eq.s32.totalorder %s29, 1
    %p283 = por %p281, %p282
    %p285 = scmp.ne.s32.totalorder %s270, %s284
    %p286 = scmp.eq.s32.totalorder %s29, 0
    %p287 = por %p285, %p286
    %s289 = sadd.s32 %s288, 1
    %p292 = scmp.eq.s32.totalorder %s23, 1
    %p293 = scmp.ne.s32.totalorder %s288, %s290
    %p294 = scmp.eq.s32.totalorder %s23, 0
    %p295 = por %p293, %p294
    %p296 = scmp.ne.s32.totalorder %s288, %s290
    %p297 = scmp.eq.s32.totalorder %s28, 1
    %p298 = por %p296, %p297
    %p299 = scmp.ne.s32.totalorder %s290, %s291
    %p300 = scmp.eq.s32.totalorder %s28, 0
    %p301 = por %p299, %p300
    %p302 = scmp.ne.s32.totalorder %s290, %s291
    %p303 = scmp.eq.s32.totalorder %s29, 1
    %p304 = por %p302, %p303
    %p306 = scmp.ne.s32.totalorder %s291, %s305
    %p307 = scmp.eq.s32.totalorder %s29, 0
    %p308 = por %p306, %p307
    %s310 = sadd.s32 %s309, 1
    %p313 = scmp.eq.s32.totalorder %s23, 1
    %p314 = scmp.ne.s32.totalorder %s309, %s311
    %p315 = scmp.eq.s32.totalorder %s23, 0
    %p316 = por %p314, %p315
    %p317 = scmp.ne.s32.totalorder %s309, %s311
    %p318 = scmp.eq.s32.totalorder %s28, 1
    %p319 = por %p317, %p318
    %p320 = scmp.ne.s32.totalorder %s311, %s312
    %p321 = scmp.eq.s32.totalorder %s28, 0
    %p322 = por %p320, %p321
    %p323 = scmp.ne.s32.totalorder %s311, %s312
    %p324 = scmp.eq.s32.totalorder %s29, 1
    %p325 = por %p323, %p324
    %p327 = scmp.ne.s32.totalorder %s312, %s326
    %p328 = scmp.eq.s32.totalorder %s29, 0
    %p329 = por %p327, %p328
    %s331 = sadd.s32 %s330, 1
    %p334 = scmp.eq.s32.totalorder %s23, 1
    %p335 = scmp.ne.s32.totalorder %s330, %s332
    %p336 = scmp.eq.s32.totalorder %s23, 0
    %p337 = por %p335, %p336
    %p338 = scmp.ne.s32.totalorder %s330, %s332
    %p339 = scmp.eq.s32.totalorder %s28, 1
    %p340 = por %p338, %p339
    %p341 = scmp.ne.s32.totalorder %s332, %s333
    %p342 = scmp.eq.s32.totalorder %s28, 0
    %p343 = por %p341, %p342
    %p344 = scmp.ne.s32.totalorder %s332, %s333
    %p345 = scmp.eq.s32.totalorder %s29, 1
    %p346 = por %p344, %p345
    %p348 = scmp.ne.s32.totalorder %s333, %s347
    %p349 = scmp.eq.s32.totalorder %s29, 0
    %p350 = por %p348, %p349
    %s351 = ssub.s32 %s23, %s30
    %p352 = scmp.eq.s32.totalorder %s351, 0
    %s354 = sadd.s32 %s353, 1
    %s355 = scalar_select %p352, %s353, %s354
    %p358 = pneg %p352
    %p359 = scmp.eq.s32.totalorder %s23, 1
    %p360 = por %p358, %p359
    %p361 = scmp.ne.s32.totalorder %s353, %s356
    %p362 = scmp.eq.s32.totalorder %s23, 0
    %p363 = por %p361, %p362
    %p364 = scmp.ne.s32.totalorder %s353, %s356
    %p365 = scmp.eq.s32.totalorder %s28, 1
    %p366 = por %p364, %p365
    %p367 = scmp.ne.s32.totalorder %s356, %s357
    %p368 = scmp.eq.s32.totalorder %s28, 0
    %p369 = por %p367, %p368
    %p370 = scmp.ne.s32.totalorder %s356, %s357
    %p371 = scmp.eq.s32.totalorder %s29, 1
    %p372 = por %p370, %p371
    %p374 = scmp.ne.s32.totalorder %s357, %s373
    %p375 = scmp.eq.s32.totalorder %s29, 0
    %p376 = por %p374, %p375
    %p377 = scmp.le.s32.totalorder 1, %s23
    %p378 = scmp.lt.s32.totalorder %s23, 3
    %p379 = pnand %p377, %p378
    %p380 = pneg %p379
    // Predicated region
    $region9: #{discriminator_forward.1} parent=5 // pred_check
      _
    $region10: #{discriminator_forward.1} parent=5 // pred_check_branch
      %382 = sbr.rel (%p379) target = $region12
    $region11: #{discriminator_forward.1} parent=5 // pred_region
      %s383 = ssub.s32 %s23, 1
      // Predicated region
      $region13: #{discriminator_forward.1} parent=11 // pred_check
        %p384 = pneg %p70
      $region14: #{discriminator_forward.1} parent=11 // pred_check_branch
        %386 = sbr.rel (%p384) target = $region16
      $region15: #{discriminator_forward.1} parent=11 // pred_region
        _
      $region16: #{discriminator_forward.1} parent=11 // pred_fallthru
        _
      // Predicated region
      $region17: #{discriminator_forward.1} parent=11 // pred_check
        %p387 = pneg %p91
      $region18: #{discriminator_forward.1} parent=11 // pred_check_branch
        %389 = sbr.rel (%p387) target = $region20
      $region19: #{discriminator_forward.1} parent=11 // pred_region
        _
      $region20: #{discriminator_forward.1} parent=11 // pred_fallthru
        _
      // Predicated region
      $region21: #{discriminator_forward.1} parent=11 // pred_check
        %p390 = pneg %p112
      $region22: #{discriminator_forward.1} parent=11 // pred_check_branch
        %392 = sbr.rel (%p390) target = $region24
      $region23: #{discriminator_forward.1} parent=11 // pred_region
        _
      $region24: #{discriminator_forward.1} parent=11 // pred_fallthru
        _
      // Predicated region
      $region25: #{discriminator_forward.1} parent=11 // pred_check
        %p393 = pneg %p133
      $region26: #{discriminator_forward.1} parent=11 // pred_check_branch
        %395 = sbr.rel (%p393) target = $region28
      $region27: #{discriminator_forward.1} parent=11 // pred_region
        _
      $region28: #{discriminator_forward.1} parent=11 // pred_fallthru
        _
      // Predicated region
      $region29: #{discriminator_forward.1} parent=11 // pred_check
        %p396 = pneg %p154
      $region30: #{discriminator_forward.1} parent=11 // pred_check_branch
        %398 = sbr.rel (%p396) target = $region32
      $region31: #{discriminator_forward.1} parent=11 // pred_region
        _
      $region32: #{discriminator_forward.1} parent=11 // pred_fallthru
        _
      // Predicated region
      $region33: #{discriminator_forward.1} parent=11 // pred_check
        %p399 = pneg %p175
      $region34: #{discriminator_forward.1} parent=11 // pred_check_branch
        %401 = sbr.rel (%p399) target = $region36
      $region35: #{discriminator_forward.1} parent=11 // pred_region
        _
      $region36: #{discriminator_forward.1} parent=11 // pred_fallthru
        _
      // Predicated region
      $region37: #{discriminator_forward.1} parent=11 // pred_check
        %p402 = pneg %p196
      $region38: #{discriminator_forward.1} parent=11 // pred_check_branch
        %404 = sbr.rel (%p402) target = $region40
      $region39: #{discriminator_forward.1} parent=11 // pred_region
        _
      $region40: #{discriminator_forward.1} parent=11 // pred_fallthru
        _
      // Predicated region
      $region41: #{discriminator_forward.1} parent=11 // pred_check
        %p405 = pneg %p217
      $region42: #{discriminator_forward.1} parent=11 // pred_check_branch
        %407 = sbr.rel (%p405) target = $region44
      $region43: #{discriminator_forward.1} parent=11 // pred_region
        _
      $region44: #{discriminator_forward.1} parent=11 // pred_fallthru
        _
      // Predicated region
      $region45: #{discriminator_forward.1} parent=11 // pred_check
        %p408 = pneg %p238
      $region46: #{discriminator_forward.1} parent=11 // pred_check_branch
        %410 = sbr.rel (%p408) target = $region48
      $region47: #{discriminator_forward.1} parent=11 // pred_region
        _
      $region48: #{discriminator_forward.1} parent=11 // pred_fallthru
        _
      // Predicated region
      $region49: #{discriminator_forward.1} parent=11 // pred_check
        %p411 = pneg %p259
      $region50: #{discriminator_forward.1} parent=11 // pred_check_branch
        %413 = sbr.rel (%p411) target = $region52
      $region51: #{discriminator_forward.1} parent=11 // pred_region
        _
      $region52: #{discriminator_forward.1} parent=11 // pred_fallthru
        _
      // Predicated region
      $region53: #{discriminator_forward.1} parent=11 // pred_check
        %p414 = pneg %p280
      $region54: #{discriminator_forward.1} parent=11 // pred_check_branch
        %416 = sbr.rel (%p414) target = $region56
      $region55: #{discriminator_forward.1} parent=11 // pred_region
        _
      $region56: #{discriminator_forward.1} parent=11 // pred_fallthru
        _
      // Predicated region
      $region57: #{discriminator_forward.1} parent=11 // pred_check
        %p417 = pneg %p301
      $region58: #{discriminator_forward.1} parent=11 // pred_check_branch
        %419 = sbr.rel (%p417) target = $region60
      $region59: #{discriminator_forward.1} parent=11 // pred_region
        _
      $region60: #{discriminator_forward.1} parent=11 // pred_fallthru
        _
      // Predicated region
      $region61: #{discriminator_forward.1} parent=11 // pred_check
        %p420 = pneg %p322
      $region62: #{discriminator_forward.1} parent=11 // pred_check_branch
        %422 = sbr.rel (%p420) target = $region64
      $region63: #{discriminator_forward.1} parent=11 // pred_region
        _
      $region64: #{discriminator_forward.1} parent=11 // pred_fallthru
        _
      // Predicated region
      $region65: #{discriminator_forward.1} parent=11 // pred_check
        %p423 = pneg %p343
      $region66: #{discriminator_forward.1} parent=11 // pred_check_branch
        %425 = sbr.rel (%p423) target = $region68
      $region67: #{discriminator_forward.1} parent=11 // pred_region
        _
      $region68: #{discriminator_forward.1} parent=11 // pred_fallthru
        _
    $region12: #{discriminator_forward.1} parent=5 // pred_fallthru
      _
    %p426 = scmp.lt.s32.totalorder %s23, 2
    // Predicated region
    $region69: #{discriminator_forward.1} parent=5 // pred_check
      %p427 = pneg %p426
    $region70: #{discriminator_forward.1} parent=5 // pred_check_branch
      %429 = sbr.rel (%p427) target = $region72
    $region71: #{discriminator_forward.1} parent=5 // pred_region
      // Predicated region
      $region73: #{discriminator_forward.1} parent=71 // pred_check
        %p430 = pneg %p43
      $region74: #{discriminator_forward.1} parent=71 // pred_check_branch
        %432 = sbr.rel (%p430) target = $region76
      $region75: #{discriminator_forward.1} parent=71 // pred_region
        %p433 = scmp.lt.s32.totalorder %s23, 1
        %s434 = scalar_select %p433, %s23, 1
        %s435 = smul.addr %s434, 7
        %s436 = smul.addr %s435, 8
        %s437 = scalar_lea.vmem %s0, %s436
      $region76: #{discriminator_forward.1} parent=71 // pred_fallthru
        _
    $region72: #{discriminator_forward.1} parent=5 // pred_fallthru
      _
    %p438 = scmp.le.s32.totalorder 1, %s23
    %p439 = scmp.lt.s32.totalorder %s23, 3
    %p440 = pnand %p438, %p439
    %p441 = pneg %p440
    // Predicated region
    $region77: #{discriminator_forward.1} parent=5 // pred_check
      _
    $region78: #{discriminator_forward.1} parent=5 // pred_check_branch
      %443 = sbr.rel (%p440) target = $region80
    $region79: #{discriminator_forward.1} parent=5 // pred_region
      %s444 = ssub.s32 %s23, 1
      %p445 = scmp.lt.s32.totalorder %s28, 1
      %s446 = scalar_select %p445, %s28, 1
      %s447 = smul.addr %s446, 7
      %s448 = smul.addr %s447, 8
      %s449 = scalar_lea.vmem %s0, %s448
      %p450 = pneg %p49
      %p451 = pneg %p46
      %p452 = pneg %p70
      %p453 = pneg %p67
      %p454 = pneg %p91
      %p455 = pneg %p88
      %p456 = pneg %p112
      %p457 = pneg %p109
      %p458 = pneg %p133
      %p459 = pneg %p130
      %p460 = pneg %p154
      %p461 = pneg %p151
      %p462 = pneg %p175
      %p463 = pneg %p172
      %p464 = pneg %p196
      %p465 = pneg %p193
      %p466 = pneg %p217
      %p467 = pneg %p214
      %p468 = pneg %p238
      %p469 = pneg %p235
      %p470 = pneg %p259
      %p471 = pneg %p256
      %p472 = pneg %p280
      %p473 = pneg %p277
      %p474 = pneg %p301
      %p475 = pneg %p298
      %p476 = pneg %p322
      %p477 = pneg %p319
      %p478 = pneg %p343
      %p479 = pneg %p340
      %p480 = pneg %p369
      %p481 = pneg %p366
      %p482 = scmp.lt.s32.totalorder %s28, 1
      %s483 = scalar_select %p482, %s28, 1
      %s484 = smul.addr %s483, 8
      %s485 = scalar_lea.vmem %s15, %s484
      %p486 = scmp.lt.s32.totalorder %s28, 1
      %s487 = scalar_select %p486, %s28, 1
      %s488 = smul.addr %s487, 7
      %s489 = smul.addr %s488, 8
      %s490 = scalar_lea.vmem %s0, %s489
      %p491 = scmp.lt.s32.totalorder %s28, 1
      %s492 = scalar_select %p491, %s28, 1
      %s493 = smul.addr %s492, 8
      %s494 = scalar_lea.vmem %s15, %s493
      %v495 = vld [vmem:[%s490] sm:$0xff]
      %v496 = vld [vmem:[%s490 + $0x8] sm:$0xff]
      %v497 = vld [vmem:[%s490 + $0x10] sm:$0xff]
      %v498 = vld [vmem:[%s490 + $0x18] sm:$0xff]
      %v499 = vld [vmem:[%s490 + $0x20] sm:$0xff]
      %v500 = vld [vmem:[%s490 + $0x28] sm:$0xff]
      %v501 = vld [vmem:[%s490 + $0x30] sm:$0xff]
      %v502 = vld [vmem:[%s1] sm:$0xff]
      %v503 = vld [vmem:[%s1 + $0x8] sm:$0xff]
      %v504 = vld [vmem:[%s1 + $0x10] sm:$0xff]
      %v505 = vld [vmem:[%s1 + $0x18] sm:$0xff]
      %v506 = vld [vmem:[%s1 + $0x20] sm:$0xff]
      %v507 = vld [vmem:[%s1 + $0x28] sm:$0xff]
      %v508 = vld [vmem:[%s1 + $0x30] sm:$0xff]
      %v509 = vld [vmem:[%s1 + $0x38] sm:$0xff]
      %v510 = vld [vmem:[%s1 + $0x40] sm:$0xff]
      %v511 = vld [vmem:[%s1 + $0x48] sm:$0xff]
      %v512 = vld [vmem:[%s1 + $0x50] sm:$0xff]
      %v513 = vld [vmem:[%s1 + $0x58] sm:$0xff]
      %v514 = vld [vmem:[%s1 + $0x60] sm:$0xff]
      %v515 = vld [vmem:[%s1 + $0x68] sm:$0xff]
      %v516 = vld [vmem:[%s1 + $0x70] sm:$0xff]
      %v517 = vld [vmem:[%s1 + $0x78] sm:$0xff]
      %v518 = vld [vmem:[%s1 + $0x80] sm:$0xff]
      %v519 = vld [vmem:[%s1 + $0x88] sm:$0xff]
      %v520 = vld [vmem:[%s1 + $0x90] sm:$0xff]
      %v521 = vld [vmem:[%s1 + $0x98] sm:$0xff]
      %v522 = vld [vmem:[%s1 + $0xa0] sm:$0xff]
      %v523 = vld [vmem:[%s1 + $0xa8] sm:$0xff]
      %v524 = vld [vmem:[%s1 + $0xb0] sm:$0xff]
      %v525 = vld [vmem:[%s1 + $0xb8] sm:$0xff]
      %v526 = vld [vmem:[%s1 + $0xc0] sm:$0xff]
      %v527 = vld [vmem:[%s1 + $0xc8] sm:$0xff]
      %v528 = vld [vmem:[%s1 + $0xd0] sm:$0xff]
      %v529 = vld [vmem:[%s1 + $0xd8] sm:$0xff]
      %v530 = vld [vmem:[%s1 + $0xe0] sm:$0xff]
      %v531 = vld [vmem:[%s1 + $0xe8] sm:$0xff]
      %v532 = vld [vmem:[%s1 + $0xf0] sm:$0xff]
      %v533 = vld [vmem:[%s1 + $0xf8] sm:$0xff]
      %v534 = vld [vmem:[%s1 + $0x100] sm:$0xff]
      %v535 = vld [vmem:[%s1 + $0x108] sm:$0xff]
      %v536 = vld [vmem:[%s1 + $0x110] sm:$0xff]
      %v537 = vld [vmem:[%s1 + $0x118] sm:$0xff]
      %v538 = vld [vmem:[%s1 + $0x120] sm:$0xff]
      %v539 = vld [vmem:[%s1 + $0x128] sm:$0xff]
      %v540 = vld [vmem:[%s1 + $0x130] sm:$0xff]
      %v541 = vld [vmem:[%s1 + $0x138] sm:$0xff]
      %v542 = vld [vmem:[%s1 + $0x140] sm:$0xff]
      %v543 = vld [vmem:[%s1 + $0x148] sm:$0xff]
      %v544 = vld [vmem:[%s1 + $0x150] sm:$0xff]
      %v545 = vld [vmem:[%s1 + $0x158] sm:$0xff]
      %v546 = vld [vmem:[%s1 + $0x160] sm:$0xff]
      %v547 = vld [vmem:[%s1 + $0x168] sm:$0xff]
      %v548 = vld [vmem:[%s1 + $0x170] sm:$0xff]
      %v549 = vld [vmem:[%s1 + $0x178] sm:$0xff]
      %v550 = vld [vmem:[%s1 + $0x180] sm:$0xff]
      %v551 = vld [vmem:[%s1 + $0x188] sm:$0xff]
      %v552 = vld [vmem:[%s1 + $0x190] sm:$0xff]
      %v553 = vld [vmem:[%s1 + $0x198] sm:$0xff]
      %v554 = vld [vmem:[%s1 + $0x1a0] sm:$0xff]
      %v555 = vld [vmem:[%s1 + $0x1a8] sm:$0xff]
      %v556 = vld [vmem:[%s1 + $0x1b0] sm:$0xff]
      %v557 = vld [vmem:[%s1 + $0x1b8] sm:$0xff]
      %v558 = vld [vmem:[%s1 + $0x1c0] sm:$0xff]
      %v559 = vld [vmem:[%s1 + $0x1c8] sm:$0xff]
      %v560 = vld [vmem:[%s1 + $0x1d0] sm:$0xff]
      %v561 = vld [vmem:[%s1 + $0x1d8] sm:$0xff]
      %v562 = vld [vmem:[%s1 + $0x1e0] sm:$0xff]
      %v563 = vld [vmem:[%s1 + $0x1e8] sm:$0xff]
      %v564 = vld [vmem:[%s1 + $0x1f0] sm:$0xff]
      %v565 = vld [vmem:[%s1 + $0x1f8] sm:$0xff]
      %v566 = vld [vmem:[%s1 + $0x200] sm:$0xff]
      %v567 = vld [vmem:[%s1 + $0x208] sm:$0xff]
      %v568 = vld [vmem:[%s1 + $0x210] sm:$0xff]
      %v569 = vld [vmem:[%s1 + $0x218] sm:$0xff]
      %v570 = vld [vmem:[%s1 + $0x220] sm:$0xff]
      %v571 = vld [vmem:[%s1 + $0x228] sm:$0xff]
      %v572 = vld [vmem:[%s1 + $0x230] sm:$0xff]
      %v573 = vld [vmem:[%s1 + $0x238] sm:$0xff]
      %v574 = vld [vmem:[%s1 + $0x240] sm:$0xff]
      %v575 = vld [vmem:[%s1 + $0x248] sm:$0xff]
      %v576 = vld [vmem:[%s1 + $0x250] sm:$0xff]
      %v577 = vld [vmem:[%s1 + $0x258] sm:$0xff]
      %v578 = vld [vmem:[%s1 + $0x260] sm:$0xff]
      %v579 = vld [vmem:[%s1 + $0x268] sm:$0xff]
      %v580 = vld [vmem:[%s1 + $0x270] sm:$0xff]
      %v581 = vld [vmem:[%s1 + $0x278] sm:$0xff]
      %v582 = vld [vmem:[%s1 + $0x280] sm:$0xff]
      %v583 = vld [vmem:[%s1 + $0x288] sm:$0xff]
      %v584 = vld [vmem:[%s1 + $0x290] sm:$0xff]
      %v585 = vld [vmem:[%s1 + $0x298] sm:$0xff]
      %v586 = vld [vmem:[%s1 + $0x2a0] sm:$0xff]
      %v587 = vld [vmem:[%s1 + $0x2a8] sm:$0xff]
      %v588 = vld [vmem:[%s1 + $0x2b0] sm:$0xff]
      %v589 = vld [vmem:[%s1 + $0x2b8] sm:$0xff]
      %v590 = vld [vmem:[%s1 + $0x2c0] sm:$0xff]
      %v591 = vld [vmem:[%s1 + $0x2c8] sm:$0xff]
      %v592 = vld [vmem:[%s1 + $0x2d0] sm:$0xff]
      %v593 = vld [vmem:[%s1 + $0x2d8] sm:$0xff]
      %v594 = vld [vmem:[%s1 + $0x2e0] sm:$0xff]
      %v595 = vld [vmem:[%s1 + $0x2e8] sm:$0xff]
      %v596 = vld [vmem:[%s1 + $0x2f0] sm:$0xff]
      %v597 = vld [vmem:[%s1 + $0x2f8] sm:$0xff]
      %v598 = vld [vmem:[%s1 + $0x300] sm:$0xff]
      %v599 = vld [vmem:[%s1 + $0x308] sm:$0xff]
      %v600 = vld [vmem:[%s1 + $0x310] sm:$0xff]
      %v601 = vld [vmem:[%s1 + $0x318] sm:$0xff]
      %v602 = vld [vmem:[%s1 + $0x320] sm:$0xff]
      %v603 = vld [vmem:[%s1 + $0x328] sm:$0xff]
      %v604 = vld [vmem:[%s1 + $0x330] sm:$0xff]
      %v605 = vld [vmem:[%s1 + $0x338] sm:$0xff]
      %v606 = vld [vmem:[%s1 + $0x340] sm:$0xff]
      %v607 = vld [vmem:[%s1 + $0x348] sm:$0xff]
      %v608 = vld [vmem:[%s1 + $0x350] sm:$0xff]
      %v609 = vld [vmem:[%s1 + $0x358] sm:$0xff]
      %v610 = vld [vmem:[%s1 + $0x360] sm:$0xff]
      %v611 = vld [vmem:[%s1 + $0x368] sm:$0xff]
      %v612 = vld [vmem:[%s1 + $0x370] sm:$0xff]
      %v613 = vld [vmem:[%s1 + $0x378] sm:$0xff]
      %v614 = vld [vmem:[%s1 + $0x380] sm:$0xff]
      %v615 = vld [vmem:[%s1 + $0x388] sm:$0xff]
      %v616 = vld [vmem:[%s1 + $0x390] sm:$0xff]
      %v617 = vld [vmem:[%s1 + $0x398] sm:$0xff]
      %v618 = vld [vmem:[%s1 + $0x3a0] sm:$0xff]
      %v619 = vld [vmem:[%s1 + $0x3a8] sm:$0xff]
      %v620 = vld [vmem:[%s1 + $0x3b0] sm:$0xff]
      %v621 = vld [vmem:[%s1 + $0x3b8] sm:$0xff]
      %v622 = vld [vmem:[%s1 + $0x3c0] sm:$0xff]
      %v623 = vld [vmem:[%s1 + $0x3c8] sm:$0xff]
      %v624 = vld [vmem:[%s1 + $0x3d0] sm:$0xff]
      %v625 = vld [vmem:[%s1 + $0x3d8] sm:$0xff]
      %v626 = vld [vmem:[%s1 + $0x3e0] sm:$0xff]
      %v627 = vld [vmem:[%s1 + $0x3e8] sm:$0xff]
      %v628 = vld [vmem:[%s1 + $0x3f0] sm:$0xff]
      %v629 = vld [vmem:[%s1 + $0x3f8] sm:$0xff]
      %v630 = vld [vmem:[%s1 + $0x400] sm:$0xff]
      %v631 = vld [vmem:[%s1 + $0x408] sm:$0xff]
      %v632 = vld [vmem:[%s1 + $0x410] sm:$0xff]
      %v633 = vld [vmem:[%s1 + $0x418] sm:$0xff]
      %v634 = vld [vmem:[%s1 + $0x420] sm:$0xff]
      %v635 = vld [vmem:[%s1 + $0x428] sm:$0xff]
      %v636 = vld [vmem:[%s1 + $0x430] sm:$0xff]
      %v637 = vld [vmem:[%s1 + $0x438] sm:$0xff]
      %v638 = vld [vmem:[%s1 + $0x440] sm:$0xff]
      %v639 = vld [vmem:[%s1 + $0x448] sm:$0xff]
      %v640 = vld [vmem:[%s1 + $0x450] sm:$0xff]
      %v641 = vld [vmem:[%s1 + $0x458] sm:$0xff]
      %v642 = vld [vmem:[%s1 + $0x460] sm:$0xff]
      %v643 = vld [vmem:[%s1 + $0x468] sm:$0xff]
      %v644 = vld [vmem:[%s1 + $0x470] sm:$0xff]
      %v645 = vld [vmem:[%s1 + $0x478] sm:$0xff]
      %v646 = vld [vmem:[%s1 + $0x480] sm:$0xff]
      %v647 = vld [vmem:[%s1 + $0x488] sm:$0xff]
      %v648 = vld [vmem:[%s1 + $0x490] sm:$0xff]
      %v649 = vld [vmem:[%s1 + $0x498] sm:$0xff]
      %v650 = vld [vmem:[%s1 + $0x4a0] sm:$0xff]
      %v651 = vld [vmem:[%s1 + $0x4a8] sm:$0xff]
      %v652 = vld [vmem:[%s1 + $0x4b0] sm:$0xff]
      %v653 = vld [vmem:[%s1 + $0x4b8] sm:$0xff]
      %v654 = vld [vmem:[%s1 + $0x4c0] sm:$0xff]
      %v655 = vld [vmem:[%s1 + $0x4c8] sm:$0xff]
      %v656 = vld [vmem:[%s1 + $0x4d0] sm:$0xff]
      %v657 = vld [vmem:[%s1 + $0x4d8] sm:$0xff]
      %v658 = vld [vmem:[%s1 + $0x4e0] sm:$0xff]
      %v659 = vld [vmem:[%s1 + $0x4e8] sm:$0xff]
      %v660 = vld [vmem:[%s1 + $0x4f0] sm:$0xff]
      %v661 = vld [vmem:[%s1 + $0x4f8] sm:$0xff]
      %v662 = vld [vmem:[%s1 + $0x500] sm:$0xff]
      %v663 = vld [vmem:[%s1 + $0x508] sm:$0xff]
      %v664 = vld [vmem:[%s1 + $0x510] sm:$0xff]
      %v665 = vld [vmem:[%s1 + $0x518] sm:$0xff]
      %v666 = vld [vmem:[%s1 + $0x520] sm:$0xff]
      %v667 = vld [vmem:[%s1 + $0x528] sm:$0xff]
      %v668 = vld [vmem:[%s1 + $0x530] sm:$0xff]
      %v669 = vld [vmem:[%s1 + $0x538] sm:$0xff]
      %v670 = vld [vmem:[%s1 + $0x540] sm:$0xff]
      %v671 = vld [vmem:[%s1 + $0x548] sm:$0xff]
      %v672 = vld [vmem:[%s1 + $0x550] sm:$0xff]
      %v673 = vld [vmem:[%s1 + $0x558] sm:$0xff]
      %v674 = vld [vmem:[%s1 + $0x560] sm:$0xff]
      %v675 = vld [vmem:[%s1 + $0x568] sm:$0xff]
      %v676 = vld [vmem:[%s1 + $0x570] sm:$0xff]
      %v677 = vld [vmem:[%s1 + $0x578] sm:$0xff]
      %v678 = vld [vmem:[%s1 + $0x580] sm:$0xff]
      %v679 = vld [vmem:[%s1 + $0x588] sm:$0xff]
      %v680 = vld [vmem:[%s1 + $0x590] sm:$0xff]
      %v681 = vld [vmem:[%s1 + $0x598] sm:$0xff]
      %v682 = vld [vmem:[%s1 + $0x5a0] sm:$0xff]
      %v683 = vld [vmem:[%s1 + $0x5a8] sm:$0xff]
      %v684 = vld [vmem:[%s1 + $0x5b0] sm:$0xff]
      %v685 = vld [vmem:[%s1 + $0x5b8] sm:$0xff]
      %v686 = vld [vmem:[%s1 + $0x5c0] sm:$0xff]
      %v687 = vld [vmem:[%s1 + $0x5c8] sm:$0xff]
      %v688 = vld [vmem:[%s1 + $0x5d0] sm:$0xff]
      %v689 = vld [vmem:[%s1 + $0x5d8] sm:$0xff]
      %v690 = vld [vmem:[%s1 + $0x5e0] sm:$0xff]
      %v691 = vld [vmem:[%s1 + $0x5e8] sm:$0xff]
      %v692 = vld [vmem:[%s1 + $0x5f0] sm:$0xff]
      %v693 = vld [vmem:[%s1 + $0x5f8] sm:$0xff]
      %v694 = vld [vmem:[%s1 + $0x600] sm:$0xff]
      %v695 = vld [vmem:[%s1 + $0x608] sm:$0xff]
      %v696 = vld [vmem:[%s1 + $0x610] sm:$0xff]
      %v697 = vld [vmem:[%s1 + $0x618] sm:$0xff]
      %v698 = vld [vmem:[%s1 + $0x620] sm:$0xff]
      %v699 = vld [vmem:[%s1 + $0x628] sm:$0xff]
      %v700 = vld [vmem:[%s1 + $0x630] sm:$0xff]
      %v701 = vld [vmem:[%s1 + $0x638] sm:$0xff]
      %v702 = vld [vmem:[%s1 + $0x640] sm:$0xff]
      %v703 = vld [vmem:[%s1 + $0x648] sm:$0xff]
      %v704 = vld [vmem:[%s1 + $0x650] sm:$0xff]
      %v705 = vld [vmem:[%s1 + $0x658] sm:$0xff]
      %v706 = vld [vmem:[%s1 + $0x660] sm:$0xff]
      %v707 = vld [vmem:[%s1 + $0x668] sm:$0xff]
      %v708 = vld [vmem:[%s1 + $0x670] sm:$0xff]
      %v709 = vld [vmem:[%s1 + $0x678] sm:$0xff]
      %v710 = vld [vmem:[%s1 + $0x680] sm:$0xff]
      %v711 = vld [vmem:[%s1 + $0x688] sm:$0xff]
      %v712 = vld [vmem:[%s1 + $0x690] sm:$0xff]
      %v713 = vld [vmem:[%s1 + $0x698] sm:$0xff]
      %v714 = vld [vmem:[%s1 + $0x6a0] sm:$0xff]
      %v715 = vld [vmem:[%s1 + $0x6a8] sm:$0xff]
      %v716 = vld [vmem:[%s1 + $0x6b0] sm:$0xff]
      %v717 = vld [vmem:[%s1 + $0x6b8] sm:$0xff]
      %v718 = vld [vmem:[%s1 + $0x6c0] sm:$0xff]
      %v719 = vld [vmem:[%s1 + $0x6c8] sm:$0xff]
      %v720 = vld [vmem:[%s1 + $0x6d0] sm:$0xff]
      %v721 = vld [vmem:[%s1 + $0x6d8] sm:$0xff]
      %v722 = vld [vmem:[%s1 + $0x6e0] sm:$0xff]
      %v723 = vld [vmem:[%s1 + $0x6e8] sm:$0xff]
      %v724 = vld [vmem:[%s1 + $0x6f0] sm:$0xff]
      %v725 = vld [vmem:[%s1 + $0x6f8] sm:$0xff]
      %v726 = vld [vmem:[%s1 + $0x700] sm:$0xff]
      %v727 = vld [vmem:[%s1 + $0x708] sm:$0xff]
      %v728 = vld [vmem:[%s1 + $0x710] sm:$0xff]
      %v729 = vld [vmem:[%s1 + $0x718] sm:$0xff]
      %v730 = vld [vmem:[%s1 + $0x720] sm:$0xff]
      %v731 = vld [vmem:[%s1 + $0x728] sm:$0xff]
      %v732 = vld [vmem:[%s1 + $0x730] sm:$0xff]
      %v733 = vld [vmem:[%s1 + $0x738] sm:$0xff]
      %v734 = vld [vmem:[%s1 + $0x740] sm:$0xff]
      %v735 = vld [vmem:[%s1 + $0x748] sm:$0xff]
      %v736 = vld [vmem:[%s1 + $0x750] sm:$0xff]
      %v737 = vld [vmem:[%s1 + $0x758] sm:$0xff]
      %v738 = vld [vmem:[%s1 + $0x760] sm:$0xff]
      %v739 = vld [vmem:[%s1 + $0x768] sm:$0xff]
      %v740 = vld [vmem:[%s1 + $0x770] sm:$0xff]
      %v741 = vld [vmem:[%s1 + $0x778] sm:$0xff]
      %v742 = vld [vmem:[%s1 + $0x780] sm:$0xff]
      %v743 = vld [vmem:[%s1 + $0x788] sm:$0xff]
      %v744 = vld [vmem:[%s1 + $0x790] sm:$0xff]
      %v745 = vld [vmem:[%s1 + $0x798] sm:$0xff]
      %v746 = vld [vmem:[%s1 + $0x7a0] sm:$0xff]
      %v747 = vld [vmem:[%s1 + $0x7a8] sm:$0xff]
      %v748 = vld [vmem:[%s1 + $0x7b0] sm:$0xff]
      %v749 = vld [vmem:[%s1 + $0x7b8] sm:$0xff]
      %v750 = vld [vmem:[%s1 + $0x7c0] sm:$0xff]
      %v751 = vld [vmem:[%s1 + $0x7c8] sm:$0xff]
      %v752 = vld [vmem:[%s1 + $0x7d0] sm:$0xff]
      %v753 = vld [vmem:[%s1 + $0x7d8] sm:$0xff]
      %v754 = vld [vmem:[%s1 + $0x7e0] sm:$0xff]
      %v755 = vld [vmem:[%s1 + $0x7e8] sm:$0xff]
      %v756 = vld [vmem:[%s1 + $0x7f0] sm:$0xff]
      %v757 = vld [vmem:[%s1 + $0x7f8] sm:$0xff]
      %v758 = vld [vmem:[%s1 + $0x800] sm:$0xff]
      %v759 = vld [vmem:[%s1 + $0x808] sm:$0xff]
      %v760 = vld [vmem:[%s1 + $0x810] sm:$0xff]
      %v761 = vld [vmem:[%s1 + $0x818] sm:$0xff]
      %v762 = vld [vmem:[%s1 + $0x820] sm:$0xff]
      %v763 = vld [vmem:[%s1 + $0x828] sm:$0xff]
      %v764 = vld [vmem:[%s1 + $0x830] sm:$0xff]
      %v765 = vld [vmem:[%s1 + $0x838] sm:$0xff]
      %v766 = vld [vmem:[%s1 + $0x840] sm:$0xff]
      %v767 = vld [vmem:[%s1 + $0x848] sm:$0xff]
      %v768 = vld [vmem:[%s1 + $0x850] sm:$0xff]
      %v769 = vld [vmem:[%s1 + $0x858] sm:$0xff]
      %v770 = vld [vmem:[%s1 + $0x860] sm:$0xff]
      %v771 = vld [vmem:[%s1 + $0x868] sm:$0xff]
      %v772 = vld [vmem:[%s1 + $0x870] sm:$0xff]
      %v773 = vld [vmem:[%s1 + $0x878] sm:$0xff]
      %v774 = vld [vmem:[%s1 + $0x880] sm:$0xff]
      %v775 = vld [vmem:[%s1 + $0x888] sm:$0xff]
      %v776 = vld [vmem:[%s1 + $0x890] sm:$0xff]
      %v777 = vld [vmem:[%s1 + $0x898] sm:$0xff]
      %v778 = vld [vmem:[%s1 + $0x8a0] sm:$0xff]
      %v779 = vld [vmem:[%s1 + $0x8a8] sm:$0xff]
      %v780 = vld [vmem:[%s1 + $0x8b0] sm:$0xff]
      %v781 = vld [vmem:[%s1 + $0x8b8] sm:$0xff]
      %v782 = vld [vmem:[%s1 + $0x8c0] sm:$0xff]
      %v783 = vld [vmem:[%s1 + $0x8c8] sm:$0xff]
      %v784 = vld [vmem:[%s1 + $0x8d0] sm:$0xff]
      %v785 = vld [vmem:[%s1 + $0x8d8] sm:$0xff]
      %v786 = vld [vmem:[%s1 + $0x8e0] sm:$0xff]
      %v787 = vld [vmem:[%s1 + $0x8e8] sm:$0xff]
      %v788 = vld [vmem:[%s1 + $0x8f0] sm:$0xff]
      %v789 = vld [vmem:[%s1 + $0x8f8] sm:$0xff]
      %v790 = vld [vmem:[%s1 + $0x900] sm:$0xff]
      %v791 = vld [vmem:[%s1 + $0x908] sm:$0xff]
      %v792 = vld [vmem:[%s1 + $0x910] sm:$0xff]
      %v793 = vld [vmem:[%s1 + $0x918] sm:$0xff]
      %v794 = vld [vmem:[%s1 + $0x920] sm:$0xff]
      %v795 = vld [vmem:[%s1 + $0x928] sm:$0xff]
      %v796 = vld [vmem:[%s1 + $0x930] sm:$0xff]
      %v797 = vld [vmem:[%s1 + $0x938] sm:$0xff]
      %v798 = vld [vmem:[%s1 + $0x940] sm:$0xff]
      %v799 = vld [vmem:[%s1 + $0x948] sm:$0xff]
      %v800 = vld [vmem:[%s1 + $0x950] sm:$0xff]
      %v801 = vld [vmem:[%s1 + $0x958] sm:$0xff]
      %v802 = vld [vmem:[%s1 + $0x960] sm:$0xff]
      %v803 = vld [vmem:[%s1 + $0x968] sm:$0xff]
      %v804 = vld [vmem:[%s1 + $0x970] sm:$0xff]
      %v805 = vld [vmem:[%s1 + $0x978] sm:$0xff]
      %v806 = vld [vmem:[%s1 + $0x980] sm:$0xff]
      %v807 = vld [vmem:[%s1 + $0x988] sm:$0xff]
      %v808 = vld [vmem:[%s1 + $0x990] sm:$0xff]
      %v809 = vld [vmem:[%s1 + $0x998] sm:$0xff]
      %v810 = vld [vmem:[%s1 + $0x9a0] sm:$0xff]
      %v811 = vld [vmem:[%s1 + $0x9a8] sm:$0xff]
      %v812 = vld [vmem:[%s1 + $0x9b0] sm:$0xff]
      %v813 = vld [vmem:[%s1 + $0x9b8] sm:$0xff]
      %v814 = vld [vmem:[%s1 + $0x9c0] sm:$0xff]
      %v815 = vld [vmem:[%s1 + $0x9c8] sm:$0xff]
      %v816 = vld [vmem:[%s1 + $0x9d0] sm:$0xff]
      %v817 = vld [vmem:[%s1 + $0x9d8] sm:$0xff]
      %v818 = vld [vmem:[%s1 + $0x9e0] sm:$0xff]
      %v819 = vld [vmem:[%s1 + $0x9e8] sm:$0xff]
      %v820 = vld [vmem:[%s1 + $0x9f0] sm:$0xff]
      %v821 = vld [vmem:[%s1 + $0x9f8] sm:$0xff]
      %v822 = vld [vmem:[%s1 + $0xa00] sm:$0xff]
      %v823 = vld [vmem:[%s1 + $0xa08] sm:$0xff]
      %v824 = vld [vmem:[%s1 + $0xa10] sm:$0xff]
      %v825 = vld [vmem:[%s1 + $0xa18] sm:$0xff]
      %v826 = vld [vmem:[%s1 + $0xa20] sm:$0xff]
      %v827 = vld [vmem:[%s1 + $0xa28] sm:$0xff]
      %v828 = vld [vmem:[%s1 + $0xa30] sm:$0xff]
      %v829 = vld [vmem:[%s1 + $0xa38] sm:$0xff]
      %v830 = vld [vmem:[%s1 + $0xa40] sm:$0xff]
      %v831 = vld [vmem:[%s1 + $0xa48] sm:$0xff]
      %v832 = vld [vmem:[%s1 + $0xa50] sm:$0xff]
      %v833 = vld [vmem:[%s1 + $0xa58] sm:$0xff]
      %v834 = vld [vmem:[%s1 + $0xa60] sm:$0xff]
      %v835 = vld [vmem:[%s1 + $0xa68] sm:$0xff]
      %v836 = vld [vmem:[%s1 + $0xa70] sm:$0xff]
      %v837 = vld [vmem:[%s1 + $0xa78] sm:$0xff]
      %v838 = vld [vmem:[%s1 + $0xa80] sm:$0xff]
      %v839 = vld [vmem:[%s1 + $0xa88] sm:$0xff]
      %v840 = vld [vmem:[%s1 + $0xa90] sm:$0xff]
      %v841 = vld [vmem:[%s1 + $0xa98] sm:$0xff]
      %v842 = vld [vmem:[%s1 + $0xaa0] sm:$0xff]
      %v843 = vld [vmem:[%s1 + $0xaa8] sm:$0xff]
      %v844 = vld [vmem:[%s1 + $0xab0] sm:$0xff]
      %v845 = vld [vmem:[%s1 + $0xab8] sm:$0xff]
      %v846 = vld [vmem:[%s1 + $0xac0] sm:$0xff]
      %v847 = vld [vmem:[%s1 + $0xac8] sm:$0xff]
      %v848 = vld [vmem:[%s1 + $0xad0] sm:$0xff]
      %v849 = vld [vmem:[%s1 + $0xad8] sm:$0xff]
      %v850 = vld [vmem:[%s1 + $0xae0] sm:$0xff]
      %v851 = vld [vmem:[%s1 + $0xae8] sm:$0xff]
      %v852 = vld [vmem:[%s1 + $0xaf0] sm:$0xff]
      %v853 = vld [vmem:[%s1 + $0xaf8] sm:$0xff]
      %v854 = vld [vmem:[%s1 + $0xb00] sm:$0xff]
      %v855 = vld [vmem:[%s1 + $0xb08] sm:$0xff]
      %v856 = vld [vmem:[%s1 + $0xb10] sm:$0xff]
      %v857 = vld [vmem:[%s1 + $0xb18] sm:$0xff]
      %v858 = vld [vmem:[%s1 + $0xb20] sm:$0xff]
      %v859 = vld [vmem:[%s1 + $0xb28] sm:$0xff]
      %v860 = vld [vmem:[%s1 + $0xb30] sm:$0xff]
      %v861 = vld [vmem:[%s1 + $0xb38] sm:$0xff]
      %v862 = vld [vmem:[%s1 + $0xb40] sm:$0xff]
      %v863 = vld [vmem:[%s1 + $0xb48] sm:$0xff]
      %v864 = vld [vmem:[%s1 + $0xb50] sm:$0xff]
      %v865 = vld [vmem:[%s1 + $0xb58] sm:$0xff]
      %v866 = vld [vmem:[%s1 + $0xb60] sm:$0xff]
      %v867 = vld [vmem:[%s1 + $0xb68] sm:$0xff]
      %v868 = vld [vmem:[%s1 + $0xb70] sm:$0xff]
      %v869 = vld [vmem:[%s1 + $0xb78] sm:$0xff]
      %v870 = vld [vmem:[%s1 + $0xb80] sm:$0xff]
      %v871 = vld [vmem:[%s1 + $0xb88] sm:$0xff]
      %v872 = vld [vmem:[%s1 + $0xb90] sm:$0xff]
      %v873 = vld [vmem:[%s1 + $0xb98] sm:$0xff]
      %v874 = vld [vmem:[%s1 + $0xba0] sm:$0xff]
      %v875 = vld [vmem:[%s1 + $0xba8] sm:$0xff]
      %v876 = vld [vmem:[%s1 + $0xbb0] sm:$0xff]
      %v877 = vld [vmem:[%s1 + $0xbb8] sm:$0xff]
      %v878 = vld [vmem:[%s1 + $0xbc0] sm:$0xff]
      %v879 = vld [vmem:[%s1 + $0xbc8] sm:$0xff]
      %v880 = vld [vmem:[%s1 + $0xbd0] sm:$0xff]
      %v881 = vld [vmem:[%s1 + $0xbd8] sm:$0xff]
      %v882 = vld [vmem:[%s1 + $0xbe0] sm:$0xff]
      %v883 = vld [vmem:[%s1 + $0xbe8] sm:$0xff]
      %v884 = vld [vmem:[%s1 + $0xbf0] sm:$0xff]
      %v885 = vld [vmem:[%s1 + $0xbf8] sm:$0xff]
      %v886 = vld [vmem:[%s1 + $0xc00] sm:$0xff]
      %v887 = vld [vmem:[%s1 + $0xc08] sm:$0xff]
      %v888 = vld [vmem:[%s1 + $0xc10] sm:$0xff]
      %v889 = vld [vmem:[%s1 + $0xc18] sm:$0xff]
      %v890 = vld [vmem:[%s1 + $0xc20] sm:$0xff]
      %v891 = vld [vmem:[%s1 + $0xc28] sm:$0xff]
      %v892 = vld [vmem:[%s1 + $0xc30] sm:$0xff]
      %v893 = vld [vmem:[%s1 + $0xc38] sm:$0xff]
      %v894 = vld [vmem:[%s1 + $0xc40] sm:$0xff]
      %v895 = vld [vmem:[%s1 + $0xc48] sm:$0xff]
      %v896 = vld [vmem:[%s1 + $0xc50] sm:$0xff]
      %v897 = vld [vmem:[%s1 + $0xc58] sm:$0xff]
      %v898 = vld [vmem:[%s1 + $0xc60] sm:$0xff]
      %v899 = vld [vmem:[%s1 + $0xc68] sm:$0xff]
      %v900 = vld [vmem:[%s1 + $0xc70] sm:$0xff]
      %v901 = vld [vmem:[%s1 + $0xc78] sm:$0xff]
      %v902 = vld [vmem:[%s1 + $0xc80] sm:$0xff]
      %v903 = vld [vmem:[%s1 + $0xc88] sm:$0xff]
      %v904 = vld [vmem:[%s1 + $0xc90] sm:$0xff]
      %v905 = vld [vmem:[%s1 + $0xc98] sm:$0xff]
      %v906 = vld [vmem:[%s1 + $0xca0] sm:$0xff]
      %v907 = vld [vmem:[%s1 + $0xca8] sm:$0xff]
      %v908 = vld [vmem:[%s1 + $0xcb0] sm:$0xff]
      %v909 = vld [vmem:[%s1 + $0xcb8] sm:$0xff]
      %v910 = vld [vmem:[%s1 + $0xcc0] sm:$0xff]
      %v911 = vld [vmem:[%s1 + $0xcc8] sm:$0xff]
      %v912 = vld [vmem:[%s1 + $0xcd0] sm:$0xff]
      %v913 = vld [vmem:[%s1 + $0xcd8] sm:$0xff]
      %v914 = vld [vmem:[%s1 + $0xce0] sm:$0xff]
      %v915 = vld [vmem:[%s1 + $0xce8] sm:$0xff]
      %v916 = vld [vmem:[%s1 + $0xcf0] sm:$0xff]
      %v917 = vld [vmem:[%s1 + $0xcf8] sm:$0xff]
      %v918 = vld [vmem:[%s1 + $0xd00] sm:$0xff]
      %v919 = vld [vmem:[%s1 + $0xd08] sm:$0xff]
      %v920 = vld [vmem:[%s1 + $0xd10] sm:$0xff]
      %v921 = vld [vmem:[%s1 + $0xd18] sm:$0xff]
      %v922 = vld [vmem:[%s1 + $0xd20] sm:$0xff]
      %v923 = vld [vmem:[%s1 + $0xd28] sm:$0xff]
      %v924 = vld [vmem:[%s1 + $0xd30] sm:$0xff]
      %v925 = vld [vmem:[%s1 + $0xd38] sm:$0xff]
      %v926 = vld [vmem:[%s1 + $0xd40] sm:$0xff]
      %v927 = vld [vmem:[%s1 + $0xd48] sm:$0xff]
      %v928 = vld [vmem:[%s1 + $0xd50] sm:$0xff]
      %v929 = vld [vmem:[%s1 + $0xd58] sm:$0xff]
      %v930 = vld [vmem:[%s1 + $0xd60] sm:$0xff]
      %v931 = vld [vmem:[%s1 + $0xd68] sm:$0xff]
      %v932 = vld [vmem:[%s1 + $0xd70] sm:$0xff]
      %v933 = vld [vmem:[%s1 + $0xd78] sm:$0xff]
      %v934 = vld [vmem:[%s1 + $0xd80] sm:$0xff]
      %v935 = vld [vmem:[%s1 + $0xd88] sm:$0xff]
      %v936 = vld [vmem:[%s1 + $0xd90] sm:$0xff]
      %v937 = vld [vmem:[%s1 + $0xd98] sm:$0xff]
      %v938 = vld [vmem:[%s1 + $0xda0] sm:$0xff]
      %v939 = vld [vmem:[%s1 + $0xda8] sm:$0xff]
      %v940 = vld [vmem:[%s1 + $0xdb0] sm:$0xff]
      %v941 = vld [vmem:[%s1 + $0xdb8] sm:$0xff]
      %v942 = vld [vmem:[%s1 + $0xdc0] sm:$0xff]
      %v943 = vld [vmem:[%s1 + $0xdc8] sm:$0xff]
      %v944 = vld [vmem:[%s1 + $0xdd0] sm:$0xff]
      %v945 = vld [vmem:[%s1 + $0xdd8] sm:$0xff]
      %v946 = vld [vmem:[%s1 + $0xde0] sm:$0xff]
      %v947 = vld [vmem:[%s1 + $0xde8] sm:$0xff]
      %v948 = vld [vmem:[%s1 + $0xdf0] sm:$0xff]
      %v949 = vld [vmem:[%s1 + $0xdf8] sm:$0xff]
      %v950 = vld [vmem:[%s1 + $0xe00] sm:$0xff]
      %v951 = vld [vmem:[%s1 + $0xe08] sm:$0xff]
      %v952 = vld [vmem:[%s1 + $0xe10] sm:$0xff]
      %v953 = vld [vmem:[%s1 + $0xe18] sm:$0xff]
      %v954 = vld [vmem:[%s1 + $0xe20] sm:$0xff]
      %v955 = vld [vmem:[%s1 + $0xe28] sm:$0xff]
      %v956 = vld [vmem:[%s1 + $0xe30] sm:$0xff]
      %v957 = vld [vmem:[%s1 + $0xe38] sm:$0xff]
      %v958 = vld [vmem:[%s1 + $0xe40] sm:$0xff]
      %v959 = vld [vmem:[%s1 + $0xe48] sm:$0xff]
      %v960 = vld [vmem:[%s1 + $0xe50] sm:$0xff]
      %v961 = vld [vmem:[%s1 + $0xe58] sm:$0xff]
      %v962 = vld [vmem:[%s1 + $0xe60] sm:$0xff]
      %v963 = vld [vmem:[%s1 + $0xe68] sm:$0xff]
      %v964 = vld [vmem:[%s1 + $0xe70] sm:$0xff]
      %v965 = vld [vmem:[%s1 + $0xe78] sm:$0xff]
      %v966 = vld [vmem:[%s1 + $0xe80] sm:$0xff]
      %v967 = vld [vmem:[%s1 + $0xe88] sm:$0xff]
      %v968 = vld [vmem:[%s1 + $0xe90] sm:$0xff]
      %v969 = vld [vmem:[%s1 + $0xe98] sm:$0xff]
      %v970 = vld [vmem:[%s1 + $0xea0] sm:$0xff]
      %v971 = vld [vmem:[%s1 + $0xea8] sm:$0xff]
      %v972 = vld [vmem:[%s1 + $0xeb0] sm:$0xff]
      %v973 = vld [vmem:[%s1 + $0xeb8] sm:$0xff]
      %v974 = vld [vmem:[%s1 + $0xec0] sm:$0xff]
      %v975 = vld [vmem:[%s1 + $0xec8] sm:$0xff]
      %v976 = vld [vmem:[%s1 + $0xed0] sm:$0xff]
      %v977 = vld [vmem:[%s1 + $0xed8] sm:$0xff]
      %v978 = vld [vmem:[%s1 + $0xee0] sm:$0xff]
      %v979 = vld [vmem:[%s1 + $0xee8] sm:$0xff]
      %v980 = vld [vmem:[%s1 + $0xef0] sm:$0xff]
      %v981 = vld [vmem:[%s1 + $0xef8] sm:$0xff]
      %v982 = vld [vmem:[%s1 + $0xf00] sm:$0xff]
      %v983 = vld [vmem:[%s1 + $0xf08] sm:$0xff]
      %v984 = vld [vmem:[%s1 + $0xf10] sm:$0xff]
      %v985 = vld [vmem:[%s1 + $0xf18] sm:$0xff]
      %v986 = vld [vmem:[%s1 + $0xf20] sm:$0xff]
      %v987 = vld [vmem:[%s1 + $0xf28] sm:$0xff]
      %v988 = vld [vmem:[%s1 + $0xf30] sm:$0xff]
      %v989 = vld [vmem:[%s1 + $0xf38] sm:$0xff]
      %v990 = vld [vmem:[%s1 + $0xf40] sm:$0xff]
      %v991 = vld [vmem:[%s1 + $0xf48] sm:$0xff]
      %v992 = vld [vmem:[%s1 + $0xf50] sm:$0xff]
      %v993 = vld [vmem:[%s1 + $0xf58] sm:$0xff]
      %v994 = vld [vmem:[%s1 + $0xf60] sm:$0xff]
      %v995 = vld [vmem:[%s1 + $0xf68] sm:$0xff]
      %v996 = vld [vmem:[%s1 + $0xf70] sm:$0xff]
      %v997 = vld [vmem:[%s1 + $0xf78] sm:$0xff]
      %v998 = vld [vmem:[%s1 + $0xf80] sm:$0xff]
      %v999 = vld [vmem:[%s1 + $0xf88] sm:$0xff]
      %v1000 = vld [vmem:[%s1 + $0xf90] sm:$0xff]
      %v1001 = vld [vmem:[%s1 + $0xf98] sm:$0xff]
      %v1002 = vld [vmem:[%s1 + $0xfa0] sm:$0xff]
      %v1003 = vld [vmem:[%s1 + $0xfa8] sm:$0xff]
      %v1004 = vld [vmem:[%s1 + $0xfb0] sm:$0xff]
      %v1005 = vld [vmem:[%s1 + $0xfb8] sm:$0xff]
      %v1006 = vld [vmem:[%s1 + $0xfc0] sm:$0xff]
      %v1007 = vld [vmem:[%s1 + $0xfc8] sm:$0xff]
      %v1008 = vld [vmem:[%s1 + $0xfd0] sm:$0xff]
      %v1009 = vld [vmem:[%s1 + $0xfd8] sm:$0xff]
      %v1010 = vld [vmem:[%s1 + $0xfe0] sm:$0xff]
      %v1011 = vld [vmem:[%s1 + $0xfe8] sm:$0xff]
      %v1012 = vld [vmem:[%s1 + $0xff0] sm:$0xff]
      %v1013 = vld [vmem:[%s1 + $0xff8] sm:$0xff]
      %v1014 = vld [vmem:[%s1 + $0x1000] sm:$0xff]
      %v1015 = vld [vmem:[%s1 + $0x1008] sm:$0xff]
      %v1016 = vld [vmem:[%s1 + $0x1010] sm:$0xff]
      %v1017 = vld [vmem:[%s1 + $0x1018] sm:$0xff]
      %v1018 = vld [vmem:[%s1 + $0x1020] sm:$0xff]
      %v1019 = vld [vmem:[%s1 + $0x1028] sm:$0xff]
      %v1020 = vld [vmem:[%s1 + $0x1030] sm:$0xff]
      %v1021 = vld [vmem:[%s1 + $0x1038] sm:$0xff]
      %v1022 = vld [vmem:[%s1 + $0x1040] sm:$0xff]
      %v1023 = vld [vmem:[%s1 + $0x1048] sm:$0xff]
      %v1024 = vld [vmem:[%s1 + $0x1050] sm:$0xff]
      %v1025 = vld [vmem:[%s1 + $0x1058] sm:$0xff]
      %v1026 = vld [vmem:[%s1 + $0x1060] sm:$0xff]
      %v1027 = vld [vmem:[%s1 + $0x1068] sm:$0xff]
      %v1028 = vld [vmem:[%s1 + $0x1070] sm:$0xff]
      %v1029 = vld [vmem:[%s1 + $0x1078] sm:$0xff]
      %v1030 = vld [vmem:[%s1 + $0x1080] sm:$0xff]
      %v1031 = vld [vmem:[%s1 + $0x1088] sm:$0xff]
      %v1032 = vld [vmem:[%s1 + $0x1090] sm:$0xff]
      %v1033 = vld [vmem:[%s1 + $0x1098] sm:$0xff]
      %v1034 = vld [vmem:[%s1 + $0x10a0] sm:$0xff]
      %v1035 = vld [vmem:[%s1 + $0x10a8] sm:$0xff]
      %v1036 = vld [vmem:[%s1 + $0x10b0] sm:$0xff]
      %v1037 = vld [vmem:[%s1 + $0x10b8] sm:$0xff]
      %v1038 = vld [vmem:[%s1 + $0x10c0] sm:$0xff]
      %v1039 = vld [vmem:[%s1 + $0x10c8] sm:$0xff]
      %v1040 = vld [vmem:[%s1 + $0x10d0] sm:$0xff]
      %v1041 = vld [vmem:[%s1 + $0x10d8] sm:$0xff]
      %v1042 = vld [vmem:[%s1 + $0x10e0] sm:$0xff]
      %v1043 = vld [vmem:[%s1 + $0x10e8] sm:$0xff]
      %v1044 = vld [vmem:[%s1 + $0x10f0] sm:$0xff]
      %v1045 = vld [vmem:[%s1 + $0x10f8] sm:$0xff]
      %v1046 = vld [vmem:[%s1 + $0x1100] sm:$0xff]
      %v1047 = vld [vmem:[%s1 + $0x1108] sm:$0xff]
      %v1048 = vld [vmem:[%s1 + $0x1110] sm:$0xff]
      %v1049 = vld [vmem:[%s1 + $0x1118] sm:$0xff]
      %v1050 = vld [vmem:[%s1 + $0x1120] sm:$0xff]
      %v1051 = vld [vmem:[%s1 + $0x1128] sm:$0xff]
      %v1052 = vld [vmem:[%s1 + $0x1130] sm:$0xff]
      %v1053 = vld [vmem:[%s1 + $0x1138] sm:$0xff]
      %v1054 = vld [vmem:[%s1 + $0x1140] sm:$0xff]
      %v1055 = vld [vmem:[%s1 + $0x1148] sm:$0xff]
      %v1056 = vld [vmem:[%s1 + $0x1150] sm:$0xff]
      %v1057 = vld [vmem:[%s1 + $0x1158] sm:$0xff]
      %v1058 = vld [vmem:[%s1 + $0x1160] sm:$0xff]
      %v1059 = vld [vmem:[%s1 + $0x1168] sm:$0xff]
      %v1060 = vld [vmem:[%s1 + $0x1170] sm:$0xff]
      %v1061 = vld [vmem:[%s1 + $0x1178] sm:$0xff]
      %v1062 = vld [vmem:[%s1 + $0x1180] sm:$0xff]
      %v1063 = vld [vmem:[%s1 + $0x1188] sm:$0xff]
      %v1064 = vld [vmem:[%s1 + $0x1190] sm:$0xff]
      %v1065 = vld [vmem:[%s1 + $0x1198] sm:$0xff]
      %v1066 = vld [vmem:[%s1 + $0x11a0] sm:$0xff]
      %v1067 = vld [vmem:[%s1 + $0x11a8] sm:$0xff]
      %v1068 = vld [vmem:[%s1 + $0x11b0] sm:$0xff]
      %v1069 = vld [vmem:[%s1 + $0x11b8] sm:$0xff]
      %v1070 = vld [vmem:[%s1 + $0x11c0] sm:$0xff]
      %v1071 = vld [vmem:[%s1 + $0x11c8] sm:$0xff]
      %v1072 = vld [vmem:[%s1 + $0x11d0] sm:$0xff]
      %v1073 = vld [vmem:[%s1 + $0x11d8] sm:$0xff]
      %v1074 = vld [vmem:[%s1 + $0x11e0] sm:$0xff]
      %v1075 = vld [vmem:[%s1 + $0x11e8] sm:$0xff]
      %v1076 = vld [vmem:[%s1 + $0x11f0] sm:$0xff]
      %v1077 = vld [vmem:[%s1 + $0x11f8] sm:$0xff]
      %v1078 = vld [vmem:[%s1 + $0x1200] sm:$0xff]
      %v1079 = vld [vmem:[%s1 + $0x1208] sm:$0xff]
      %v1080 = vld [vmem:[%s1 + $0x1210] sm:$0xff]
      %v1081 = vld [vmem:[%s1 + $0x1218] sm:$0xff]
      %v1082 = vld [vmem:[%s1 + $0x1220] sm:$0xff]
      %v1083 = vld [vmem:[%s1 + $0x1228] sm:$0xff]
      %v1084 = vld [vmem:[%s1 + $0x1230] sm:$0xff]
      %v1085 = vld [vmem:[%s1 + $0x1238] sm:$0xff]
      %v1086 = vld [vmem:[%s1 + $0x1240] sm:$0xff]
      %v1087 = vld [vmem:[%s1 + $0x1248] sm:$0xff]
      %v1088 = vld [vmem:[%s1 + $0x1250] sm:$0xff]
      %v1089 = vld [vmem:[%s1 + $0x1258] sm:$0xff]
      %v1090 = vld [vmem:[%s1 + $0x1260] sm:$0xff]
      %v1091 = vld [vmem:[%s1 + $0x1268] sm:$0xff]
      %v1092 = vld [vmem:[%s1 + $0x1270] sm:$0xff]
      %v1093 = vld [vmem:[%s1 + $0x1278] sm:$0xff]
      %v1094 = vld [vmem:[%s1 + $0x1280] sm:$0xff]
      %v1095 = vld [vmem:[%s1 + $0x1288] sm:$0xff]
      %v1096 = vld [vmem:[%s1 + $0x1290] sm:$0xff]
      %v1097 = vld [vmem:[%s1 + $0x1298] sm:$0xff]
      %v1098 = vld [vmem:[%s1 + $0x12a0] sm:$0xff]
      %v1099 = vld [vmem:[%s1 + $0x12a8] sm:$0xff]
      %v1100 = vld [vmem:[%s1 + $0x12b0] sm:$0xff]
      %v1101 = vld [vmem:[%s1 + $0x12b8] sm:$0xff]
      %v1102 = vld [vmem:[%s1 + $0x12c0] sm:$0xff]
      %v1103 = vld [vmem:[%s1 + $0x12c8] sm:$0xff]
      %v1104 = vld [vmem:[%s1 + $0x12d0] sm:$0xff]
      %v1105 = vld [vmem:[%s1 + $0x12d8] sm:$0xff]
      %v1106 = vld [vmem:[%s1 + $0x12e0] sm:$0xff]
      %v1107 = vld [vmem:[%s1 + $0x12e8] sm:$0xff]
      %v1108 = vld [vmem:[%s1 + $0x12f0] sm:$0xff]
      %v1109 = vld [vmem:[%s1 + $0x12f8] sm:$0xff]
      %v1110 = vld [vmem:[%s1 + $0x1300] sm:$0xff]
      %v1111 = vld [vmem:[%s1 + $0x1308] sm:$0xff]
      %v1112 = vld [vmem:[%s1 + $0x1310] sm:$0xff]
      %v1113 = vld [vmem:[%s1 + $0x1318] sm:$0xff]
      %v1114 = vld [vmem:[%s1 + $0x1320] sm:$0xff]
      %v1115 = vld [vmem:[%s1 + $0x1328] sm:$0xff]
      %v1116 = vld [vmem:[%s1 + $0x1330] sm:$0xff]
      %v1117 = vld [vmem:[%s1 + $0x1338] sm:$0xff]
      %v1118 = vld [vmem:[%s1 + $0x1340] sm:$0xff]
      %v1119 = vld [vmem:[%s1 + $0x1348] sm:$0xff]
      %v1120 = vld [vmem:[%s1 + $0x1350] sm:$0xff]
      %v1121 = vld [vmem:[%s1 + $0x1358] sm:$0xff]
      %v1122 = vld [vmem:[%s1 + $0x1360] sm:$0xff]
      %v1123 = vld [vmem:[%s1 + $0x1368] sm:$0xff]
      %v1124 = vld [vmem:[%s1 + $0x1370] sm:$0xff]
      %v1125 = vld [vmem:[%s1 + $0x1378] sm:$0xff]
      %v1126 = vld [vmem:[%s1 + $0x1380] sm:$0xff]
      %v1127 = vld [vmem:[%s1 + $0x1388] sm:$0xff]
      %v1128 = vld [vmem:[%s1 + $0x1390] sm:$0xff]
      %v1129 = vld [vmem:[%s1 + $0x1398] sm:$0xff]
      %v1130 = vld [vmem:[%s1 + $0x13a0] sm:$0xff]
      %v1131 = vld [vmem:[%s1 + $0x13a8] sm:$0xff]
      %v1132 = vld [vmem:[%s1 + $0x13b0] sm:$0xff]
      %v1133 = vld [vmem:[%s1 + $0x13b8] sm:$0xff]
      %v1134 = vld [vmem:[%s1 + $0x13c0] sm:$0xff]
      %v1135 = vld [vmem:[%s1 + $0x13c8] sm:$0xff]
      %v1136 = vld [vmem:[%s1 + $0x13d0] sm:$0xff]
      %v1137 = vld [vmem:[%s1 + $0x13d8] sm:$0xff]
      %v1138 = vld [vmem:[%s1 + $0x13e0] sm:$0xff]
      %v1139 = vld [vmem:[%s1 + $0x13e8] sm:$0xff]
      %v1140 = vld [vmem:[%s1 + $0x13f0] sm:$0xff]
      %v1141 = vld [vmem:[%s1 + $0x13f8] sm:$0xff]
      %v1142 = vld [vmem:[%s1 + $0x1400] sm:$0xff]
      %v1143 = vld [vmem:[%s1 + $0x1408] sm:$0xff]
      %v1144 = vld [vmem:[%s1 + $0x1410] sm:$0xff]
      %v1145 = vld [vmem:[%s1 + $0x1418] sm:$0xff]
      %v1146 = vld [vmem:[%s1 + $0x1420] sm:$0xff]
      %v1147 = vld [vmem:[%s1 + $0x1428] sm:$0xff]
      %v1148 = vld [vmem:[%s1 + $0x1430] sm:$0xff]
      %v1149 = vld [vmem:[%s1 + $0x1438] sm:$0xff]
      %v1150 = vld [vmem:[%s1 + $0x1440] sm:$0xff]
      %v1151 = vld [vmem:[%s1 + $0x1448] sm:$0xff]
      %v1152 = vld [vmem:[%s1 + $0x1450] sm:$0xff]
      %v1153 = vld [vmem:[%s1 + $0x1458] sm:$0xff]
      %v1154 = vld [vmem:[%s1 + $0x1460] sm:$0xff]
      %v1155 = vld [vmem:[%s1 + $0x1468] sm:$0xff]
      %v1156 = vld [vmem:[%s1 + $0x1470] sm:$0xff]
      %v1157 = vld [vmem:[%s1 + $0x1478] sm:$0xff]
      %v1158 = vld [vmem:[%s1 + $0x1480] sm:$0xff]
      %v1159 = vld [vmem:[%s1 + $0x1488] sm:$0xff]
      %v1160 = vld [vmem:[%s1 + $0x1490] sm:$0xff]
      %v1161 = vld [vmem:[%s1 + $0x1498] sm:$0xff]
      %v1162 = vld [vmem:[%s1 + $0x14a0] sm:$0xff]
      %v1163 = vld [vmem:[%s1 + $0x14a8] sm:$0xff]
      %v1164 = vld [vmem:[%s1 + $0x14b0] sm:$0xff]
      %v1165 = vld [vmem:[%s1 + $0x14b8] sm:$0xff]
      %v1166 = vld [vmem:[%s1 + $0x14c0] sm:$0xff]
      %v1167 = vld [vmem:[%s1 + $0x14c8] sm:$0xff]
      %v1168 = vld [vmem:[%s1 + $0x14d0] sm:$0xff]
      %v1169 = vld [vmem:[%s1 + $0x14d8] sm:$0xff]
      %v1170 = vld [vmem:[%s1 + $0x14e0] sm:$0xff]
      %v1171 = vld [vmem:[%s1 + $0x14e8] sm:$0xff]
      %v1172 = vld [vmem:[%s1 + $0x14f0] sm:$0xff]
      %v1173 = vld [vmem:[%s1 + $0x14f8] sm:$0xff]
      %v1174 = vld [vmem:[%s1 + $0x1500] sm:$0xff]
      %v1175 = vld [vmem:[%s1 + $0x1508] sm:$0xff]
      %v1176 = vld [vmem:[%s1 + $0x1510] sm:$0xff]
      %v1177 = vld [vmem:[%s1 + $0x1518] sm:$0xff]
      %v1178 = vld [vmem:[%s1 + $0x1520] sm:$0xff]
      %v1179 = vld [vmem:[%s1 + $0x1528] sm:$0xff]
      %v1180 = vld [vmem:[%s1 + $0x1530] sm:$0xff]
      %v1181 = vld [vmem:[%s1 + $0x1538] sm:$0xff]
      %v1182 = vld [vmem:[%s1 + $0x1540] sm:$0xff]
      %v1183 = vld [vmem:[%s1 + $0x1548] sm:$0xff]
      %v1184 = vld [vmem:[%s1 + $0x1550] sm:$0xff]
      %v1185 = vld [vmem:[%s1 + $0x1558] sm:$0xff]
      %v1186 = vld [vmem:[%s1 + $0x1560] sm:$0xff]
      %v1187 = vld [vmem:[%s1 + $0x1568] sm:$0xff]
      %v1188 = vld [vmem:[%s2] sm:$0x7f]
      %v1190 = vlaneseq
      %v1191 = vshrl.u32 %v1190, 7
      %v1192 = vsub.s32 0, %v1191
      %v1193 = vrot.slane %v1188, %v1192
      %v1194 = vlaneseq
      %v1195 = vshrl.u32 %v1194, 7
      %v1196 = vsub.s32 1, %v1195
      %v1197 = vrot.slane %v1188, %v1196
      %v1198 = vlaneseq
      %v1199 = vshrl.u32 %v1198, 7
      %v1200 = vsub.s32 2, %v1199
      %v1201 = vrot.slane %v1188, %v1200
      %v1202 = vlaneseq
      %v1203 = vshrl.u32 %v1202, 7
      %v1204 = vsub.s32 3, %v1203
      %v1205 = vrot.slane %v1188, %v1204
      %v1206 = vlaneseq
      %v1207 = vshrl.u32 %v1206, 7
      %v1208 = vsub.s32 4, %v1207
      %v1209 = vrot.slane %v1188, %v1208
      %v1210 = vlaneseq
      %v1211 = vshrl.u32 %v1210, 7
      %v1212 = vsub.s32 5, %v1211
      %v1213 = vrot.slane %v1188, %v1212
      %v1214 = vlaneseq
      %v1215 = vshrl.u32 %v1214, 7
      %v1216 = vsub.s32 6, %v1215
      %v1217 = vrot.slane %v1188, %v1216
      %vm1225 = vcmask 130048
      %v1227 = vsel %vm1225, %v501, 0
      %1229 = vmatprep.subr.mxu0 %v608
      %1230 = vmatpush1.msra.mxu0 %v607
      %1231 = vmatprep.subr.mxu0 %v601
      %1232 = vmatpush1.msra.mxu0 %v600
      %1233 = vmatprep.subr.mxu0 %v594
      %1234 = vmatpush1.msra.mxu0 %v593
      %1235 = vmatprep.subr.mxu0 %v587
      %1236 = vmatpush1.msra.mxu0 %v586
      %1237 = vmatprep.subr.mxu0 %v580
      %1238 = vmatpush1.msra.mxu0 %v579
      %1239 = vmatprep.subr.mxu0 %v573
      %1240 = vmatpush1.msra.mxu0 %v572
      %1241 = vmatprep.subr.mxu0 %v566
      %1242 = vmatpush1.msra.mxu0 %v565
      %1243 = vmatprep.subr.mxu0 %v559
      %1244 = vmatpush1.msra.mxu0 %v558
      %1245 = vmatprep.subr.mxu0 %v552
      %1246 = vmatpush1.msra.mxu0 %v551
      %1247 = vmatprep.subr.mxu0 %v545
      %1248 = vmatpush1.msra.mxu0 %v544
      %1249 = vmatprep.subr.mxu0 %v538
      %1250 = vmatpush1.msra.mxu0 %v537
      %1251 = vmatprep.subr.mxu0 %v531
      %1252 = vmatpush1.msra.mxu0 %v530
      %1253 = vmatprep.subr.mxu0 %v524
      %1254 = vmatpush1.msra.mxu0 %v523
      %1255 = vmatprep.subr.mxu0 %v517
      %1256 = vmatpush1.msra.mxu0 %v516
      %1257 = vmatprep.subr.mxu0 %v510
      %1258 = vmatpush1.msra.mxu0 %v509
      %1259 = vmatprep.subr.mxu0 %v503
      %1260 = vmatpush1.msra.mxu0 %v502
      %1261 = vmatprep.subr.mxu0 %v720
      %1262 = vmatpush2.msra.mxu0 %v719
      %1263 = vmatprep.subr.mxu0 %v713
      %1264 = vmatpush2.msra.mxu0 %v712
      %1265 = vmatprep.subr.mxu0 %v706
      %1266 = vmatpush2.msra.mxu0 %v705
      %1267 = vmatprep.subr.mxu0 %v699
      %1268 = vmatpush2.msra.mxu0 %v698
      %1269 = vmatprep.subr.mxu0 %v692
      %1270 = vmatpush2.msra.mxu0 %v691
      %1271 = vmatprep.subr.mxu0 %v685
      %1272 = vmatpush2.msra.mxu0 %v684
      %1273 = vmatprep.subr.mxu0 %v678
      %1274 = vmatpush2.msra.mxu0 %v677
      %1275 = vmatprep.subr.mxu0 %v671
      %1276 = vmatpush2.msra.mxu0 %v670
      %1277 = vmatprep.subr.mxu0 %v664
      %1278 = vmatpush2.msra.mxu0 %v663
      %1279 = vmatprep.subr.mxu0 %v657
      %1280 = vmatpush2.msra.mxu0 %v656
      %1281 = vmatprep.subr.mxu0 %v650
      %1282 = vmatpush2.msra.mxu0 %v649
      %1283 = vmatprep.subr.mxu0 %v643
      %1284 = vmatpush2.msra.mxu0 %v642
      %1285 = vmatprep.subr.mxu0 %v636
      %1286 = vmatpush2.msra.mxu0 %v635
      %1287 = vmatprep.subr.mxu0 %v629
      %1288 = vmatpush2.msra.mxu0 %v628
      %1289 = vmatprep.subr.mxu0 %v622
      %1290 = vmatpush2.msra.mxu0 %v621
      %1291 = vmatprep.subr.mxu0 %v615
      %1292 = vmatpush2.msra.mxu0 %v614
      %1293 = vmatprep.mubr.f32.mxu0 %v496
      %1294 = vmatmul.mubr.f32.gmra.mxu0 %v495
      %v1295 = vpop.f32.mrf.mxu0
      %v1296 = vadd.f32 %v1193, %v1295
      %v1297 = vpop.f32.mrf.mxu0
      %v1298 = vadd.f32 %v1197, %v1297
      %1299 = vdwg.mxu0
      %1300 = vmatprep.subr.mxu0 %v832
      %1301 = vmatpush1.msra.mxu0 %v831
      %1302 = vmatprep.subr.mxu0 %v825
      %1303 = vmatpush1.msra.mxu0 %v824
      %1304 = vmatprep.subr.mxu0 %v818
      %1305 = vmatpush1.msra.mxu0 %v817
      %1306 = vmatprep.subr.mxu0 %v811
      %1307 = vmatpush1.msra.mxu0 %v810
      %1308 = vmatprep.subr.mxu0 %v804
      %1309 = vmatpush1.msra.mxu0 %v803
      %1310 = vmatprep.subr.mxu0 %v797
      %1311 = vmatpush1.msra.mxu0 %v796
      %1312 = vmatprep.subr.mxu0 %v790
      %1313 = vmatpush1.msra.mxu0 %v789
      %1314 = vmatprep.subr.mxu0 %v783
      %1315 = vmatpush1.msra.mxu0 %v782
      %1316 = vmatprep.subr.mxu0 %v776
      %1317 = vmatpush1.msra.mxu0 %v775
      %1318 = vmatprep.subr.mxu0 %v769
      %1319 = vmatpush1.msra.mxu0 %v768
      %1320 = vmatprep.subr.mxu0 %v762
      %1321 = vmatpush1.msra.mxu0 %v761
      %1322 = vmatprep.subr.mxu0 %v755
      %1323 = vmatpush1.msra.mxu0 %v754
      %1324 = vmatprep.subr.mxu0 %v748
      %1325 = vmatpush1.msra.mxu0 %v747
      %1326 = vmatprep.subr.mxu0 %v741
      %1327 = vmatpush1.msra.mxu0 %v740
      %1328 = vmatprep.subr.mxu0 %v734
      %1329 = vmatpush1.msra.mxu0 %v733
      %1330 = vmatprep.subr.mxu0 %v727
      %1331 = vmatpush1.msra.mxu0 %v726
      %1332 = vmatprep.subr.mxu0 %v944
      %1333 = vmatpush2.msra.mxu0 %v943
      %1334 = vmatprep.subr.mxu0 %v937
      %1335 = vmatpush2.msra.mxu0 %v936
      %1336 = vmatprep.subr.mxu0 %v930
      %1337 = vmatpush2.msra.mxu0 %v929
      %1338 = vmatprep.subr.mxu0 %v923
      %1339 = vmatpush2.msra.mxu0 %v922
      %1340 = vmatprep.subr.mxu0 %v916
      %1341 = vmatpush2.msra.mxu0 %v915
      %1342 = vmatprep.subr.mxu0 %v909
      %1343 = vmatpush2.msra.mxu0 %v908
      %1344 = vmatprep.subr.mxu0 %v902
      %1345 = vmatpush2.msra.mxu0 %v901
      %1346 = vmatprep.subr.mxu0 %v895
      %1347 = vmatpush2.msra.mxu0 %v894
      %1348 = vmatprep.subr.mxu0 %v888
      %1349 = vmatpush2.msra.mxu0 %v887
      %1350 = vmatprep.subr.mxu0 %v881
      %1351 = vmatpush2.msra.mxu0 %v880
      %1352 = vmatprep.subr.mxu0 %v874
      %1353 = vmatpush2.msra.mxu0 %v873
      %1354 = vmatprep.subr.mxu0 %v867
      %1355 = vmatpush2.msra.mxu0 %v866
      %1356 = vmatprep.subr.mxu0 %v860
      %1357 = vmatpush2.msra.mxu0 %v859
      %1358 = vmatprep.subr.mxu0 %v853
      %1359 = vmatpush2.msra.mxu0 %v852
      %1360 = vmatprep.subr.mxu0 %v846
      %1361 = vmatpush2.msra.mxu0 %v845
      %1362 = vmatprep.subr.mxu0 %v839
      %1363 = vmatpush2.msra.mxu0 %v838
      %1364 = vmatprep.mubr.f32.mxu0 %v498
      %1365 = vmatmul.mubr.f32.gmra.mxu0 %v497
      %v1366 = vpop.f32.mrf.mxu0
      %v1367 = vadd.f32 %v1296, %v1366
      %v1368 = vpop.f32.mrf.mxu0
      %v1369 = vadd.f32 %v1298, %v1368
      %1370 = vdwg.mxu0
      %1371 = vmatprep.subr.mxu0 %v1056
      %1372 = vmatpush1.msra.mxu0 %v1055
      %1373 = vmatprep.subr.mxu0 %v1049
      %1374 = vmatpush1.msra.mxu0 %v1048
      %1375 = vmatprep.subr.mxu0 %v1042
      %1376 = vmatpush1.msra.mxu0 %v1041
      %1377 = vmatprep.subr.mxu0 %v1035
      %1378 = vmatpush1.msra.mxu0 %v1034
      %1379 = vmatprep.subr.mxu0 %v1028
      %1380 = vmatpush1.msra.mxu0 %v1027
      %1381 = vmatprep.subr.mxu0 %v1021
      %1382 = vmatpush1.msra.mxu0 %v1020
      %1383 = vmatprep.subr.mxu0 %v1014
      %1384 = vmatpush1.msra.mxu0 %v1013
      %1385 = vmatprep.subr.mxu0 %v1007
      %1386 = vmatpush1.msra.mxu0 %v1006
      %1387 = vmatprep.subr.mxu0 %v1000
      %1388 = vmatpush1.msra.mxu0 %v999
      %1389 = vmatprep.subr.mxu0 %v993
      %1390 = vmatpush1.msra.mxu0 %v992
      %1391 = vmatprep.subr.mxu0 %v986
      %1392 = vmatpush1.msra.mxu0 %v985
      %1393 = vmatprep.subr.mxu0 %v979
      %1394 = vmatpush1.msra.mxu0 %v978
      %1395 = vmatprep.subr.mxu0 %v972
      %1396 = vmatpush1.msra.mxu0 %v971
      %1397 = vmatprep.subr.mxu0 %v965
      %1398 = vmatpush1.msra.mxu0 %v964
      %1399 = vmatprep.subr.mxu0 %v958
      %1400 = vmatpush1.msra.mxu0 %v957
      %1401 = vmatprep.subr.mxu0 %v951
      %1402 = vmatpush1.msra.mxu0 %v950
      %1403 = vmatprep.subr.mxu0 %v1168
      %1404 = vmatpush2.msra.mxu0 %v1167
      %1405 = vmatprep.subr.mxu0 %v1161
      %1406 = vmatpush2.msra.mxu0 %v1160
      %1407 = vmatprep.subr.mxu0 %v1154
      %1408 = vmatpush2.msra.mxu0 %v1153
      %1409 = vmatprep.subr.mxu0 %v1147
      %1410 = vmatpush2.msra.mxu0 %v1146
      %1411 = vmatprep.subr.mxu0 %v1140
      %1412 = vmatpush2.msra.mxu0 %v1139
      %1413 = vmatprep.subr.mxu0 %v1133
      %1414 = vmatpush2.msra.mxu0 %v1132
      %1415 = vmatprep.subr.mxu0 %v1126
      %1416 = vmatpush2.msra.mxu0 %v1125
      %1417 = vmatprep.subr.mxu0 %v1119
      %1418 = vmatpush2.msra.mxu0 %v1118
      %1419 = vmatprep.subr.mxu0 %v1112
      %1420 = vmatpush2.msra.mxu0 %v1111
      %1421 = vmatprep.subr.mxu0 %v1105
      %1422 = vmatpush2.msra.mxu0 %v1104
      %1423 = vmatprep.subr.mxu0 %v1098
      %1424 = vmatpush2.msra.mxu0 %v1097
      %1425 = vmatprep.subr.mxu0 %v1091
      %1426 = vmatpush2.msra.mxu0 %v1090
      %1427 = vmatprep.subr.mxu0 %v1084
      %1428 = vmatpush2.msra.mxu0 %v1083
      %1429 = vmatprep.subr.mxu0 %v1077
      %1430 = vmatpush2.msra.mxu0 %v1076
      %1431 = vmatprep.subr.mxu0 %v1070
      %1432 = vmatpush2.msra.mxu0 %v1069
      %1433 = vmatprep.subr.mxu0 %v1063
      %1434 = vmatpush2.msra.mxu0 %v1062
      %1435 = vmatprep.mubr.f32.mxu0 %v500
      %1436 = vmatmul.mubr.f32.gmra.mxu0 %v499
      %v1437 = vpop.f32.mrf.mxu0
      %v1438 = vadd.f32 %v1367, %v1437
      %v1439 = vpop.f32.mrf.mxu0
      %v1440 = vadd.f32 %v1369, %v1439
      %1441 = vdwg.mxu0
      %1442 = vmatprep.subr.mxu0 0.0
      %1443 = vmatpush1.msra.mxu0 0.0
      %1444 = vmatprep.subr.mxu0 0.0
      %1445 = vmatpush1.msra.mxu0 0.0
      %1446 = vmatprep.subr.mxu0 0.0
      %1447 = vmatpush1.msra.mxu0 0.0
      %1448 = vmatprep.subr.mxu0 0.0
      %1449 = vmatpush1.msra.mxu0 0.0
      %1450 = vmatprep.subr.mxu0 0.0
      %1451 = vmatpush1.msra.mxu0 0.0
      %1452 = vmatprep.subr.mxu0 0.0
      %1453 = vmatpush1.msra.mxu0 0.0
      %1454 = vmatprep.subr.mxu0 0.0
      %1455 = vmatpush1.msra.mxu0 0.0
      %1456 = vmatprep.subr.mxu0 0.0
      %1457 = vmatpush1.msra.mxu0 0.0
      %1458 = vmatprep.subr.mxu0 0.0
      %1459 = vmatpush1.msra.mxu0 0.0
      %1460 = vmatprep.subr.mxu0 0.0
      %1461 = vmatpush1.msra.mxu0 0.0
      %1462 = vmatprep.subr.mxu0 0.0
      %1463 = vmatpush1.msra.mxu0 0.0
      %1464 = vmatprep.subr.mxu0 0.0
      %1465 = vmatpush1.msra.mxu0 0.0
      %1466 = vmatprep.subr.mxu0 0.0
      %1467 = vmatpush1.msra.mxu0 0.0
      %1468 = vmatprep.subr.mxu0 0.0
      %1469 = vmatpush1.msra.mxu0 0.0
      %1470 = vmatprep.subr.mxu0 %v1182
      %1471 = vmatpush1.msra.mxu0 %v1181
      %1472 = vmatprep.subr.mxu0 %v1175
      %1473 = vmatpush1.msra.mxu0 %v1174
      %1474 = vmatprep.subr.mxu0 0.0
      %1475 = vmatpush2.msra.mxu0 0.0
      %1476 = vmatprep.subr.mxu0 0.0
      %1477 = vmatpush2.msra.mxu0 0.0
      %1478 = vmatprep.subr.mxu0 0.0
      %1479 = vmatpush2.msra.mxu0 0.0
      %1480 = vmatprep.subr.mxu0 0.0
      %1481 = vmatpush2.msra.mxu0 0.0
      %1482 = vmatprep.subr.mxu0 0.0
      %1483 = vmatpush2.msra.mxu0 0.0
      %1484 = vmatprep.subr.mxu0 0.0
      %1485 = vmatpush2.msra.mxu0 0.0
      %1486 = vmatprep.subr.mxu0 0.0
      %1487 = vmatpush2.msra.mxu0 0.0
      %1488 = vmatprep.subr.mxu0 0.0
      %1489 = vmatpush2.msra.mxu0 0.0
      %1490 = vmatprep.subr.mxu0 0.0
      %1491 = vmatpush2.msra.mxu0 0.0
      %1492 = vmatprep.subr.mxu0 0.0
      %1493 = vmatpush2.msra.mxu0 0.0
      %1494 = vmatprep.subr.mxu0 0.0
      %1495 = vmatpush2.msra.mxu0 0.0
      %1496 = vmatprep.subr.mxu0 0.0
      %1497 = vmatpush2.msra.mxu0 0.0
      %1498 = vmatprep.subr.mxu0 0.0
      %1499 = vmatpush2.msra.mxu0 0.0
      %1500 = vmatprep.subr.mxu0 0.0
      %1501 = vmatpush2.msra.mxu0 0.0
      %1502 = vmatprep.subr.mxu0 0.0
      %1503 = vmatpush2.msra.mxu0 0.0
      %1504 = vmatprep.subr.mxu0 0.0
      %1505 = vmatpush2.msra.mxu0 0.0
      %1506 = vmatprep.mubr.f32.mxu0 0.0
      %1507 = vmatmul.mubr.f32.gmra.mxu0 %v1227
      %v1508 = vpop.f32.mrf.mxu0
      %v1509 = vadd.f32 %v1438, %v1508
      %v1510 = vpop.f32.mrf.mxu0
      %v1511 = vadd.f32 %v1440, %v1510
      %1512 = vdwg.mxu0
      %1513 = vmatprep.subr.mxu0 %v610
      %1514 = vmatpush1.msra.mxu0 %v609
      %1515 = vmatprep.subr.mxu0 %v603
      %1516 = vmatpush1.msra.mxu0 %v602
      %1517 = vmatprep.subr.mxu0 %v596
      %1518 = vmatpush1.msra.mxu0 %v595
      %1519 = vmatprep.subr.mxu0 %v589
      %1520 = vmatpush1.msra.mxu0 %v588
      %1521 = vmatprep.subr.mxu0 %v582
      %1522 = vmatpush1.msra.mxu0 %v581
      %1523 = vmatprep.subr.mxu0 %v575
      %1524 = vmatpush1.msra.mxu0 %v574
      %1525 = vmatprep.subr.mxu0 %v568
      %1526 = vmatpush1.msra.mxu0 %v567
      %1527 = vmatprep.subr.mxu0 %v561
      %1528 = vmatpush1.msra.mxu0 %v560
      %1529 = vmatprep.subr.mxu0 %v554
      %1530 = vmatpush1.msra.mxu0 %v553
      %1531 = vmatprep.subr.mxu0 %v547
      %1532 = vmatpush1.msra.mxu0 %v546
      %1533 = vmatprep.subr.mxu0 %v540
      %1534 = vmatpush1.msra.mxu0 %v539
      %1535 = vmatprep.subr.mxu0 %v533
      %1536 = vmatpush1.msra.mxu0 %v532
      %1537 = vmatprep.subr.mxu0 %v526
      %1538 = vmatpush1.msra.mxu0 %v525
      %1539 = vmatprep.subr.mxu0 %v519
      %1540 = vmatpush1.msra.mxu0 %v518
      %1541 = vmatprep.subr.mxu0 %v512
      %1542 = vmatpush1.msra.mxu0 %v511
      %1543 = vmatprep.subr.mxu0 %v505
      %1544 = vmatpush1.msra.mxu0 %v504
      %1545 = vmatprep.subr.mxu0 %v722
      %1546 = vmatpush2.msra.mxu0 %v721
      %1547 = vmatprep.subr.mxu0 %v715
      %1548 = vmatpush2.msra.mxu0 %v714
      %1549 = vmatprep.subr.mxu0 %v708
      %1550 = vmatpush2.msra.mxu0 %v707
      %1551 = vmatprep.subr.mxu0 %v701
      %1552 = vmatpush2.msra.mxu0 %v700
      %1553 = vmatprep.subr.mxu0 %v694
      %1554 = vmatpush2.msra.mxu0 %v693
      %1555 = vmatprep.subr.mxu0 %v687
      %1556 = vmatpush2.msra.mxu0 %v686
      %1557 = vmatprep.subr.mxu0 %v680
      %1558 = vmatpush2.msra.mxu0 %v679
      %1559 = vmatprep.subr.mxu0 %v673
      %1560 = vmatpush2.msra.mxu0 %v672
      %1561 = vmatprep.subr.mxu0 %v666
      %1562 = vmatpush2.msra.mxu0 %v665
      %1563 = vmatprep.subr.mxu0 %v659
      %1564 = vmatpush2.msra.mxu0 %v658
      %1565 = vmatprep.subr.mxu0 %v652
      %1566 = vmatpush2.msra.mxu0 %v651
      %1567 = vmatprep.subr.mxu0 %v645
      %1568 = vmatpush2.msra.mxu0 %v644
      %1569 = vmatprep.subr.mxu0 %v638
      %1570 = vmatpush2.msra.mxu0 %v637
      %1571 = vmatprep.subr.mxu0 %v631
      %1572 = vmatpush2.msra.mxu0 %v630
      %1573 = vmatprep.subr.mxu0 %v624
      %1574 = vmatpush2.msra.mxu0 %v623
      %1575 = vmatprep.subr.mxu0 %v617
      %1576 = vmatpush2.msra.mxu0 %v616
      %1577 = vmatprep.mubr.f32.mxu0 %v496
      %1578 = vmatmul.mubr.f32.gmra.mxu0 %v495
      %v1579 = vpop.f32.mrf.mxu0
      %v1580 = vadd.f32 %v1201, %v1579
      %v1581 = vpop.f32.mrf.mxu0
      %v1582 = vadd.f32 %v1205, %v1581
      %1583 = vdwg.mxu0
      %1584 = vmatprep.subr.mxu0 %v834
      %1585 = vmatpush1.msra.mxu0 %v833
      %1586 = vmatprep.subr.mxu0 %v827
      %1587 = vmatpush1.msra.mxu0 %v826
      %1588 = vmatprep.subr.mxu0 %v820
      %1589 = vmatpush1.msra.mxu0 %v819
      %1590 = vmatprep.subr.mxu0 %v813
      %1591 = vmatpush1.msra.mxu0 %v812
      %1592 = vmatprep.subr.mxu0 %v806
      %1593 = vmatpush1.msra.mxu0 %v805
      %1594 = vmatprep.subr.mxu0 %v799
      %1595 = vmatpush1.msra.mxu0 %v798
      %1596 = vmatprep.subr.mxu0 %v792
      %1597 = vmatpush1.msra.mxu0 %v791
      %1598 = vmatprep.subr.mxu0 %v785
      %1599 = vmatpush1.msra.mxu0 %v784
      %1600 = vmatprep.subr.mxu0 %v778
      %1601 = vmatpush1.msra.mxu0 %v777
      %1602 = vmatprep.subr.mxu0 %v771
      %1603 = vmatpush1.msra.mxu0 %v770
      %1604 = vmatprep.subr.mxu0 %v764
      %1605 = vmatpush1.msra.mxu0 %v763
      %1606 = vmatprep.subr.mxu0 %v757
      %1607 = vmatpush1.msra.mxu0 %v756
      %1608 = vmatprep.subr.mxu0 %v750
      %1609 = vmatpush1.msra.mxu0 %v749
      %1610 = vmatprep.subr.mxu0 %v743
      %1611 = vmatpush1.msra.mxu0 %v742
      %1612 = vmatprep.subr.mxu0 %v736
      %1613 = vmatpush1.msra.mxu0 %v735
      %1614 = vmatprep.subr.mxu0 %v729
      %1615 = vmatpush1.msra.mxu0 %v728
      %1616 = vmatprep.subr.mxu0 %v946
      %1617 = vmatpush2.msra.mxu0 %v945
      %1618 = vmatprep.subr.mxu0 %v939
      %1619 = vmatpush2.msra.mxu0 %v938
      %1620 = vmatprep.subr.mxu0 %v932
      %1621 = vmatpush2.msra.mxu0 %v931
      %1622 = vmatprep.subr.mxu0 %v925
      %1623 = vmatpush2.msra.mxu0 %v924
      %1624 = vmatprep.subr.mxu0 %v918
      %1625 = vmatpush2.msra.mxu0 %v917
      %1626 = vmatprep.subr.mxu0 %v911
      %1627 = vmatpush2.msra.mxu0 %v910
      %1628 = vmatprep.subr.mxu0 %v904
      %1629 = vmatpush2.msra.mxu0 %v903
      %1630 = vmatprep.subr.mxu0 %v897
      %1631 = vmatpush2.msra.mxu0 %v896
      %1632 = vmatprep.subr.mxu0 %v890
      %1633 = vmatpush2.msra.mxu0 %v889
      %1634 = vmatprep.subr.mxu0 %v883
      %1635 = vmatpush2.msra.mxu0 %v882
      %1636 = vmatprep.subr.mxu0 %v876
      %1637 = vmatpush2.msra.mxu0 %v875
      %1638 = vmatprep.subr.mxu0 %v869
      %1639 = vmatpush2.msra.mxu0 %v868
      %1640 = vmatprep.subr.mxu0 %v862
      %1641 = vmatpush2.msra.mxu0 %v861
      %1642 = vmatprep.subr.mxu0 %v855
      %1643 = vmatpush2.msra.mxu0 %v854
      %1644 = vmatprep.subr.mxu0 %v848
      %1645 = vmatpush2.msra.mxu0 %v847
      %1646 = vmatprep.subr.mxu0 %v841
      %1647 = vmatpush2.msra.mxu0 %v840
      %1648 = vmatprep.mubr.f32.mxu0 %v498
      %1649 = vmatmul.mubr.f32.gmra.mxu0 %v497
      %v1650 = vpop.f32.mrf.mxu0
      %v1651 = vadd.f32 %v1580, %v1650
      %v1652 = vpop.f32.mrf.mxu0
      %v1653 = vadd.f32 %v1582, %v1652
      %1654 = vdwg.mxu0
      %1655 = vmatprep.subr.mxu0 %v1058
      %1656 = vmatpush1.msra.mxu0 %v1057
      %1657 = vmatprep.subr.mxu0 %v1051
      %1658 = vmatpush1.msra.mxu0 %v1050
      %1659 = vmatprep.subr.mxu0 %v1044
      %1660 = vmatpush1.msra.mxu0 %v1043
      %1661 = vmatprep.subr.mxu0 %v1037
      %1662 = vmatpush1.msra.mxu0 %v1036
      %1663 = vmatprep.subr.mxu0 %v1030
      %1664 = vmatpush1.msra.mxu0 %v1029
      %1665 = vmatprep.subr.mxu0 %v1023
      %1666 = vmatpush1.msra.mxu0 %v1022
      %1667 = vmatprep.subr.mxu0 %v1016
      %1668 = vmatpush1.msra.mxu0 %v1015
      %1669 = vmatprep.subr.mxu0 %v1009
      %1670 = vmatpush1.msra.mxu0 %v1008
      %1671 = vmatprep.subr.mxu0 %v1002
      %1672 = vmatpush1.msra.mxu0 %v1001
      %1673 = vmatprep.subr.mxu0 %v995
      %1674 = vmatpush1.msra.mxu0 %v994
      %1675 = vmatprep.subr.mxu0 %v988
      %1676 = vmatpush1.msra.mxu0 %v987
      %1677 = vmatprep.subr.mxu0 %v981
      %1678 = vmatpush1.msra.mxu0 %v980
      %1679 = vmatprep.subr.mxu0 %v974
      %1680 = vmatpush1.msra.mxu0 %v973
      %1681 = vmatprep.subr.mxu0 %v967
      %1682 = vmatpush1.msra.mxu0 %v966
      %1683 = vmatprep.subr.mxu0 %v960
      %1684 = vmatpush1.msra.mxu0 %v959
      %1685 = vmatprep.subr.mxu0 %v953
      %1686 = vmatpush1.msra.mxu0 %v952
      %1687 = vmatprep.subr.mxu0 %v1170
      %1688 = vmatpush2.msra.mxu0 %v1169
      %1689 = vmatprep.subr.mxu0 %v1163
      %1690 = vmatpush2.msra.mxu0 %v1162
      %1691 = vmatprep.subr.mxu0 %v1156
      %1692 = vmatpush2.msra.mxu0 %v1155
      %1693 = vmatprep.subr.mxu0 %v1149
      %1694 = vmatpush2.msra.mxu0 %v1148
      %1695 = vmatprep.subr.mxu0 %v1142
      %1696 = vmatpush2.msra.mxu0 %v1141
      %1697 = vmatprep.subr.mxu0 %v1135
      %1698 = vmatpush2.msra.mxu0 %v1134
      %1699 = vmatprep.subr.mxu0 %v1128
      %1700 = vmatpush2.msra.mxu0 %v1127
      %1701 = vmatprep.subr.mxu0 %v1121
      %1702 = vmatpush2.msra.mxu0 %v1120
      %1703 = vmatprep.subr.mxu0 %v1114
      %1704 = vmatpush2.msra.mxu0 %v1113
      %1705 = vmatprep.subr.mxu0 %v1107
      %1706 = vmatpush2.msra.mxu0 %v1106
      %1707 = vmatprep.subr.mxu0 %v1100
      %1708 = vmatpush2.msra.mxu0 %v1099
      %1709 = vmatprep.subr.mxu0 %v1093
      %1710 = vmatpush2.msra.mxu0 %v1092
      %1711 = vmatprep.subr.mxu0 %v1086
      %1712 = vmatpush2.msra.mxu0 %v1085
      %1713 = vmatprep.subr.mxu0 %v1079
      %1714 = vmatpush2.msra.mxu0 %v1078
      %1715 = vmatprep.subr.mxu0 %v1072
      %1716 = vmatpush2.msra.mxu0 %v1071
      %1717 = vmatprep.subr.mxu0 %v1065
      %1718 = vmatpush2.msra.mxu0 %v1064
      %1719 = vmatprep.mubr.f32.mxu0 %v500
      %1720 = vmatmul.mubr.f32.gmra.mxu0 %v499
      %v1721 = vpop.f32.mrf.mxu0
      %v1722 = vadd.f32 %v1651, %v1721
      %v1723 = vpop.f32.mrf.mxu0
      %v1724 = vadd.f32 %v1653, %v1723
      %1725 = vdwg.mxu0
      %1726 = vmatprep.subr.mxu0 0.0
      %1727 = vmatpush1.msra.mxu0 0.0
      %1728 = vmatprep.subr.mxu0 0.0
      %1729 = vmatpush1.msra.mxu0 0.0
      %1730 = vmatprep.subr.mxu0 0.0
      %1731 = vmatpush1.msra.mxu0 0.0
      %1732 = vmatprep.subr.mxu0 0.0
      %1733 = vmatpush1.msra.mxu0 0.0
      %1734 = vmatprep.subr.mxu0 0.0
      %1735 = vmatpush1.msra.mxu0 0.0
      %1736 = vmatprep.subr.mxu0 0.0
      %1737 = vmatpush1.msra.mxu0 0.0
      %1738 = vmatprep.subr.mxu0 0.0
      %1739 = vmatpush1.msra.mxu0 0.0
      %1740 = vmatprep.subr.mxu0 0.0
      %1741 = vmatpush1.msra.mxu0 0.0
      %1742 = vmatprep.subr.mxu0 0.0
      %1743 = vmatpush1.msra.mxu0 0.0
      %1744 = vmatprep.subr.mxu0 0.0
      %1745 = vmatpush1.msra.mxu0 0.0
      %1746 = vmatprep.subr.mxu0 0.0
      %1747 = vmatpush1.msra.mxu0 0.0
      %1748 = vmatprep.subr.mxu0 0.0
      %1749 = vmatpush1.msra.mxu0 0.0
      %1750 = vmatprep.subr.mxu0 0.0
      %1751 = vmatpush1.msra.mxu0 0.0
      %1752 = vmatprep.subr.mxu0 0.0
      %1753 = vmatpush1.msra.mxu0 0.0
      %1754 = vmatprep.subr.mxu0 %v1184
      %1755 = vmatpush1.msra.mxu0 %v1183
      %1756 = vmatprep.subr.mxu0 %v1177
      %1757 = vmatpush1.msra.mxu0 %v1176
      %1758 = vmatprep.subr.mxu0 0.0
      %1759 = vmatpush2.msra.mxu0 0.0
      %1760 = vmatprep.subr.mxu0 0.0
      %1761 = vmatpush2.msra.mxu0 0.0
      %1762 = vmatprep.subr.mxu0 0.0
      %1763 = vmatpush2.msra.mxu0 0.0
      %1764 = vmatprep.subr.mxu0 0.0
      %1765 = vmatpush2.msra.mxu0 0.0
      %1766 = vmatprep.subr.mxu0 0.0
      %1767 = vmatpush2.msra.mxu0 0.0
      %1768 = vmatprep.subr.mxu0 0.0
      %1769 = vmatpush2.msra.mxu0 0.0
      %1770 = vmatprep.subr.mxu0 0.0
      %1771 = vmatpush2.msra.mxu0 0.0
      %1772 = vmatprep.subr.mxu0 0.0
      %1773 = vmatpush2.msra.mxu0 0.0
      %1774 = vmatprep.subr.mxu0 0.0
      %1775 = vmatpush2.msra.mxu0 0.0
      %1776 = vmatprep.subr.mxu0 0.0
      %1777 = vmatpush2.msra.mxu0 0.0
      %1778 = vmatprep.subr.mxu0 0.0
      %1779 = vmatpush2.msra.mxu0 0.0
      %1780 = vmatprep.subr.mxu0 0.0
      %1781 = vmatpush2.msra.mxu0 0.0
      %1782 = vmatprep.subr.mxu0 0.0
      %1783 = vmatpush2.msra.mxu0 0.0
      %1784 = vmatprep.subr.mxu0 0.0
      %1785 = vmatpush2.msra.mxu0 0.0
      %1786 = vmatprep.subr.mxu0 0.0
      %1787 = vmatpush2.msra.mxu0 0.0
      %1788 = vmatprep.subr.mxu0 0.0
      %1789 = vmatpush2.msra.mxu0 0.0
      %1790 = vmatprep.mubr.f32.mxu0 0.0
      %1791 = vmatmul.mubr.f32.gmra.mxu0 %v1227
      %v1792 = vpop.f32.mrf.mxu0
      %v1793 = vadd.f32 %v1722, %v1792
      %v1794 = vpop.f32.mrf.mxu0
      %v1795 = vadd.f32 %v1724, %v1794
      %1796 = vdwg.mxu0
      %1797 = vmatprep.subr.mxu0 %v612
      %1798 = vmatpush1.msra.mxu0 %v611
      %1799 = vmatprep.subr.mxu0 %v605
      %1800 = vmatpush1.msra.mxu0 %v604
      %1801 = vmatprep.subr.mxu0 %v598
      %1802 = vmatpush1.msra.mxu0 %v597
      %1803 = vmatprep.subr.mxu0 %v591
      %1804 = vmatpush1.msra.mxu0 %v590
      %1805 = vmatprep.subr.mxu0 %v584
      %1806 = vmatpush1.msra.mxu0 %v583
      %1807 = vmatprep.subr.mxu0 %v577
      %1808 = vmatpush1.msra.mxu0 %v576
      %1809 = vmatprep.subr.mxu0 %v570
      %1810 = vmatpush1.msra.mxu0 %v569
      %1811 = vmatprep.subr.mxu0 %v563
      %1812 = vmatpush1.msra.mxu0 %v562
      %1813 = vmatprep.subr.mxu0 %v556
      %1814 = vmatpush1.msra.mxu0 %v555
      %1815 = vmatprep.subr.mxu0 %v549
      %1816 = vmatpush1.msra.mxu0 %v548
      %1817 = vmatprep.subr.mxu0 %v542
      %1818 = vmatpush1.msra.mxu0 %v541
      %1819 = vmatprep.subr.mxu0 %v535
      %1820 = vmatpush1.msra.mxu0 %v534
      %1821 = vmatprep.subr.mxu0 %v528
      %1822 = vmatpush1.msra.mxu0 %v527
      %1823 = vmatprep.subr.mxu0 %v521
      %1824 = vmatpush1.msra.mxu0 %v520
      %1825 = vmatprep.subr.mxu0 %v514
      %1826 = vmatpush1.msra.mxu0 %v513
      %1827 = vmatprep.subr.mxu0 %v507
      %1828 = vmatpush1.msra.mxu0 %v506
      %1829 = vmatprep.subr.mxu0 %v724
      %1830 = vmatpush2.msra.mxu0 %v723
      %1831 = vmatprep.subr.mxu0 %v717
      %1832 = vmatpush2.msra.mxu0 %v716
      %1833 = vmatprep.subr.mxu0 %v710
      %1834 = vmatpush2.msra.mxu0 %v709
      %1835 = vmatprep.subr.mxu0 %v703
      %1836 = vmatpush2.msra.mxu0 %v702
      %1837 = vmatprep.subr.mxu0 %v696
      %1838 = vmatpush2.msra.mxu0 %v695
      %1839 = vmatprep.subr.mxu0 %v689
      %1840 = vmatpush2.msra.mxu0 %v688
      %1841 = vmatprep.subr.mxu0 %v682
      %1842 = vmatpush2.msra.mxu0 %v681
      %1843 = vmatprep.subr.mxu0 %v675
      %1844 = vmatpush2.msra.mxu0 %v674
      %1845 = vmatprep.subr.mxu0 %v668
      %1846 = vmatpush2.msra.mxu0 %v667
      %1847 = vmatprep.subr.mxu0 %v661
      %1848 = vmatpush2.msra.mxu0 %v660
      %1849 = vmatprep.subr.mxu0 %v654
      %1850 = vmatpush2.msra.mxu0 %v653
      %1851 = vmatprep.subr.mxu0 %v647
      %1852 = vmatpush2.msra.mxu0 %v646
      %1853 = vmatprep.subr.mxu0 %v640
      %1854 = vmatpush2.msra.mxu0 %v639
      %1855 = vmatprep.subr.mxu0 %v633
      %1856 = vmatpush2.msra.mxu0 %v632
      %1857 = vmatprep.subr.mxu0 %v626
      %1858 = vmatpush2.msra.mxu0 %v625
      %1859 = vmatprep.subr.mxu0 %v619
      %1860 = vmatpush2.msra.mxu0 %v618
      %1861 = vmatprep.mubr.f32.mxu0 %v496
      %1862 = vmatmul.mubr.f32.gmra.mxu0 %v495
      %v1863 = vpop.f32.mrf.mxu0
      %v1864 = vadd.f32 %v1209, %v1863
      %v1865 = vpop.f32.mrf.mxu0
      %v1866 = vadd.f32 %v1213, %v1865
      %1867 = vdwg.mxu0
      %1868 = vmatprep.subr.mxu0 %v836
      %1869 = vmatpush1.msra.mxu0 %v835
      %1870 = vmatprep.subr.mxu0 %v829
      %1871 = vmatpush1.msra.mxu0 %v828
      %1872 = vmatprep.subr.mxu0 %v822
      %1873 = vmatpush1.msra.mxu0 %v821
      %1874 = vmatprep.subr.mxu0 %v815
      %1875 = vmatpush1.msra.mxu0 %v814
      %1876 = vmatprep.subr.mxu0 %v808
      %1877 = vmatpush1.msra.mxu0 %v807
      %1878 = vmatprep.subr.mxu0 %v801
      %1879 = vmatpush1.msra.mxu0 %v800
      %1880 = vmatprep.subr.mxu0 %v794
      %1881 = vmatpush1.msra.mxu0 %v793
      %1882 = vmatprep.subr.mxu0 %v787
      %1883 = vmatpush1.msra.mxu0 %v786
      %1884 = vmatprep.subr.mxu0 %v780
      %1885 = vmatpush1.msra.mxu0 %v779
      %1886 = vmatprep.subr.mxu0 %v773
      %1887 = vmatpush1.msra.mxu0 %v772
      %1888 = vmatprep.subr.mxu0 %v766
      %1889 = vmatpush1.msra.mxu0 %v765
      %1890 = vmatprep.subr.mxu0 %v759
      %1891 = vmatpush1.msra.mxu0 %v758
      %1892 = vmatprep.subr.mxu0 %v752
      %1893 = vmatpush1.msra.mxu0 %v751
      %1894 = vmatprep.subr.mxu0 %v745
      %1895 = vmatpush1.msra.mxu0 %v744
      %1896 = vmatprep.subr.mxu0 %v738
      %1897 = vmatpush1.msra.mxu0 %v737
      %1898 = vmatprep.subr.mxu0 %v731
      %1899 = vmatpush1.msra.mxu0 %v730
      %1900 = vmatprep.subr.mxu0 %v948
      %1901 = vmatpush2.msra.mxu0 %v947
      %1902 = vmatprep.subr.mxu0 %v941
      %1903 = vmatpush2.msra.mxu0 %v940
      %1904 = vmatprep.subr.mxu0 %v934
      %1905 = vmatpush2.msra.mxu0 %v933
      %1906 = vmatprep.subr.mxu0 %v927
      %1907 = vmatpush2.msra.mxu0 %v926
      %1908 = vmatprep.subr.mxu0 %v920
      %1909 = vmatpush2.msra.mxu0 %v919
      %1910 = vmatprep.subr.mxu0 %v913
      %1911 = vmatpush2.msra.mxu0 %v912
      %1912 = vmatprep.subr.mxu0 %v906
      %1913 = vmatpush2.msra.mxu0 %v905
      %1914 = vmatprep.subr.mxu0 %v899
      %1915 = vmatpush2.msra.mxu0 %v898
      %1916 = vmatprep.subr.mxu0 %v892
      %1917 = vmatpush2.msra.mxu0 %v891
      %1918 = vmatprep.subr.mxu0 %v885
      %1919 = vmatpush2.msra.mxu0 %v884
      %1920 = vmatprep.subr.mxu0 %v878
      %1921 = vmatpush2.msra.mxu0 %v877
      %1922 = vmatprep.subr.mxu0 %v871
      %1923 = vmatpush2.msra.mxu0 %v870
      %1924 = vmatprep.subr.mxu0 %v864
      %1925 = vmatpush2.msra.mxu0 %v863
      %1926 = vmatprep.subr.mxu0 %v857
      %1927 = vmatpush2.msra.mxu0 %v856
      %1928 = vmatprep.subr.mxu0 %v850
      %1929 = vmatpush2.msra.mxu0 %v849
      %1930 = vmatprep.subr.mxu0 %v843
      %1931 = vmatpush2.msra.mxu0 %v842
      %1932 = vmatprep.mubr.f32.mxu0 %v498
      %1933 = vmatmul.mubr.f32.gmra.mxu0 %v497
      %v1934 = vpop.f32.mrf.mxu0
      %v1935 = vadd.f32 %v1864, %v1934
      %v1936 = vpop.f32.mrf.mxu0
      %v1937 = vadd.f32 %v1866, %v1936
      %1938 = vdwg.mxu0
      %1939 = vmatprep.subr.mxu0 %v1060
      %1940 = vmatpush1.msra.mxu0 %v1059
      %1941 = vmatprep.subr.mxu0 %v1053
      %1942 = vmatpush1.msra.mxu0 %v1052
      %1943 = vmatprep.subr.mxu0 %v1046
      %1944 = vmatpush1.msra.mxu0 %v1045
      %1945 = vmatprep.subr.mxu0 %v1039
      %1946 = vmatpush1.msra.mxu0 %v1038
      %1947 = vmatprep.subr.mxu0 %v1032
      %1948 = vmatpush1.msra.mxu0 %v1031
      %1949 = vmatprep.subr.mxu0 %v1025
      %1950 = vmatpush1.msra.mxu0 %v1024
      %1951 = vmatprep.subr.mxu0 %v1018
      %1952 = vmatpush1.msra.mxu0 %v1017
      %1953 = vmatprep.subr.mxu0 %v1011
      %1954 = vmatpush1.msra.mxu0 %v1010
      %1955 = vmatprep.subr.mxu0 %v1004
      %1956 = vmatpush1.msra.mxu0 %v1003
      %1957 = vmatprep.subr.mxu0 %v997
      %1958 = vmatpush1.msra.mxu0 %v996
      %1959 = vmatprep.subr.mxu0 %v990
      %1960 = vmatpush1.msra.mxu0 %v989
      %1961 = vmatprep.subr.mxu0 %v983
      %1962 = vmatpush1.msra.mxu0 %v982
      %1963 = vmatprep.subr.mxu0 %v976
      %1964 = vmatpush1.msra.mxu0 %v975
      %1965 = vmatprep.subr.mxu0 %v969
      %1966 = vmatpush1.msra.mxu0 %v968
      %1967 = vmatprep.subr.mxu0 %v962
      %1968 = vmatpush1.msra.mxu0 %v961
      %1969 = vmatprep.subr.mxu0 %v955
      %1970 = vmatpush1.msra.mxu0 %v954
      %1971 = vmatprep.subr.mxu0 %v1172
      %1972 = vmatpush2.msra.mxu0 %v1171
      %1973 = vmatprep.subr.mxu0 %v1165
      %1974 = vmatpush2.msra.mxu0 %v1164
      %1975 = vmatprep.subr.mxu0 %v1158
      %1976 = vmatpush2.msra.mxu0 %v1157
      %1977 = vmatprep.subr.mxu0 %v1151
      %1978 = vmatpush2.msra.mxu0 %v1150
      %1979 = vmatprep.subr.mxu0 %v1144
      %1980 = vmatpush2.msra.mxu0 %v1143
      %1981 = vmatprep.subr.mxu0 %v1137
      %1982 = vmatpush2.msra.mxu0 %v1136
      %1983 = vmatprep.subr.mxu0 %v1130
      %1984 = vmatpush2.msra.mxu0 %v1129
      %1985 = vmatprep.subr.mxu0 %v1123
      %1986 = vmatpush2.msra.mxu0 %v1122
      %1987 = vmatprep.subr.mxu0 %v1116
      %1988 = vmatpush2.msra.mxu0 %v1115
      %1989 = vmatprep.subr.mxu0 %v1109
      %1990 = vmatpush2.msra.mxu0 %v1108
      %1991 = vmatprep.subr.mxu0 %v1102
      %1992 = vmatpush2.msra.mxu0 %v1101
      %1993 = vmatprep.subr.mxu0 %v1095
      %1994 = vmatpush2.msra.mxu0 %v1094
      %1995 = vmatprep.subr.mxu0 %v1088
      %1996 = vmatpush2.msra.mxu0 %v1087
      %1997 = vmatprep.subr.mxu0 %v1081
      %1998 = vmatpush2.msra.mxu0 %v1080
      %1999 = vmatprep.subr.mxu0 %v1074
      %2000 = vmatpush2.msra.mxu0 %v1073
      %2001 = vmatprep.subr.mxu0 %v1067
      %2002 = vmatpush2.msra.mxu0 %v1066
      %2003 = vmatprep.mubr.f32.mxu0 %v500
      %2004 = vmatmul.mubr.f32.gmra.mxu0 %v499
      %v2005 = vpop.f32.mrf.mxu0
      %v2006 = vadd.f32 %v1935, %v2005
      %v2007 = vpop.f32.mrf.mxu0
      %v2008 = vadd.f32 %v1937, %v2007
      %2009 = vdwg.mxu0
      %2010 = vmatprep.subr.mxu0 0.0
      %2011 = vmatpush1.msra.mxu0 0.0
      %2012 = vmatprep.subr.mxu0 0.0
      %2013 = vmatpush1.msra.mxu0 0.0
      %2014 = vmatprep.subr.mxu0 0.0
      %2015 = vmatpush1.msra.mxu0 0.0
      %2016 = vmatprep.subr.mxu0 0.0
      %2017 = vmatpush1.msra.mxu0 0.0
      %2018 = vmatprep.subr.mxu0 0.0
      %2019 = vmatpush1.msra.mxu0 0.0
      %2020 = vmatprep.subr.mxu0 0.0
      %2021 = vmatpush1.msra.mxu0 0.0
      %2022 = vmatprep.subr.mxu0 0.0
      %2023 = vmatpush1.msra.mxu0 0.0
      %2024 = vmatprep.subr.mxu0 0.0
      %2025 = vmatpush1.msra.mxu0 0.0
      %2026 = vmatprep.subr.mxu0 0.0
      %2027 = vmatpush1.msra.mxu0 0.0
      %2028 = vmatprep.subr.mxu0 0.0
      %2029 = vmatpush1.msra.mxu0 0.0
      %2030 = vmatprep.subr.mxu0 0.0
      %2031 = vmatpush1.msra.mxu0 0.0
      %2032 = vmatprep.subr.mxu0 0.0
      %2033 = vmatpush1.msra.mxu0 0.0
      %2034 = vmatprep.subr.mxu0 0.0
      %2035 = vmatpush1.msra.mxu0 0.0
      %2036 = vmatprep.subr.mxu0 0.0
      %2037 = vmatpush1.msra.mxu0 0.0
      %2038 = vmatprep.subr.mxu0 %v1186
      %2039 = vmatpush1.msra.mxu0 %v1185
      %2040 = vmatprep.subr.mxu0 %v1179
      %2041 = vmatpush1.msra.mxu0 %v1178
      %2042 = vmatprep.subr.mxu0 0.0
      %2043 = vmatpush2.msra.mxu0 0.0
      %2044 = vmatprep.subr.mxu0 0.0
      %2045 = vmatpush2.msra.mxu0 0.0
      %2046 = vmatprep.subr.mxu0 0.0
      %2047 = vmatpush2.msra.mxu0 0.0
      %2048 = vmatprep.subr.mxu0 0.0
      %2049 = vmatpush2.msra.mxu0 0.0
      %2050 = vmatprep.subr.mxu0 0.0
      %2051 = vmatpush2.msra.mxu0 0.0
      %2052 = vmatprep.subr.mxu0 0.0
      %2053 = vmatpush2.msra.mxu0 0.0
      %2054 = vmatprep.subr.mxu0 0.0
      %2055 = vmatpush2.msra.mxu0 0.0
      %2056 = vmatprep.subr.mxu0 0.0
      %2057 = vmatpush2.msra.mxu0 0.0
      %2058 = vmatprep.subr.mxu0 0.0
      %2059 = vmatpush2.msra.mxu0 0.0
      %2060 = vmatprep.subr.mxu0 0.0
      %2061 = vmatpush2.msra.mxu0 0.0
      %2062 = vmatprep.subr.mxu0 0.0
      %2063 = vmatpush2.msra.mxu0 0.0
      %2064 = vmatprep.subr.mxu0 0.0
      %2065 = vmatpush2.msra.mxu0 0.0
      %2066 = vmatprep.subr.mxu0 0.0
      %2067 = vmatpush2.msra.mxu0 0.0
      %2068 = vmatprep.subr.mxu0 0.0
      %2069 = vmatpush2.msra.mxu0 0.0
      %2070 = vmatprep.subr.mxu0 0.0
      %2071 = vmatpush2.msra.mxu0 0.0
      %2072 = vmatprep.subr.mxu0 0.0
      %2073 = vmatpush2.msra.mxu0 0.0
      %2074 = vmatprep.mubr.f32.mxu0 0.0
      %2075 = vmatmul.mubr.f32.gmra.mxu0 %v1227
      %v2076 = vpop.f32.mrf.mxu0
      %v2077 = vadd.f32 %v2006, %v2076
      %v2078 = vpop.f32.mrf.mxu0
      %v2079 = vadd.f32 %v2008, %v2078
      %2080 = vdwg.mxu0
      %2081 = vmatprep.subr.mxu0 0.0
      %2082 = vmatpush1.msra.mxu0 %v613
      %2083 = vmatprep.subr.mxu0 0.0
      %2084 = vmatpush1.msra.mxu0 %v606
      %2085 = vmatprep.subr.mxu0 0.0
      %2086 = vmatpush1.msra.mxu0 %v599
      %2087 = vmatprep.subr.mxu0 0.0
      %2088 = vmatpush1.msra.mxu0 %v592
      %2089 = vmatprep.subr.mxu0 0.0
      %2090 = vmatpush1.msra.mxu0 %v585
      %2091 = vmatprep.subr.mxu0 0.0
      %2092 = vmatpush1.msra.mxu0 %v578
      %2093 = vmatprep.subr.mxu0 0.0
      %2094 = vmatpush1.msra.mxu0 %v571
      %2095 = vmatprep.subr.mxu0 0.0
      %2096 = vmatpush1.msra.mxu0 %v564
      %2097 = vmatprep.subr.mxu0 0.0
      %2098 = vmatpush1.msra.mxu0 %v557
      %2099 = vmatprep.subr.mxu0 0.0
      %2100 = vmatpush1.msra.mxu0 %v550
      %2101 = vmatprep.subr.mxu0 0.0
      %2102 = vmatpush1.msra.mxu0 %v543
      %2103 = vmatprep.subr.mxu0 0.0
      %2104 = vmatpush1.msra.mxu0 %v536
      %2105 = vmatprep.subr.mxu0 0.0
      %2106 = vmatpush1.msra.mxu0 %v529
      %2107 = vmatprep.subr.mxu0 0.0
      %2108 = vmatpush1.msra.mxu0 %v522
      %2109 = vmatprep.subr.mxu0 0.0
      %2110 = vmatpush1.msra.mxu0 %v515
      %2111 = vmatprep.subr.mxu0 0.0
      %2112 = vmatpush1.msra.mxu0 %v508
      %2113 = vmatprep.subr.mxu0 0.0
      %2114 = vmatpush2.msra.mxu0 %v725
      %2115 = vmatprep.subr.mxu0 0.0
      %2116 = vmatpush2.msra.mxu0 %v718
      %2117 = vmatprep.subr.mxu0 0.0
      %2118 = vmatpush2.msra.mxu0 %v711
      %2119 = vmatprep.subr.mxu0 0.0
      %2120 = vmatpush2.msra.mxu0 %v704
      %2121 = vmatprep.subr.mxu0 0.0
      %2122 = vmatpush2.msra.mxu0 %v697
      %2123 = vmatprep.subr.mxu0 0.0
      %2124 = vmatpush2.msra.mxu0 %v690
      %2125 = vmatprep.subr.mxu0 0.0
      %2126 = vmatpush2.msra.mxu0 %v683
      %2127 = vmatprep.subr.mxu0 0.0
      %2128 = vmatpush2.msra.mxu0 %v676
      %2129 = vmatprep.subr.mxu0 0.0
      %2130 = vmatpush2.msra.mxu0 %v669
      %2131 = vmatprep.subr.mxu0 0.0
      %2132 = vmatpush2.msra.mxu0 %v662
      %2133 = vmatprep.subr.mxu0 0.0
      %2134 = vmatpush2.msra.mxu0 %v655
      %2135 = vmatprep.subr.mxu0 0.0
      %2136 = vmatpush2.msra.mxu0 %v648
      %2137 = vmatprep.subr.mxu0 0.0
      %2138 = vmatpush2.msra.mxu0 %v641
      %2139 = vmatprep.subr.mxu0 0.0
      %2140 = vmatpush2.msra.mxu0 %v634
      %2141 = vmatprep.subr.mxu0 0.0
      %2142 = vmatpush2.msra.mxu0 %v627
      %2143 = vmatprep.subr.mxu0 0.0
      %2144 = vmatpush2.msra.mxu0 %v620
      %2145 = vmatprep.mubr.f32.mxu0 %v496
      %2146 = vmatmul.mubr.f32.gmra.mxu0 %v495
      %v2147 = vpop.f32.mrf.mxu0
      %v2148 = vadd.f32 %v1217, %v2147
      %v2149 = vpop.f32.mrf.mxu0
      %2150 = vdwg.mxu0
      %2151 = vmatprep.subr.mxu0 0.0
      %2152 = vmatpush1.msra.mxu0 %v837
      %2153 = vmatprep.subr.mxu0 0.0
      %2154 = vmatpush1.msra.mxu0 %v830
      %2155 = vmatprep.subr.mxu0 0.0
      %2156 = vmatpush1.msra.mxu0 %v823
      %2157 = vmatprep.subr.mxu0 0.0
      %2158 = vmatpush1.msra.mxu0 %v816
      %2159 = vmatprep.subr.mxu0 0.0
      %2160 = vmatpush1.msra.mxu0 %v809
      %2161 = vmatprep.subr.mxu0 0.0
      %2162 = vmatpush1.msra.mxu0 %v802
      %2163 = vmatprep.subr.mxu0 0.0
      %2164 = vmatpush1.msra.mxu0 %v795
      %2165 = vmatprep.subr.mxu0 0.0
      %2166 = vmatpush1.msra.mxu0 %v788
      %2167 = vmatprep.subr.mxu0 0.0
      %2168 = vmatpush1.msra.mxu0 %v781
      %2169 = vmatprep.subr.mxu0 0.0
      %2170 = vmatpush1.msra.mxu0 %v774
      %2171 = vmatprep.subr.mxu0 0.0
      %2172 = vmatpush1.msra.mxu0 %v767
      %2173 = vmatprep.subr.mxu0 0.0
      %2174 = vmatpush1.msra.mxu0 %v760
      %2175 = vmatprep.subr.mxu0 0.0
      %2176 = vmatpush1.msra.mxu0 %v753
      %2177 = vmatprep.subr.mxu0 0.0
      %2178 = vmatpush1.msra.mxu0 %v746
      %2179 = vmatprep.subr.mxu0 0.0
      %2180 = vmatpush1.msra.mxu0 %v739
      %2181 = vmatprep.subr.mxu0 0.0
      %2182 = vmatpush1.msra.mxu0 %v732
      %2183 = vmatprep.subr.mxu0 0.0
      %2184 = vmatpush2.msra.mxu0 %v949
      %2185 = vmatprep.subr.mxu0 0.0
      %2186 = vmatpush2.msra.mxu0 %v942
      %2187 = vmatprep.subr.mxu0 0.0
      %2188 = vmatpush2.msra.mxu0 %v935
      %2189 = vmatprep.subr.mxu0 0.0
      %2190 = vmatpush2.msra.mxu0 %v928
      %2191 = vmatprep.subr.mxu0 0.0
      %2192 = vmatpush2.msra.mxu0 %v921
      %2193 = vmatprep.subr.mxu0 0.0
      %2194 = vmatpush2.msra.mxu0 %v914
      %2195 = vmatprep.subr.mxu0 0.0
      %2196 = vmatpush2.msra.mxu0 %v907
      %2197 = vmatprep.subr.mxu0 0.0
      %2198 = vmatpush2.msra.mxu0 %v900
      %2199 = vmatprep.subr.mxu0 0.0
      %2200 = vmatpush2.msra.mxu0 %v893
      %2201 = vmatprep.subr.mxu0 0.0
      %2202 = vmatpush2.msra.mxu0 %v886
      %2203 = vmatprep.subr.mxu0 0.0
      %2204 = vmatpush2.msra.mxu0 %v879
      %2205 = vmatprep.subr.mxu0 0.0
      %2206 = vmatpush2.msra.mxu0 %v872
      %2207 = vmatprep.subr.mxu0 0.0
      %2208 = vmatpush2.msra.mxu0 %v865
      %2209 = vmatprep.subr.mxu0 0.0
      %2210 = vmatpush2.msra.mxu0 %v858
      %2211 = vmatprep.subr.mxu0 0.0
      %2212 = vmatpush2.msra.mxu0 %v851
      %2213 = vmatprep.subr.mxu0 0.0
      %2214 = vmatpush2.msra.mxu0 %v844
      %2215 = vmatprep.mubr.f32.mxu0 %v498
      %2216 = vmatmul.mubr.f32.gmra.mxu0 %v497
      %v2217 = vpop.f32.mrf.mxu0
      %v2218 = vadd.f32 %v2148, %v2217
      %v2219 = vpop.f32.mrf.mxu0
      %2220 = vdwg.mxu0
      %2221 = vmatprep.subr.mxu0 0.0
      %2222 = vmatpush1.msra.mxu0 %v1061
      %2223 = vmatprep.subr.mxu0 0.0
      %2224 = vmatpush1.msra.mxu0 %v1054
      %2225 = vmatprep.subr.mxu0 0.0
      %2226 = vmatpush1.msra.mxu0 %v1047
      %2227 = vmatprep.subr.mxu0 0.0
      %2228 = vmatpush1.msra.mxu0 %v1040
      %2229 = vmatprep.subr.mxu0 0.0
      %2230 = vmatpush1.msra.mxu0 %v1033
      %2231 = vmatprep.subr.mxu0 0.0
      %2232 = vmatpush1.msra.mxu0 %v1026
      %2233 = vmatprep.subr.mxu0 0.0
      %2234 = vmatpush1.msra.mxu0 %v1019
      %2235 = vmatprep.subr.mxu0 0.0
      %2236 = vmatpush1.msra.mxu0 %v1012
      %2237 = vmatprep.subr.mxu0 0.0
      %2238 = vmatpush1.msra.mxu0 %v1005
      %2239 = vmatprep.subr.mxu0 0.0
      %2240 = vmatpush1.msra.mxu0 %v998
      %2241 = vmatprep.subr.mxu0 0.0
      %2242 = vmatpush1.msra.mxu0 %v991
      %2243 = vmatprep.subr.mxu0 0.0
      %2244 = vmatpush1.msra.mxu0 %v984
      %2245 = vmatprep.subr.mxu0 0.0
      %2246 = vmatpush1.msra.mxu0 %v977
      %2247 = vmatprep.subr.mxu0 0.0
      %2248 = vmatpush1.msra.mxu0 %v970
      %2249 = vmatprep.subr.mxu0 0.0
      %2250 = vmatpush1.msra.mxu0 %v963
      %2251 = vmatprep.subr.mxu0 0.0
      %2252 = vmatpush1.msra.mxu0 %v956
      %2253 = vmatprep.subr.mxu0 0.0
      %2254 = vmatpush2.msra.mxu0 %v1173
      %2255 = vmatprep.subr.mxu0 0.0
      %2256 = vmatpush2.msra.mxu0 %v1166
      %2257 = vmatprep.subr.mxu0 0.0
      %2258 = vmatpush2.msra.mxu0 %v1159
      %2259 = vmatprep.subr.mxu0 0.0
      %2260 = vmatpush2.msra.mxu0 %v1152
      %2261 = vmatprep.subr.mxu0 0.0
      %2262 = vmatpush2.msra.mxu0 %v1145
      %2263 = vmatprep.subr.mxu0 0.0
      %2264 = vmatpush2.msra.mxu0 %v1138
      %2265 = vmatprep.subr.mxu0 0.0
      %2266 = vmatpush2.msra.mxu0 %v1131
      %2267 = vmatprep.subr.mxu0 0.0
      %2268 = vmatpush2.msra.mxu0 %v1124
      %2269 = vmatprep.subr.mxu0 0.0
      %2270 = vmatpush2.msra.mxu0 %v1117
      %2271 = vmatprep.subr.mxu0 0.0
      %2272 = vmatpush2.msra.mxu0 %v1110
      %2273 = vmatprep.subr.mxu0 0.0
      %2274 = vmatpush2.msra.mxu0 %v1103
      %2275 = vmatprep.subr.mxu0 0.0
      %2276 = vmatpush2.msra.mxu0 %v1096
      %2277 = vmatprep.subr.mxu0 0.0
      %2278 = vmatpush2.msra.mxu0 %v1089
      %2279 = vmatprep.subr.mxu0 0.0
      %2280 = vmatpush2.msra.mxu0 %v1082
      %2281 = vmatprep.subr.mxu0 0.0
      %2282 = vmatpush2.msra.mxu0 %v1075
      %2283 = vmatprep.subr.mxu0 0.0
      %2284 = vmatpush2.msra.mxu0 %v1068
      %2285 = vmatprep.mubr.f32.mxu0 %v500
      %2286 = vmatmul.mubr.f32.gmra.mxu0 %v499
      %v2287 = vpop.f32.mrf.mxu0
      %v2288 = vadd.f32 %v2218, %v2287
      %v2289 = vpop.f32.mrf.mxu0
      %2290 = vdwg.mxu0
      %2291 = vmatprep.subr.mxu0 0.0
      %2292 = vmatpush1.msra.mxu0 0.0
      %2293 = vmatprep.subr.mxu0 0.0
      %2294 = vmatpush1.msra.mxu0 0.0
      %2295 = vmatprep.subr.mxu0 0.0
      %2296 = vmatpush1.msra.mxu0 0.0
      %2297 = vmatprep.subr.mxu0 0.0
      %2298 = vmatpush1.msra.mxu0 0.0
      %2299 = vmatprep.subr.mxu0 0.0
      %2300 = vmatpush1.msra.mxu0 0.0
      %2301 = vmatprep.subr.mxu0 0.0
      %2302 = vmatpush1.msra.mxu0 0.0
      %2303 = vmatprep.subr.mxu0 0.0
      %2304 = vmatpush1.msra.mxu0 0.0
      %2305 = vmatprep.subr.mxu0 0.0
      %2306 = vmatpush1.msra.mxu0 0.0
      %2307 = vmatprep.subr.mxu0 0.0
      %2308 = vmatpush1.msra.mxu0 0.0
      %2309 = vmatprep.subr.mxu0 0.0
      %2310 = vmatpush1.msra.mxu0 0.0
      %2311 = vmatprep.subr.mxu0 0.0
      %2312 = vmatpush1.msra.mxu0 0.0
      %2313 = vmatprep.subr.mxu0 0.0
      %2314 = vmatpush1.msra.mxu0 0.0
      %2315 = vmatprep.subr.mxu0 0.0
      %2316 = vmatpush1.msra.mxu0 0.0
      %2317 = vmatprep.subr.mxu0 0.0
      %2318 = vmatpush1.msra.mxu0 0.0
      %2319 = vmatprep.subr.mxu0 0.0
      %2320 = vmatpush1.msra.mxu0 %v1187
      %2321 = vmatprep.subr.mxu0 0.0
      %2322 = vmatpush1.msra.mxu0 %v1180
      %2323 = vmatprep.subr.mxu0 0.0
      %2324 = vmatpush2.msra.mxu0 0.0
      %2325 = vmatprep.subr.mxu0 0.0
      %2326 = vmatpush2.msra.mxu0 0.0
      %2327 = vmatprep.subr.mxu0 0.0
      %2328 = vmatpush2.msra.mxu0 0.0
      %2329 = vmatprep.subr.mxu0 0.0
      %2330 = vmatpush2.msra.mxu0 0.0
      %2331 = vmatprep.subr.mxu0 0.0
      %2332 = vmatpush2.msra.mxu0 0.0
      %2333 = vmatprep.subr.mxu0 0.0
      %2334 = vmatpush2.msra.mxu0 0.0
      %2335 = vmatprep.subr.mxu0 0.0
      %2336 = vmatpush2.msra.mxu0 0.0
      %2337 = vmatprep.subr.mxu0 0.0
      %2338 = vmatpush2.msra.mxu0 0.0
      %2339 = vmatprep.subr.mxu0 0.0
      %2340 = vmatpush2.msra.mxu0 0.0
      %2341 = vmatprep.subr.mxu0 0.0
      %2342 = vmatpush2.msra.mxu0 0.0
      %2343 = vmatprep.subr.mxu0 0.0
      %2344 = vmatpush2.msra.mxu0 0.0
      %2345 = vmatprep.subr.mxu0 0.0
      %2346 = vmatpush2.msra.mxu0 0.0
      %2347 = vmatprep.subr.mxu0 0.0
      %2348 = vmatpush2.msra.mxu0 0.0
      %2349 = vmatprep.subr.mxu0 0.0
      %2350 = vmatpush2.msra.mxu0 0.0
      %2351 = vmatprep.subr.mxu0 0.0
      %2352 = vmatpush2.msra.mxu0 0.0
      %2353 = vmatprep.subr.mxu0 0.0
      %2354 = vmatpush2.msra.mxu0 0.0
      %2355 = vmatprep.mubr.f32.mxu0 0.0
      %2356 = vmatmul.mubr.f32.gmra.mxu0 %v1227
      %v2357 = vpop.f32.mrf.mxu0
      %v2358 = vadd.f32 %v2288, %v2357
      %v2359 = vpop.f32.mrf.mxu0
      %2360 = vdwg.mxu0
      %v2361 = vadd.f32 %v1509, %v1511
      %v2362 = vadd.f32 %v2361, %v1793
      %v2363 = vadd.f32 %v2362, %v1795
      %v2364 = vadd.f32 %v2363, %v2077
      %v2365 = vadd.f32 %v2364, %v2079
      %v2366 = vsel %vm1225, %v2358, 0.0
      %v2367 = vadd.f32 %v2365, %v2366
      %2368 = vadd.xlane.f32.xlu0 %v2367
      %v2369 = vpop.xlane.xlu0 %2368
      %v2370 = vrcp.pop 784.0
      %v2371 = vmul.f32 %v2369, %v2370
      %v2372 = vsub.f32 %v1509, %v2371
      %v2373 = vsub.f32 %v1511, %v2371
      %v2374 = vsub.f32 %v1793, %v2371
      %v2375 = vsub.f32 %v1795, %v2371
      %v2376 = vsub.f32 %v2077, %v2371
      %v2377 = vsub.f32 %v2079, %v2371
      %v2378 = vsub.f32 %v2358, %v2371
      %v2379 = vmul.f32 %v2372, %v2372
      %v2380 = vmul.f32 %v2373, %v2373
      %v2381 = vmul.f32 %v2374, %v2374
      %v2382 = vmul.f32 %v2375, %v2375
      %v2383 = vmul.f32 %v2376, %v2376
      %v2384 = vmul.f32 %v2377, %v2377
      %v2385 = vmul.f32 %v2378, %v2378
      %v2386 = vadd.f32 %v2379, %v2380
      %v2387 = vadd.f32 %v2386, %v2381
      %v2388 = vadd.f32 %v2387, %v2382
      %v2389 = vadd.f32 %v2388, %v2383
      %v2390 = vadd.f32 %v2389, %v2384
      %v2391 = vsel %vm1225, %v2385, 0.0
      %v2392 = vadd.f32 %v2390, %v2391
      %2393 = vadd.xlane.f32.xlu0 %v2392
      %v2394 = vpop.xlane.xlu0 %2393
      %v2395 = vmul.f32 %v2394, %v2370
      %v2396 = vadd.f32 %v2395, 1e-05
      %v2397 = vrsqrt.pop %v2396
      %v2398 = vmul.f32 %v2372, %v2397
      %v2399 = vmul.f32 %v2373, %v2397
      %v2400 = vmul.f32 %v2374, %v2397
      %v2401 = vmul.f32 %v2375, %v2397
      %v2402 = vmul.f32 %v2376, %v2397
      %v2403 = vmul.f32 %v2377, %v2397
      %v2404 = vmul.f32 %v2378, %v2397
      %v2405 = vld [vmem:[%s3] sm:$0x7f]
      %v2407 = vlaneseq
      %v2408 = vshrl.u32 %v2407, 7
      %v2409 = vsub.s32 0, %v2408
      %v2410 = vrot.slane %v2405, %v2409
      %v2411 = vlaneseq
      %v2412 = vshrl.u32 %v2411, 7
      %v2413 = vsub.s32 1, %v2412
      %v2414 = vrot.slane %v2405, %v2413
      %v2415 = vlaneseq
      %v2416 = vshrl.u32 %v2415, 7
      %v2417 = vsub.s32 2, %v2416
      %v2418 = vrot.slane %v2405, %v2417
      %v2419 = vlaneseq
      %v2420 = vshrl.u32 %v2419, 7
      %v2421 = vsub.s32 3, %v2420
      %v2422 = vrot.slane %v2405, %v2421
      %v2423 = vlaneseq
      %v2424 = vshrl.u32 %v2423, 7
      %v2425 = vsub.s32 4, %v2424
      %v2426 = vrot.slane %v2405, %v2425
      %v2427 = vlaneseq
      %v2428 = vshrl.u32 %v2427, 7
      %v2429 = vsub.s32 5, %v2428
      %v2430 = vrot.slane %v2405, %v2429
      %v2431 = vlaneseq
      %v2432 = vshrl.u32 %v2431, 7
      %v2433 = vsub.s32 6, %v2432
      %v2434 = vrot.slane %v2405, %v2433
      %v2442 = vmul.f32 %v2398, %v2410
      %v2443 = vmul.f32 %v2399, %v2414
      %v2444 = vmul.f32 %v2400, %v2418
      %v2445 = vmul.f32 %v2401, %v2422
      %v2446 = vmul.f32 %v2402, %v2426
      %v2447 = vmul.f32 %v2403, %v2430
      %v2448 = vmul.f32 %v2404, %v2434
      %v2449 = vld [vmem:[%s4] sm:$0x7f]
      %v2451 = vlaneseq
      %v2452 = vshrl.u32 %v2451, 7
      %v2453 = vsub.s32 0, %v2452
      %v2454 = vrot.slane %v2449, %v2453
      %v2455 = vlaneseq
      %v2456 = vshrl.u32 %v2455, 7
      %v2457 = vsub.s32 1, %v2456
      %v2458 = vrot.slane %v2449, %v2457
      %v2459 = vlaneseq
      %v2460 = vshrl.u32 %v2459, 7
      %v2461 = vsub.s32 2, %v2460
      %v2462 = vrot.slane %v2449, %v2461
      %v2463 = vlaneseq
      %v2464 = vshrl.u32 %v2463, 7
      %v2465 = vsub.s32 3, %v2464
      %v2466 = vrot.slane %v2449, %v2465
      %v2467 = vlaneseq
      %v2468 = vshrl.u32 %v2467, 7
      %v2469 = vsub.s32 4, %v2468
      %v2470 = vrot.slane %v2449, %v2469
      %v2471 = vlaneseq
      %v2472 = vshrl.u32 %v2471, 7
      %v2473 = vsub.s32 5, %v2472
      %v2474 = vrot.slane %v2449, %v2473
      %v2475 = vlaneseq
      %v2476 = vshrl.u32 %v2475, 7
      %v2477 = vsub.s32 6, %v2476
      %v2478 = vrot.slane %v2449, %v2477
      %v2486 = vadd.f32 %v2442, %v2454
      %v2487 = vadd.f32 %v2443, %v2458
      %v2488 = vadd.f32 %v2444, %v2462
      %v2489 = vadd.f32 %v2445, %v2466
      %v2490 = vadd.f32 %v2446, %v2470
      %v2491 = vadd.f32 %v2447, %v2474
      %v2492 = vadd.f32 %v2448, %v2478
      %vm2493 = vcmp.ge.f32.partialorder %v2486, 0.0
      %vm2494 = vcmp.ge.f32.partialorder %v2487, 0.0
      %vm2495 = vcmp.ge.f32.partialorder %v2488, 0.0
      %vm2496 = vcmp.ge.f32.partialorder %v2489, 0.0
      %vm2497 = vcmp.ge.f32.partialorder %v2490, 0.0
      %vm2498 = vcmp.ge.f32.partialorder %v2491, 0.0
      %vm2499 = vcmp.ge.f32.partialorder %v2492, 0.0
      %v2500 = vmul.f32 %v2486, 0.2
      %v2501 = vmul.f32 %v2487, 0.2
      %v2502 = vmul.f32 %v2488, 0.2
      %v2503 = vmul.f32 %v2489, 0.2
      %v2504 = vmul.f32 %v2490, 0.2
      %v2505 = vmul.f32 %v2491, 0.2
      %v2506 = vmul.f32 %v2492, 0.2
      %v2507 = vsel %vm2493, %v2486, %v2500
      %v2508 = vsel %vm2494, %v2487, %v2501
      %v2509 = vsel %vm2495, %v2488, %v2502
      %v2510 = vsel %vm2496, %v2489, %v2503
      %v2511 = vsel %vm2497, %v2490, %v2504
      %v2512 = vsel %vm2498, %v2491, %v2505
      %v2513 = vsel %vm2499, %v2492, %v2506
      %v2514 = vld [vmem:[%s5] sm:$0xff]
      %v2515 = vld [vmem:[%s5 + $0x8] sm:$0xff]
      %v2516 = vld [vmem:[%s5 + $0x10] sm:$0xff]
      %v2517 = vld [vmem:[%s5 + $0x18] sm:$0xff]
      %v2518 = vld [vmem:[%s5 + $0x20] sm:$0xff]
      %v2519 = vld [vmem:[%s5 + $0x28] sm:$0xff]
      %v2520 = vld [vmem:[%s5 + $0x30] sm:$0xff]
      %v2521 = vld [vmem:[%s5 + $0x38] sm:$0xff]
      %v2522 = vld [vmem:[%s5 + $0x40] sm:$0xff]
      %v2523 = vld [vmem:[%s5 + $0x48] sm:$0xff]
      %v2524 = vld [vmem:[%s5 + $0x50] sm:$0xff]
      %v2525 = vld [vmem:[%s5 + $0x58] sm:$0xff]
      %v2526 = vld [vmem:[%s5 + $0x60] sm:$0xff]
      %v2527 = vld [vmem:[%s5 + $0x68] sm:$0xff]
      %v2528 = vld [vmem:[%s5 + $0x70] sm:$0xff]
      %v2529 = vld [vmem:[%s5 + $0x78] sm:$0xff]
      %v2530 = vld [vmem:[%s5 + $0x80] sm:$0xff]
      %v2531 = vld [vmem:[%s5 + $0x88] sm:$0xff]
      %v2532 = vld [vmem:[%s5 + $0x90] sm:$0xff]
      %v2533 = vld [vmem:[%s5 + $0x98] sm:$0xff]
      %v2534 = vld [vmem:[%s5 + $0xa0] sm:$0xff]
      %v2535 = vld [vmem:[%s5 + $0xa8] sm:$0xff]
      %v2536 = vld [vmem:[%s5 + $0xb0] sm:$0xff]
      %v2537 = vld [vmem:[%s5 + $0xb8] sm:$0xff]
      %v2538 = vld [vmem:[%s5 + $0xc0] sm:$0xff]
      %v2539 = vld [vmem:[%s5 + $0xc8] sm:$0xff]
      %v2540 = vld [vmem:[%s5 + $0xd0] sm:$0xff]
      %v2541 = vld [vmem:[%s5 + $0xd8] sm:$0xff]
      %v2542 = vld [vmem:[%s5 + $0xe0] sm:$0xff]
      %v2543 = vld [vmem:[%s5 + $0xe8] sm:$0xff]
      %v2544 = vld [vmem:[%s5 + $0xf0] sm:$0xff]
      %v2545 = vld [vmem:[%s5 + $0xf8] sm:$0xff]
      %v2546 = vld [vmem:[%s5 + $0x100] sm:$0xff]
      %v2547 = vld [vmem:[%s5 + $0x108] sm:$0xff]
      %v2548 = vld [vmem:[%s5 + $0x110] sm:$0xff]
      %v2549 = vld [vmem:[%s5 + $0x118] sm:$0xff]
      %v2550 = vld [vmem:[%s5 + $0x120] sm:$0xff]
      %v2551 = vld [vmem:[%s5 + $0x128] sm:$0xff]
      %v2552 = vld [vmem:[%s5 + $0x130] sm:$0xff]
      %v2553 = vld [vmem:[%s5 + $0x138] sm:$0xff]
      %v2554 = vld [vmem:[%s5 + $0x140] sm:$0xff]
      %v2555 = vld [vmem:[%s5 + $0x148] sm:$0xff]
      %v2556 = vld [vmem:[%s5 + $0x150] sm:$0xff]
      %v2557 = vld [vmem:[%s5 + $0x158] sm:$0xff]
      %v2558 = vld [vmem:[%s5 + $0x160] sm:$0xff]
      %v2559 = vld [vmem:[%s5 + $0x168] sm:$0xff]
      %v2560 = vld [vmem:[%s5 + $0x170] sm:$0xff]
      %v2561 = vld [vmem:[%s5 + $0x178] sm:$0xff]
      %v2562 = vld [vmem:[%s5 + $0x180] sm:$0xff]
      %v2563 = vld [vmem:[%s5 + $0x188] sm:$0xff]
      %v2564 = vld [vmem:[%s5 + $0x190] sm:$0xff]
      %v2565 = vld [vmem:[%s5 + $0x198] sm:$0xff]
      %v2566 = vld [vmem:[%s5 + $0x1a0] sm:$0xff]
      %v2567 = vld [vmem:[%s5 + $0x1a8] sm:$0xff]
      %v2568 = vld [vmem:[%s5 + $0x1b0] sm:$0xff]
      %v2569 = vld [vmem:[%s5 + $0x1b8] sm:$0xff]
      %v2570 = vld [vmem:[%s5 + $0x1c0] sm:$0xff]
      %v2571 = vld [vmem:[%s5 + $0x1c8] sm:$0xff]
      %v2572 = vld [vmem:[%s5 + $0x1d0] sm:$0xff]
      %v2573 = vld [vmem:[%s5 + $0x1d8] sm:$0xff]
      %v2574 = vld [vmem:[%s5 + $0x1e0] sm:$0xff]
      %v2575 = vld [vmem:[%s5 + $0x1e8] sm:$0xff]
      %v2576 = vld [vmem:[%s5 + $0x1f0] sm:$0xff]
      %v2577 = vld [vmem:[%s5 + $0x1f8] sm:$0xff]
      %v2578 = vld [vmem:[%s5 + $0x200] sm:$0xff]
      %v2579 = vld [vmem:[%s5 + $0x208] sm:$0xff]
      %v2580 = vld [vmem:[%s5 + $0x210] sm:$0xff]
      %v2581 = vld [vmem:[%s5 + $0x218] sm:$0xff]
      %v2582 = vld [vmem:[%s5 + $0x220] sm:$0xff]
      %v2583 = vld [vmem:[%s5 + $0x228] sm:$0xff]
      %v2584 = vld [vmem:[%s5 + $0x230] sm:$0xff]
      %v2585 = vld [vmem:[%s5 + $0x238] sm:$0xff]
      %v2586 = vld [vmem:[%s5 + $0x240] sm:$0xff]
      %v2587 = vld [vmem:[%s5 + $0x248] sm:$0xff]
      %v2588 = vld [vmem:[%s5 + $0x250] sm:$0xff]
      %v2589 = vld [vmem:[%s5 + $0x258] sm:$0xff]
      %v2590 = vld [vmem:[%s5 + $0x260] sm:$0xff]
      %v2591 = vld [vmem:[%s5 + $0x268] sm:$0xff]
      %v2592 = vld [vmem:[%s5 + $0x270] sm:$0xff]
      %v2593 = vld [vmem:[%s5 + $0x278] sm:$0xff]
      %v2594 = vld [vmem:[%s5 + $0x280] sm:$0xff]
      %v2595 = vld [vmem:[%s5 + $0x288] sm:$0xff]
      %v2596 = vld [vmem:[%s5 + $0x290] sm:$0xff]
      %v2597 = vld [vmem:[%s5 + $0x298] sm:$0xff]
      %v2598 = vld [vmem:[%s5 + $0x2a0] sm:$0xff]
      %v2599 = vld [vmem:[%s5 + $0x2a8] sm:$0xff]
      %v2600 = vld [vmem:[%s5 + $0x2b0] sm:$0xff]
      %v2601 = vld [vmem:[%s5 + $0x2b8] sm:$0xff]
      %v2602 = vld [vmem:[%s5 + $0x2c0] sm:$0xff]
      %v2603 = vld [vmem:[%s5 + $0x2c8] sm:$0xff]
      %v2604 = vld [vmem:[%s5 + $0x2d0] sm:$0xff]
      %v2605 = vld [vmem:[%s5 + $0x2d8] sm:$0xff]
      %v2606 = vld [vmem:[%s5 + $0x2e0] sm:$0xff]
      %v2607 = vld [vmem:[%s5 + $0x2e8] sm:$0xff]
      %v2608 = vld [vmem:[%s5 + $0x2f0] sm:$0xff]
      %v2609 = vld [vmem:[%s5 + $0x2f8] sm:$0xff]
      %v2610 = vld [vmem:[%s5 + $0x300] sm:$0xff]
      %v2611 = vld [vmem:[%s5 + $0x308] sm:$0xff]
      %v2612 = vld [vmem:[%s5 + $0x310] sm:$0xff]
      %v2613 = vld [vmem:[%s5 + $0x318] sm:$0xff]
      %v2614 = vld [vmem:[%s5 + $0x320] sm:$0xff]
      %v2615 = vld [vmem:[%s5 + $0x328] sm:$0xff]
      %v2616 = vld [vmem:[%s5 + $0x330] sm:$0xff]
      %v2617 = vld [vmem:[%s5 + $0x338] sm:$0xff]
      %v2618 = vld [vmem:[%s5 + $0x340] sm:$0xff]
      %v2619 = vld [vmem:[%s5 + $0x348] sm:$0xff]
      %v2620 = vld [vmem:[%s5 + $0x350] sm:$0xff]
      %v2621 = vld [vmem:[%s5 + $0x358] sm:$0xff]
      %v2622 = vld [vmem:[%s5 + $0x360] sm:$0xff]
      %v2623 = vld [vmem:[%s5 + $0x368] sm:$0xff]
      %v2624 = vld [vmem:[%s5 + $0x370] sm:$0xff]
      %v2625 = vld [vmem:[%s5 + $0x378] sm:$0xff]
      %v2626 = vld [vmem:[%s5 + $0x380] sm:$0xff]
      %v2627 = vld [vmem:[%s5 + $0x388] sm:$0xff]
      %v2628 = vld [vmem:[%s5 + $0x390] sm:$0xff]
      %v2629 = vld [vmem:[%s5 + $0x398] sm:$0xff]
      %v2630 = vld [vmem:[%s5 + $0x3a0] sm:$0xff]
      %v2631 = vld [vmem:[%s5 + $0x3a8] sm:$0xff]
      %v2632 = vld [vmem:[%s5 + $0x3b0] sm:$0xff]
      %v2633 = vld [vmem:[%s5 + $0x3b8] sm:$0xff]
      %v2634 = vld [vmem:[%s5 + $0x3c0] sm:$0xff]
      %v2635 = vld [vmem:[%s5 + $0x3c8] sm:$0xff]
      %v2636 = vld [vmem:[%s5 + $0x3d0] sm:$0xff]
      %v2637 = vld [vmem:[%s5 + $0x3d8] sm:$0xff]
      %v2638 = vld [vmem:[%s5 + $0x3e0] sm:$0xff]
      %v2639 = vld [vmem:[%s5 + $0x3e8] sm:$0xff]
      %v2640 = vld [vmem:[%s5 + $0x3f0] sm:$0xff]
      %v2641 = vld [vmem:[%s5 + $0x3f8] sm:$0xff]
      %v2642 = vld [vmem:[%s5 + $0x400] sm:$0xff]
      %v2643 = vld [vmem:[%s5 + $0x408] sm:$0xff]
      %v2644 = vld [vmem:[%s5 + $0x410] sm:$0xff]
      %v2645 = vld [vmem:[%s5 + $0x418] sm:$0xff]
      %v2646 = vld [vmem:[%s5 + $0x420] sm:$0xff]
      %v2647 = vld [vmem:[%s5 + $0x428] sm:$0xff]
      %v2648 = vld [vmem:[%s5 + $0x430] sm:$0xff]
      %v2649 = vld [vmem:[%s5 + $0x438] sm:$0xff]
      %v2650 = vld [vmem:[%s5 + $0x440] sm:$0xff]
      %v2651 = vld [vmem:[%s5 + $0x448] sm:$0xff]
      %v2652 = vld [vmem:[%s5 + $0x450] sm:$0xff]
      %v2653 = vld [vmem:[%s5 + $0x458] sm:$0xff]
      %v2654 = vld [vmem:[%s5 + $0x460] sm:$0xff]
      %v2655 = vld [vmem:[%s5 + $0x468] sm:$0xff]
      %v2656 = vld [vmem:[%s5 + $0x470] sm:$0xff]
      %v2657 = vld [vmem:[%s5 + $0x478] sm:$0xff]
      %v2658 = vld [vmem:[%s5 + $0x480] sm:$0xff]
      %v2659 = vld [vmem:[%s5 + $0x488] sm:$0xff]
      %v2660 = vld [vmem:[%s5 + $0x490] sm:$0xff]
      %v2661 = vld [vmem:[%s5 + $0x498] sm:$0xff]
      %v2662 = vld [vmem:[%s5 + $0x4a0] sm:$0xff]
      %v2663 = vld [vmem:[%s5 + $0x4a8] sm:$0xff]
      %v2664 = vld [vmem:[%s5 + $0x4b0] sm:$0xff]
      %v2665 = vld [vmem:[%s5 + $0x4b8] sm:$0xff]
      %v2666 = vld [vmem:[%s5 + $0x4c0] sm:$0xff]
      %v2667 = vld [vmem:[%s5 + $0x4c8] sm:$0xff]
      %v2668 = vld [vmem:[%s5 + $0x4d0] sm:$0xff]
      %v2669 = vld [vmem:[%s5 + $0x4d8] sm:$0xff]
      %v2670 = vld [vmem:[%s5 + $0x4e0] sm:$0xff]
      %v2671 = vld [vmem:[%s5 + $0x4e8] sm:$0xff]
      %v2672 = vld [vmem:[%s5 + $0x4f0] sm:$0xff]
      %v2673 = vld [vmem:[%s5 + $0x4f8] sm:$0xff]
      %v2674 = vld [vmem:[%s5 + $0x500] sm:$0xff]
      %v2675 = vld [vmem:[%s5 + $0x508] sm:$0xff]
      %v2676 = vld [vmem:[%s5 + $0x510] sm:$0xff]
      %v2677 = vld [vmem:[%s5 + $0x518] sm:$0xff]
      %v2678 = vld [vmem:[%s5 + $0x520] sm:$0xff]
      %v2679 = vld [vmem:[%s5 + $0x528] sm:$0xff]
      %v2680 = vld [vmem:[%s5 + $0x530] sm:$0xff]
      %v2681 = vld [vmem:[%s5 + $0x538] sm:$0xff]
      %v2682 = vld [vmem:[%s5 + $0x540] sm:$0xff]
      %v2683 = vld [vmem:[%s5 + $0x548] sm:$0xff]
      %v2684 = vld [vmem:[%s5 + $0x550] sm:$0xff]
      %v2685 = vld [vmem:[%s5 + $0x558] sm:$0xff]
      %v2686 = vld [vmem:[%s5 + $0x560] sm:$0xff]
      %v2687 = vld [vmem:[%s5 + $0x568] sm:$0xff]
      %v2688 = vld [vmem:[%s5 + $0x570] sm:$0xff]
      %v2689 = vld [vmem:[%s5 + $0x578] sm:$0xff]
      %v2690 = vld [vmem:[%s5 + $0x580] sm:$0xff]
      %v2691 = vld [vmem:[%s5 + $0x588] sm:$0xff]
      %v2692 = vld [vmem:[%s5 + $0x590] sm:$0xff]
      %v2693 = vld [vmem:[%s5 + $0x598] sm:$0xff]
      %v2694 = vld [vmem:[%s5 + $0x5a0] sm:$0xff]
      %v2695 = vld [vmem:[%s5 + $0x5a8] sm:$0xff]
      %v2696 = vld [vmem:[%s5 + $0x5b0] sm:$0xff]
      %v2697 = vld [vmem:[%s5 + $0x5b8] sm:$0xff]
      %v2698 = vld [vmem:[%s5 + $0x5c0] sm:$0xff]
      %v2699 = vld [vmem:[%s5 + $0x5c8] sm:$0xff]
      %v2700 = vld [vmem:[%s5 + $0x5d0] sm:$0xff]
      %v2701 = vld [vmem:[%s5 + $0x5d8] sm:$0xff]
      %v2702 = vld [vmem:[%s5 + $0x5e0] sm:$0xff]
      %v2703 = vld [vmem:[%s5 + $0x5e8] sm:$0xff]
      %v2704 = vld [vmem:[%s5 + $0x5f0] sm:$0xff]
      %v2705 = vld [vmem:[%s5 + $0x5f8] sm:$0xff]
      %v2706 = vld [vmem:[%s5 + $0x600] sm:$0xff]
      %v2707 = vld [vmem:[%s5 + $0x608] sm:$0xff]
      %v2708 = vld [vmem:[%s5 + $0x610] sm:$0xff]
      %v2709 = vld [vmem:[%s5 + $0x618] sm:$0xff]
      %v2710 = vld [vmem:[%s5 + $0x620] sm:$0xff]
      %v2711 = vld [vmem:[%s5 + $0x628] sm:$0xff]
      %v2712 = vld [vmem:[%s5 + $0x630] sm:$0xff]
      %v2713 = vld [vmem:[%s5 + $0x638] sm:$0xff]
      %v2714 = vld [vmem:[%s5 + $0x640] sm:$0xff]
      %v2715 = vld [vmem:[%s5 + $0x648] sm:$0xff]
      %v2716 = vld [vmem:[%s5 + $0x650] sm:$0xff]
      %v2717 = vld [vmem:[%s5 + $0x658] sm:$0xff]
      %v2718 = vld [vmem:[%s5 + $0x660] sm:$0xff]
      %v2719 = vld [vmem:[%s5 + $0x668] sm:$0xff]
      %v2720 = vld [vmem:[%s5 + $0x670] sm:$0xff]
      %v2721 = vld [vmem:[%s5 + $0x678] sm:$0xff]
      %v2722 = vld [vmem:[%s5 + $0x680] sm:$0xff]
      %v2723 = vld [vmem:[%s5 + $0x688] sm:$0xff]
      %v2724 = vld [vmem:[%s5 + $0x690] sm:$0xff]
      %v2725 = vld [vmem:[%s5 + $0x698] sm:$0xff]
      %v2726 = vld [vmem:[%s5 + $0x6a0] sm:$0xff]
      %v2727 = vld [vmem:[%s5 + $0x6a8] sm:$0xff]
      %v2728 = vld [vmem:[%s5 + $0x6b0] sm:$0xff]
      %v2729 = vld [vmem:[%s5 + $0x6b8] sm:$0xff]
      %v2730 = vld [vmem:[%s5 + $0x6c0] sm:$0xff]
      %v2731 = vld [vmem:[%s5 + $0x6c8] sm:$0xff]
      %v2732 = vld [vmem:[%s5 + $0x6d0] sm:$0xff]
      %v2733 = vld [vmem:[%s5 + $0x6d8] sm:$0xff]
      %v2734 = vld [vmem:[%s5 + $0x6e0] sm:$0xff]
      %v2735 = vld [vmem:[%s5 + $0x6e8] sm:$0xff]
      %v2736 = vld [vmem:[%s5 + $0x6f0] sm:$0xff]
      %v2737 = vld [vmem:[%s5 + $0x6f8] sm:$0xff]
      %v2738 = vld [vmem:[%s5 + $0x700] sm:$0xff]
      %v2739 = vld [vmem:[%s5 + $0x708] sm:$0xff]
      %v2740 = vld [vmem:[%s5 + $0x710] sm:$0xff]
      %v2741 = vld [vmem:[%s5 + $0x718] sm:$0xff]
      %v2742 = vld [vmem:[%s5 + $0x720] sm:$0xff]
      %v2743 = vld [vmem:[%s5 + $0x728] sm:$0xff]
      %v2744 = vld [vmem:[%s5 + $0x730] sm:$0xff]
      %v2745 = vld [vmem:[%s5 + $0x738] sm:$0xff]
      %v2746 = vld [vmem:[%s5 + $0x740] sm:$0xff]
      %v2747 = vld [vmem:[%s5 + $0x748] sm:$0xff]
      %v2748 = vld [vmem:[%s5 + $0x750] sm:$0xff]
      %v2749 = vld [vmem:[%s5 + $0x758] sm:$0xff]
      %v2750 = vld [vmem:[%s5 + $0x760] sm:$0xff]
      %v2751 = vld [vmem:[%s5 + $0x768] sm:$0xff]
      %v2752 = vld [vmem:[%s5 + $0x770] sm:$0xff]
      %v2753 = vld [vmem:[%s5 + $0x778] sm:$0xff]
      %v2754 = vld [vmem:[%s5 + $0x780] sm:$0xff]
      %v2755 = vld [vmem:[%s5 + $0x788] sm:$0xff]
      %v2756 = vld [vmem:[%s5 + $0x790] sm:$0xff]
      %v2757 = vld [vmem:[%s5 + $0x798] sm:$0xff]
      %v2758 = vld [vmem:[%s5 + $0x7a0] sm:$0xff]
      %v2759 = vld [vmem:[%s5 + $0x7a8] sm:$0xff]
      %v2760 = vld [vmem:[%s5 + $0x7b0] sm:$0xff]
      %v2761 = vld [vmem:[%s5 + $0x7b8] sm:$0xff]
      %v2762 = vld [vmem:[%s5 + $0x7c0] sm:$0xff]
      %v2763 = vld [vmem:[%s5 + $0x7c8] sm:$0xff]
      %v2764 = vld [vmem:[%s5 + $0x7d0] sm:$0xff]
      %v2765 = vld [vmem:[%s5 + $0x7d8] sm:$0xff]
      %v2766 = vld [vmem:[%s5 + $0x7e0] sm:$0xff]
      %v2767 = vld [vmem:[%s5 + $0x7e8] sm:$0xff]
      %v2768 = vld [vmem:[%s5 + $0x7f0] sm:$0xff]
      %v2769 = vld [vmem:[%s5 + $0x7f8] sm:$0xff]
      %v2770 = vld [vmem:[%s5 + $0x800] sm:$0xff]
      %v2771 = vld [vmem:[%s5 + $0x808] sm:$0xff]
      %v2772 = vld [vmem:[%s5 + $0x810] sm:$0xff]
      %v2773 = vld [vmem:[%s5 + $0x818] sm:$0xff]
      %v2774 = vld [vmem:[%s5 + $0x820] sm:$0xff]
      %v2775 = vld [vmem:[%s5 + $0x828] sm:$0xff]
      %v2776 = vld [vmem:[%s5 + $0x830] sm:$0xff]
      %v2777 = vld [vmem:[%s5 + $0x838] sm:$0xff]
      %v2778 = vld [vmem:[%s5 + $0x840] sm:$0xff]
      %v2779 = vld [vmem:[%s5 + $0x848] sm:$0xff]
      %v2780 = vld [vmem:[%s5 + $0x850] sm:$0xff]
      %v2781 = vld [vmem:[%s5 + $0x858] sm:$0xff]
      %v2782 = vld [vmem:[%s5 + $0x860] sm:$0xff]
      %v2783 = vld [vmem:[%s5 + $0x868] sm:$0xff]
      %v2784 = vld [vmem:[%s5 + $0x870] sm:$0xff]
      %v2785 = vld [vmem:[%s5 + $0x878] sm:$0xff]
      %v2786 = vld [vmem:[%s5 + $0x880] sm:$0xff]
      %v2787 = vld [vmem:[%s5 + $0x888] sm:$0xff]
      %v2788 = vld [vmem:[%s5 + $0x890] sm:$0xff]
      %v2789 = vld [vmem:[%s5 + $0x898] sm:$0xff]
      %v2790 = vld [vmem:[%s5 + $0x8a0] sm:$0xff]
      %v2791 = vld [vmem:[%s5 + $0x8a8] sm:$0xff]
      %v2792 = vld [vmem:[%s5 + $0x8b0] sm:$0xff]
      %v2793 = vld [vmem:[%s5 + $0x8b8] sm:$0xff]
      %v2794 = vld [vmem:[%s5 + $0x8c0] sm:$0xff]
      %v2795 = vld [vmem:[%s5 + $0x8c8] sm:$0xff]
      %v2796 = vld [vmem:[%s5 + $0x8d0] sm:$0xff]
      %v2797 = vld [vmem:[%s5 + $0x8d8] sm:$0xff]
      %v2798 = vld [vmem:[%s5 + $0x8e0] sm:$0xff]
      %v2799 = vld [vmem:[%s5 + $0x8e8] sm:$0xff]
      %v2800 = vld [vmem:[%s5 + $0x8f0] sm:$0xff]
      %v2801 = vld [vmem:[%s5 + $0x8f8] sm:$0xff]
      %v2802 = vld [vmem:[%s5 + $0x900] sm:$0xff]
      %v2803 = vld [vmem:[%s5 + $0x908] sm:$0xff]
      %v2804 = vld [vmem:[%s5 + $0x910] sm:$0xff]
      %v2805 = vld [vmem:[%s5 + $0x918] sm:$0xff]
      %v2806 = vld [vmem:[%s5 + $0x920] sm:$0xff]
      %v2807 = vld [vmem:[%s5 + $0x928] sm:$0xff]
      %v2808 = vld [vmem:[%s5 + $0x930] sm:$0xff]
      %v2809 = vld [vmem:[%s5 + $0x938] sm:$0xff]
      %v2810 = vld [vmem:[%s5 + $0x940] sm:$0xff]
      %v2811 = vld [vmem:[%s5 + $0x948] sm:$0xff]
      %v2812 = vld [vmem:[%s5 + $0x950] sm:$0xff]
      %v2813 = vld [vmem:[%s5 + $0x958] sm:$0xff]
      %v2814 = vld [vmem:[%s5 + $0x960] sm:$0xff]
      %v2815 = vld [vmem:[%s5 + $0x968] sm:$0xff]
      %v2816 = vld [vmem:[%s5 + $0x970] sm:$0xff]
      %v2817 = vld [vmem:[%s5 + $0x978] sm:$0xff]
      %v2818 = vld [vmem:[%s5 + $0x980] sm:$0xff]
      %v2819 = vld [vmem:[%s5 + $0x988] sm:$0xff]
      %v2820 = vld [vmem:[%s5 + $0x990] sm:$0xff]
      %v2821 = vld [vmem:[%s5 + $0x998] sm:$0xff]
      %v2822 = vld [vmem:[%s5 + $0x9a0] sm:$0xff]
      %v2823 = vld [vmem:[%s5 + $0x9a8] sm:$0xff]
      %v2824 = vld [vmem:[%s5 + $0x9b0] sm:$0xff]
      %v2825 = vld [vmem:[%s5 + $0x9b8] sm:$0xff]
      %v2826 = vld [vmem:[%s5 + $0x9c0] sm:$0xff]
      %v2827 = vld [vmem:[%s5 + $0x9c8] sm:$0xff]
      %v2828 = vld [vmem:[%s5 + $0x9d0] sm:$0xff]
      %v2829 = vld [vmem:[%s5 + $0x9d8] sm:$0xff]
      %v2830 = vld [vmem:[%s5 + $0x9e0] sm:$0xff]
      %v2831 = vld [vmem:[%s5 + $0x9e8] sm:$0xff]
      %v2832 = vld [vmem:[%s5 + $0x9f0] sm:$0xff]
      %v2833 = vld [vmem:[%s5 + $0x9f8] sm:$0xff]
      %v2834 = vld [vmem:[%s5 + $0xa00] sm:$0xff]
      %v2835 = vld [vmem:[%s5 + $0xa08] sm:$0xff]
      %v2836 = vld [vmem:[%s5 + $0xa10] sm:$0xff]
      %v2837 = vld [vmem:[%s5 + $0xa18] sm:$0xff]
      %v2838 = vld [vmem:[%s5 + $0xa20] sm:$0xff]
      %v2839 = vld [vmem:[%s5 + $0xa28] sm:$0xff]
      %v2840 = vld [vmem:[%s5 + $0xa30] sm:$0xff]
      %v2841 = vld [vmem:[%s5 + $0xa38] sm:$0xff]
      %v2842 = vld [vmem:[%s5 + $0xa40] sm:$0xff]
      %v2843 = vld [vmem:[%s5 + $0xa48] sm:$0xff]
      %v2844 = vld [vmem:[%s5 + $0xa50] sm:$0xff]
      %v2845 = vld [vmem:[%s5 + $0xa58] sm:$0xff]
      %v2846 = vld [vmem:[%s5 + $0xa60] sm:$0xff]
      %v2847 = vld [vmem:[%s5 + $0xa68] sm:$0xff]
      %v2848 = vld [vmem:[%s5 + $0xa70] sm:$0xff]
      %v2849 = vld [vmem:[%s5 + $0xa78] sm:$0xff]
      %v2850 = vld [vmem:[%s5 + $0xa80] sm:$0xff]
      %v2851 = vld [vmem:[%s5 + $0xa88] sm:$0xff]
      %v2852 = vld [vmem:[%s5 + $0xa90] sm:$0xff]
      %v2853 = vld [vmem:[%s5 + $0xa98] sm:$0xff]
      %v2854 = vld [vmem:[%s5 + $0xaa0] sm:$0xff]
      %v2855 = vld [vmem:[%s5 + $0xaa8] sm:$0xff]
      %v2856 = vld [vmem:[%s5 + $0xab0] sm:$0xff]
      %v2857 = vld [vmem:[%s5 + $0xab8] sm:$0xff]
      %v2858 = vld [vmem:[%s5 + $0xac0] sm:$0xff]
      %v2859 = vld [vmem:[%s5 + $0xac8] sm:$0xff]
      %v2860 = vld [vmem:[%s5 + $0xad0] sm:$0xff]
      %v2861 = vld [vmem:[%s5 + $0xad8] sm:$0xff]
      %v2862 = vld [vmem:[%s5 + $0xae0] sm:$0xff]
      %v2863 = vld [vmem:[%s5 + $0xae8] sm:$0xff]
      %v2864 = vld [vmem:[%s5 + $0xaf0] sm:$0xff]
      %v2865 = vld [vmem:[%s5 + $0xaf8] sm:$0xff]
      %v2866 = vld [vmem:[%s5 + $0xb00] sm:$0xff]
      %v2867 = vld [vmem:[%s5 + $0xb08] sm:$0xff]
      %v2868 = vld [vmem:[%s5 + $0xb10] sm:$0xff]
      %v2869 = vld [vmem:[%s5 + $0xb18] sm:$0xff]
      %v2870 = vld [vmem:[%s5 + $0xb20] sm:$0xff]
      %v2871 = vld [vmem:[%s5 + $0xb28] sm:$0xff]
      %v2872 = vld [vmem:[%s5 + $0xb30] sm:$0xff]
      %v2873 = vld [vmem:[%s5 + $0xb38] sm:$0xff]
      %v2874 = vld [vmem:[%s5 + $0xb40] sm:$0xff]
      %v2875 = vld [vmem:[%s5 + $0xb48] sm:$0xff]
      %v2876 = vld [vmem:[%s5 + $0xb50] sm:$0xff]
      %v2877 = vld [vmem:[%s5 + $0xb58] sm:$0xff]
      %v2878 = vld [vmem:[%s5 + $0xb60] sm:$0xff]
      %v2879 = vld [vmem:[%s5 + $0xb68] sm:$0xff]
      %v2880 = vld [vmem:[%s5 + $0xb70] sm:$0xff]
      %v2881 = vld [vmem:[%s5 + $0xb78] sm:$0xff]
      %v2882 = vld [vmem:[%s5 + $0xb80] sm:$0xff]
      %v2883 = vld [vmem:[%s5 + $0xb88] sm:$0xff]
      %v2884 = vld [vmem:[%s5 + $0xb90] sm:$0xff]
      %v2885 = vld [vmem:[%s5 + $0xb98] sm:$0xff]
      %v2886 = vld [vmem:[%s5 + $0xba0] sm:$0xff]
      %v2887 = vld [vmem:[%s5 + $0xba8] sm:$0xff]
      %v2888 = vld [vmem:[%s5 + $0xbb0] sm:$0xff]
      %v2889 = vld [vmem:[%s5 + $0xbb8] sm:$0xff]
      %v2890 = vld [vmem:[%s5 + $0xbc0] sm:$0xff]
      %v2891 = vld [vmem:[%s5 + $0xbc8] sm:$0xff]
      %v2892 = vld [vmem:[%s5 + $0xbd0] sm:$0xff]
      %v2893 = vld [vmem:[%s5 + $0xbd8] sm:$0xff]
      %v2894 = vld [vmem:[%s5 + $0xbe0] sm:$0xff]
      %v2895 = vld [vmem:[%s5 + $0xbe8] sm:$0xff]
      %v2896 = vld [vmem:[%s5 + $0xbf0] sm:$0xff]
      %v2897 = vld [vmem:[%s5 + $0xbf8] sm:$0xff]
      %v2898 = vld [vmem:[%s5 + $0xc00] sm:$0xff]
      %v2899 = vld [vmem:[%s5 + $0xc08] sm:$0xff]
      %v2900 = vld [vmem:[%s5 + $0xc10] sm:$0xff]
      %v2901 = vld [vmem:[%s5 + $0xc18] sm:$0xff]
      %v2902 = vld [vmem:[%s5 + $0xc20] sm:$0xff]
      %v2903 = vld [vmem:[%s5 + $0xc28] sm:$0xff]
      %v2904 = vld [vmem:[%s5 + $0xc30] sm:$0xff]
      %v2905 = vld [vmem:[%s5 + $0xc38] sm:$0xff]
      %v2906 = vld [vmem:[%s6] sm:$0xf]
      %v2908 = vlaneseq
      %v2909 = vshrl.u32 %v2908, 7
      %v2910 = vsub.s32 0, %v2909
      %v2911 = vrot.slane %v2906, %v2910
      %v2912 = vlaneseq
      %v2913 = vshrl.u32 %v2912, 7
      %v2914 = vsub.s32 1, %v2913
      %v2915 = vrot.slane %v2906, %v2914
      %v2916 = vlaneseq
      %v2917 = vshrl.u32 %v2916, 7
      %v2918 = vsub.s32 2, %v2917
      %v2919 = vrot.slane %v2906, %v2918
      %v2920 = vlaneseq
      %v2921 = vshrl.u32 %v2920, 7
      %v2922 = vsub.s32 3, %v2921
      %v2923 = vrot.slane %v2906, %v2922
      %v2929 = vsel %vm1225, %v2513, 0
      %2931 = vmatprep.subr.mxu0 %v2575
      %2932 = vmatpush1.msra.mxu0 %v2574
      %2933 = vmatprep.subr.mxu0 %v2571
      %2934 = vmatpush1.msra.mxu0 %v2570
      %2935 = vmatprep.subr.mxu0 %v2567
      %2936 = vmatpush1.msra.mxu0 %v2566
      %2937 = vmatprep.subr.mxu0 %v2563
      %2938 = vmatpush1.msra.mxu0 %v2562
      %2939 = vmatprep.subr.mxu0 %v2559
      %2940 = vmatpush1.msra.mxu0 %v2558
      %2941 = vmatprep.subr.mxu0 %v2555
      %2942 = vmatpush1.msra.mxu0 %v2554
      %2943 = vmatprep.subr.mxu0 %v2551
      %2944 = vmatpush1.msra.mxu0 %v2550
      %2945 = vmatprep.subr.mxu0 %v2547
      %2946 = vmatpush1.msra.mxu0 %v2546
      %2947 = vmatprep.subr.mxu0 %v2543
      %2948 = vmatpush1.msra.mxu0 %v2542
      %2949 = vmatprep.subr.mxu0 %v2539
      %2950 = vmatpush1.msra.mxu0 %v2538
      %2951 = vmatprep.subr.mxu0 %v2535
      %2952 = vmatpush1.msra.mxu0 %v2534
      %2953 = vmatprep.subr.mxu0 %v2531
      %2954 = vmatpush1.msra.mxu0 %v2530
      %2955 = vmatprep.subr.mxu0 %v2527
      %2956 = vmatpush1.msra.mxu0 %v2526
      %2957 = vmatprep.subr.mxu0 %v2523
      %2958 = vmatpush1.msra.mxu0 %v2522
      %2959 = vmatprep.subr.mxu0 %v2519
      %2960 = vmatpush1.msra.mxu0 %v2518
      %2961 = vmatprep.subr.mxu0 %v2515
      %2962 = vmatpush1.msra.mxu0 %v2514
      %2963 = vmatprep.subr.mxu0 %v2639
      %2964 = vmatpush2.msra.mxu0 %v2638
      %2965 = vmatprep.subr.mxu0 %v2635
      %2966 = vmatpush2.msra.mxu0 %v2634
      %2967 = vmatprep.subr.mxu0 %v2631
      %2968 = vmatpush2.msra.mxu0 %v2630
      %2969 = vmatprep.subr.mxu0 %v2627
      %2970 = vmatpush2.msra.mxu0 %v2626
      %2971 = vmatprep.subr.mxu0 %v2623
      %2972 = vmatpush2.msra.mxu0 %v2622
      %2973 = vmatprep.subr.mxu0 %v2619
      %2974 = vmatpush2.msra.mxu0 %v2618
      %2975 = vmatprep.subr.mxu0 %v2615
      %2976 = vmatpush2.msra.mxu0 %v2614
      %2977 = vmatprep.subr.mxu0 %v2611
      %2978 = vmatpush2.msra.mxu0 %v2610
      %2979 = vmatprep.subr.mxu0 %v2607
      %2980 = vmatpush2.msra.mxu0 %v2606
      %2981 = vmatprep.subr.mxu0 %v2603
      %2982 = vmatpush2.msra.mxu0 %v2602
      %2983 = vmatprep.subr.mxu0 %v2599
      %2984 = vmatpush2.msra.mxu0 %v2598
      %2985 = vmatprep.subr.mxu0 %v2595
      %2986 = vmatpush2.msra.mxu0 %v2594
      %2987 = vmatprep.subr.mxu0 %v2591
      %2988 = vmatpush2.msra.mxu0 %v2590
      %2989 = vmatprep.subr.mxu0 %v2587
      %2990 = vmatpush2.msra.mxu0 %v2586
      %2991 = vmatprep.subr.mxu0 %v2583
      %2992 = vmatpush2.msra.mxu0 %v2582
      %2993 = vmatprep.subr.mxu0 %v2579
      %2994 = vmatpush2.msra.mxu0 %v2578
      %2995 = vmatprep.mubr.f32.mxu0 %v2508
      %2996 = vmatmul.mubr.f32.gmra.mxu0 %v2507
      %v2997 = vpop.f32.mrf.mxu0
      %v2998 = vadd.f32 %v2911, %v2997
      %v2999 = vpop.f32.mrf.mxu0
      %v3000 = vadd.f32 %v2915, %v2999
      %3001 = vdwg.mxu0
      %3002 = vmatprep.subr.mxu0 %v2703
      %3003 = vmatpush1.msra.mxu0 %v2702
      %3004 = vmatprep.subr.mxu0 %v2699
      %3005 = vmatpush1.msra.mxu0 %v2698
      %3006 = vmatprep.subr.mxu0 %v2695
      %3007 = vmatpush1.msra.mxu0 %v2694
      %3008 = vmatprep.subr.mxu0 %v2691
      %3009 = vmatpush1.msra.mxu0 %v2690
      %3010 = vmatprep.subr.mxu0 %v2687
      %3011 = vmatpush1.msra.mxu0 %v2686
      %3012 = vmatprep.subr.mxu0 %v2683
      %3013 = vmatpush1.msra.mxu0 %v2682
      %3014 = vmatprep.subr.mxu0 %v2679
      %3015 = vmatpush1.msra.mxu0 %v2678
      %3016 = vmatprep.subr.mxu0 %v2675
      %3017 = vmatpush1.msra.mxu0 %v2674
      %3018 = vmatprep.subr.mxu0 %v2671
      %3019 = vmatpush1.msra.mxu0 %v2670
      %3020 = vmatprep.subr.mxu0 %v2667
      %3021 = vmatpush1.msra.mxu0 %v2666
      %3022 = vmatprep.subr.mxu0 %v2663
      %3023 = vmatpush1.msra.mxu0 %v2662
      %3024 = vmatprep.subr.mxu0 %v2659
      %3025 = vmatpush1.msra.mxu0 %v2658
      %3026 = vmatprep.subr.mxu0 %v2655
      %3027 = vmatpush1.msra.mxu0 %v2654
      %3028 = vmatprep.subr.mxu0 %v2651
      %3029 = vmatpush1.msra.mxu0 %v2650
      %3030 = vmatprep.subr.mxu0 %v2647
      %3031 = vmatpush1.msra.mxu0 %v2646
      %3032 = vmatprep.subr.mxu0 %v2643
      %3033 = vmatpush1.msra.mxu0 %v2642
      %3034 = vmatprep.subr.mxu0 %v2767
      %3035 = vmatpush2.msra.mxu0 %v2766
      %3036 = vmatprep.subr.mxu0 %v2763
      %3037 = vmatpush2.msra.mxu0 %v2762
      %3038 = vmatprep.subr.mxu0 %v2759
      %3039 = vmatpush2.msra.mxu0 %v2758
      %3040 = vmatprep.subr.mxu0 %v2755
      %3041 = vmatpush2.msra.mxu0 %v2754
      %3042 = vmatprep.subr.mxu0 %v2751
      %3043 = vmatpush2.msra.mxu0 %v2750
      %3044 = vmatprep.subr.mxu0 %v2747
      %3045 = vmatpush2.msra.mxu0 %v2746
      %3046 = vmatprep.subr.mxu0 %v2743
      %3047 = vmatpush2.msra.mxu0 %v2742
      %3048 = vmatprep.subr.mxu0 %v2739
      %3049 = vmatpush2.msra.mxu0 %v2738
      %3050 = vmatprep.subr.mxu0 %v2735
      %3051 = vmatpush2.msra.mxu0 %v2734
      %3052 = vmatprep.subr.mxu0 %v2731
      %3053 = vmatpush2.msra.mxu0 %v2730
      %3054 = vmatprep.subr.mxu0 %v2727
      %3055 = vmatpush2.msra.mxu0 %v2726
      %3056 = vmatprep.subr.mxu0 %v2723
      %3057 = vmatpush2.msra.mxu0 %v2722
      %3058 = vmatprep.subr.mxu0 %v2719
      %3059 = vmatpush2.msra.mxu0 %v2718
      %3060 = vmatprep.subr.mxu0 %v2715
      %3061 = vmatpush2.msra.mxu0 %v2714
      %3062 = vmatprep.subr.mxu0 %v2711
      %3063 = vmatpush2.msra.mxu0 %v2710
      %3064 = vmatprep.subr.mxu0 %v2707
      %3065 = vmatpush2.msra.mxu0 %v2706
      %3066 = vmatprep.mubr.f32.mxu0 %v2510
      %3067 = vmatmul.mubr.f32.gmra.mxu0 %v2509
      %v3068 = vpop.f32.mrf.mxu0
      %v3069 = vadd.f32 %v2998, %v3068
      %v3070 = vpop.f32.mrf.mxu0
      %v3071 = vadd.f32 %v3000, %v3070
      %3072 = vdwg.mxu0
      %3073 = vmatprep.subr.mxu0 %v2831
      %3074 = vmatpush1.msra.mxu0 %v2830
      %3075 = vmatprep.subr.mxu0 %v2827
      %3076 = vmatpush1.msra.mxu0 %v2826
      %3077 = vmatprep.subr.mxu0 %v2823
      %3078 = vmatpush1.msra.mxu0 %v2822
      %3079 = vmatprep.subr.mxu0 %v2819
      %3080 = vmatpush1.msra.mxu0 %v2818
      %3081 = vmatprep.subr.mxu0 %v2815
      %3082 = vmatpush1.msra.mxu0 %v2814
      %3083 = vmatprep.subr.mxu0 %v2811
      %3084 = vmatpush1.msra.mxu0 %v2810
      %3085 = vmatprep.subr.mxu0 %v2807
      %3086 = vmatpush1.msra.mxu0 %v2806
      %3087 = vmatprep.subr.mxu0 %v2803
      %3088 = vmatpush1.msra.mxu0 %v2802
      %3089 = vmatprep.subr.mxu0 %v2799
      %3090 = vmatpush1.msra.mxu0 %v2798
      %3091 = vmatprep.subr.mxu0 %v2795
      %3092 = vmatpush1.msra.mxu0 %v2794
      %3093 = vmatprep.subr.mxu0 %v2791
      %3094 = vmatpush1.msra.mxu0 %v2790
      %3095 = vmatprep.subr.mxu0 %v2787
      %3096 = vmatpush1.msra.mxu0 %v2786
      %3097 = vmatprep.subr.mxu0 %v2783
      %3098 = vmatpush1.msra.mxu0 %v2782
      %3099 = vmatprep.subr.mxu0 %v2779
      %3100 = vmatpush1.msra.mxu0 %v2778
      %3101 = vmatprep.subr.mxu0 %v2775
      %3102 = vmatpush1.msra.mxu0 %v2774
      %3103 = vmatprep.subr.mxu0 %v2771
      %3104 = vmatpush1.msra.mxu0 %v2770
      %3105 = vmatprep.subr.mxu0 %v2895
      %3106 = vmatpush2.msra.mxu0 %v2894
      %3107 = vmatprep.subr.mxu0 %v2891
      %3108 = vmatpush2.msra.mxu0 %v2890
      %3109 = vmatprep.subr.mxu0 %v2887
      %3110 = vmatpush2.msra.mxu0 %v2886
      %3111 = vmatprep.subr.mxu0 %v2883
      %3112 = vmatpush2.msra.mxu0 %v2882
      %3113 = vmatprep.subr.mxu0 %v2879
      %3114 = vmatpush2.msra.mxu0 %v2878
      %3115 = vmatprep.subr.mxu0 %v2875
      %3116 = vmatpush2.msra.mxu0 %v2874
      %3117 = vmatprep.subr.mxu0 %v2871
      %3118 = vmatpush2.msra.mxu0 %v2870
      %3119 = vmatprep.subr.mxu0 %v2867
      %3120 = vmatpush2.msra.mxu0 %v2866
      %3121 = vmatprep.subr.mxu0 %v2863
      %3122 = vmatpush2.msra.mxu0 %v2862
      %3123 = vmatprep.subr.mxu0 %v2859
      %3124 = vmatpush2.msra.mxu0 %v2858
      %3125 = vmatprep.subr.mxu0 %v2855
      %3126 = vmatpush2.msra.mxu0 %v2854
      %3127 = vmatprep.subr.mxu0 %v2851
      %3128 = vmatpush2.msra.mxu0 %v2850
      %3129 = vmatprep.subr.mxu0 %v2847
      %3130 = vmatpush2.msra.mxu0 %v2846
      %3131 = vmatprep.subr.mxu0 %v2843
      %3132 = vmatpush2.msra.mxu0 %v2842
      %3133 = vmatprep.subr.mxu0 %v2839
      %3134 = vmatpush2.msra.mxu0 %v2838
      %3135 = vmatprep.subr.mxu0 %v2835
      %3136 = vmatpush2.msra.mxu0 %v2834
      %3137 = vmatprep.mubr.f32.mxu0 %v2512
      %3138 = vmatmul.mubr.f32.gmra.mxu0 %v2511
      %v3139 = vpop.f32.mrf.mxu0
      %v3140 = vadd.f32 %v3069, %v3139
      %v3141 = vpop.f32.mrf.mxu0
      %v3142 = vadd.f32 %v3071, %v3141
      %3143 = vdwg.mxu0
      %3144 = vmatprep.subr.mxu0 0.0
      %3145 = vmatpush1.msra.mxu0 0.0
      %3146 = vmatprep.subr.mxu0 0.0
      %3147 = vmatpush1.msra.mxu0 0.0
      %3148 = vmatprep.subr.mxu0 0.0
      %3149 = vmatpush1.msra.mxu0 0.0
      %3150 = vmatprep.subr.mxu0 0.0
      %3151 = vmatpush1.msra.mxu0 0.0
      %3152 = vmatprep.subr.mxu0 0.0
      %3153 = vmatpush1.msra.mxu0 0.0
      %3154 = vmatprep.subr.mxu0 0.0
      %3155 = vmatpush1.msra.mxu0 0.0
      %3156 = vmatprep.subr.mxu0 0.0
      %3157 = vmatpush1.msra.mxu0 0.0
      %3158 = vmatprep.subr.mxu0 0.0
      %3159 = vmatpush1.msra.mxu0 0.0
      %3160 = vmatprep.subr.mxu0 0.0
      %3161 = vmatpush1.msra.mxu0 0.0
      %3162 = vmatprep.subr.mxu0 0.0
      %3163 = vmatpush1.msra.mxu0 0.0
      %3164 = vmatprep.subr.mxu0 0.0
      %3165 = vmatpush1.msra.mxu0 0.0
      %3166 = vmatprep.subr.mxu0 0.0
      %3167 = vmatpush1.msra.mxu0 0.0
      %3168 = vmatprep.subr.mxu0 0.0
      %3169 = vmatpush1.msra.mxu0 0.0
      %3170 = vmatprep.subr.mxu0 0.0
      %3171 = vmatpush1.msra.mxu0 0.0
      %3172 = vmatprep.subr.mxu0 %v2903
      %3173 = vmatpush1.msra.mxu0 %v2902
      %3174 = vmatprep.subr.mxu0 %v2899
      %3175 = vmatpush1.msra.mxu0 %v2898
      %3176 = vmatprep.subr.mxu0 0.0
      %3177 = vmatpush2.msra.mxu0 0.0
      %3178 = vmatprep.subr.mxu0 0.0
      %3179 = vmatpush2.msra.mxu0 0.0
      %3180 = vmatprep.subr.mxu0 0.0
      %3181 = vmatpush2.msra.mxu0 0.0
      %3182 = vmatprep.subr.mxu0 0.0
      %3183 = vmatpush2.msra.mxu0 0.0
      %3184 = vmatprep.subr.mxu0 0.0
      %3185 = vmatpush2.msra.mxu0 0.0
      %3186 = vmatprep.subr.mxu0 0.0
      %3187 = vmatpush2.msra.mxu0 0.0
      %3188 = vmatprep.subr.mxu0 0.0
      %3189 = vmatpush2.msra.mxu0 0.0
      %3190 = vmatprep.subr.mxu0 0.0
      %3191 = vmatpush2.msra.mxu0 0.0
      %3192 = vmatprep.subr.mxu0 0.0
      %3193 = vmatpush2.msra.mxu0 0.0
      %3194 = vmatprep.subr.mxu0 0.0
      %3195 = vmatpush2.msra.mxu0 0.0
      %3196 = vmatprep.subr.mxu0 0.0
      %3197 = vmatpush2.msra.mxu0 0.0
      %3198 = vmatprep.subr.mxu0 0.0
      %3199 = vmatpush2.msra.mxu0 0.0
      %3200 = vmatprep.subr.mxu0 0.0
      %3201 = vmatpush2.msra.mxu0 0.0
      %3202 = vmatprep.subr.mxu0 0.0
      %3203 = vmatpush2.msra.mxu0 0.0
      %3204 = vmatprep.subr.mxu0 0.0
      %3205 = vmatpush2.msra.mxu0 0.0
      %3206 = vmatprep.subr.mxu0 0.0
      %3207 = vmatpush2.msra.mxu0 0.0
      %3208 = vmatprep.mubr.f32.mxu0 0.0
      %3209 = vmatmul.mubr.f32.gmra.mxu0 %v2929
      %v3210 = vpop.f32.mrf.mxu0
      %v3211 = vadd.f32 %v3140, %v3210
      %v3212 = vpop.f32.mrf.mxu0
      %v3213 = vadd.f32 %v3142, %v3212
      %3214 = vdwg.mxu0
      %3215 = vmatprep.subr.mxu0 %v2577
      %3216 = vmatpush1.msra.mxu0 %v2576
      %3217 = vmatprep.subr.mxu0 %v2573
      %3218 = vmatpush1.msra.mxu0 %v2572
      %3219 = vmatprep.subr.mxu0 %v2569
      %3220 = vmatpush1.msra.mxu0 %v2568
      %3221 = vmatprep.subr.mxu0 %v2565
      %3222 = vmatpush1.msra.mxu0 %v2564
      %3223 = vmatprep.subr.mxu0 %v2561
      %3224 = vmatpush1.msra.mxu0 %v2560
      %3225 = vmatprep.subr.mxu0 %v2557
      %3226 = vmatpush1.msra.mxu0 %v2556
      %3227 = vmatprep.subr.mxu0 %v2553
      %3228 = vmatpush1.msra.mxu0 %v2552
      %3229 = vmatprep.subr.mxu0 %v2549
      %3230 = vmatpush1.msra.mxu0 %v2548
      %3231 = vmatprep.subr.mxu0 %v2545
      %3232 = vmatpush1.msra.mxu0 %v2544
      %3233 = vmatprep.subr.mxu0 %v2541
      %3234 = vmatpush1.msra.mxu0 %v2540
      %3235 = vmatprep.subr.mxu0 %v2537
      %3236 = vmatpush1.msra.mxu0 %v2536
      %3237 = vmatprep.subr.mxu0 %v2533
      %3238 = vmatpush1.msra.mxu0 %v2532
      %3239 = vmatprep.subr.mxu0 %v2529
      %3240 = vmatpush1.msra.mxu0 %v2528
      %3241 = vmatprep.subr.mxu0 %v2525
      %3242 = vmatpush1.msra.mxu0 %v2524
      %3243 = vmatprep.subr.mxu0 %v2521
      %3244 = vmatpush1.msra.mxu0 %v2520
      %3245 = vmatprep.subr.mxu0 %v2517
      %3246 = vmatpush1.msra.mxu0 %v2516
      %3247 = vmatprep.subr.mxu0 %v2641
      %3248 = vmatpush2.msra.mxu0 %v2640
      %3249 = vmatprep.subr.mxu0 %v2637
      %3250 = vmatpush2.msra.mxu0 %v2636
      %3251 = vmatprep.subr.mxu0 %v2633
      %3252 = vmatpush2.msra.mxu0 %v2632
      %3253 = vmatprep.subr.mxu0 %v2629
      %3254 = vmatpush2.msra.mxu0 %v2628
      %3255 = vmatprep.subr.mxu0 %v2625
      %3256 = vmatpush2.msra.mxu0 %v2624
      %3257 = vmatprep.subr.mxu0 %v2621
      %3258 = vmatpush2.msra.mxu0 %v2620
      %3259 = vmatprep.subr.mxu0 %v2617
      %3260 = vmatpush2.msra.mxu0 %v2616
      %3261 = vmatprep.subr.mxu0 %v2613
      %3262 = vmatpush2.msra.mxu0 %v2612
      %3263 = vmatprep.subr.mxu0 %v2609
      %3264 = vmatpush2.msra.mxu0 %v2608
      %3265 = vmatprep.subr.mxu0 %v2605
      %3266 = vmatpush2.msra.mxu0 %v2604
      %3267 = vmatprep.subr.mxu0 %v2601
      %3268 = vmatpush2.msra.mxu0 %v2600
      %3269 = vmatprep.subr.mxu0 %v2597
      %3270 = vmatpush2.msra.mxu0 %v2596
      %3271 = vmatprep.subr.mxu0 %v2593
      %3272 = vmatpush2.msra.mxu0 %v2592
      %3273 = vmatprep.subr.mxu0 %v2589
      %3274 = vmatpush2.msra.mxu0 %v2588
      %3275 = vmatprep.subr.mxu0 %v2585
      %3276 = vmatpush2.msra.mxu0 %v2584
      %3277 = vmatprep.subr.mxu0 %v2581
      %3278 = vmatpush2.msra.mxu0 %v2580
      %3279 = vmatprep.mubr.f32.mxu0 %v2508
      %3280 = vmatmul.mubr.f32.gmra.mxu0 %v2507
      %v3281 = vpop.f32.mrf.mxu0
      %v3282 = vadd.f32 %v2919, %v3281
      %v3283 = vpop.f32.mrf.mxu0
      %v3284 = vadd.f32 %v2923, %v3283
      %3285 = vdwg.mxu0
      %3286 = vmatprep.subr.mxu0 %v2705
      %3287 = vmatpush1.msra.mxu0 %v2704
      %3288 = vmatprep.subr.mxu0 %v2701
      %3289 = vmatpush1.msra.mxu0 %v2700
      %3290 = vmatprep.subr.mxu0 %v2697
      %3291 = vmatpush1.msra.mxu0 %v2696
      %3292 = vmatprep.subr.mxu0 %v2693
      %3293 = vmatpush1.msra.mxu0 %v2692
      %3294 = vmatprep.subr.mxu0 %v2689
      %3295 = vmatpush1.msra.mxu0 %v2688
      %3296 = vmatprep.subr.mxu0 %v2685
      %3297 = vmatpush1.msra.mxu0 %v2684
      %3298 = vmatprep.subr.mxu0 %v2681
      %3299 = vmatpush1.msra.mxu0 %v2680
      %3300 = vmatprep.subr.mxu0 %v2677
      %3301 = vmatpush1.msra.mxu0 %v2676
      %3302 = vmatprep.subr.mxu0 %v2673
      %3303 = vmatpush1.msra.mxu0 %v2672
      %3304 = vmatprep.subr.mxu0 %v2669
      %3305 = vmatpush1.msra.mxu0 %v2668
      %3306 = vmatprep.subr.mxu0 %v2665
      %3307 = vmatpush1.msra.mxu0 %v2664
      %3308 = vmatprep.subr.mxu0 %v2661
      %3309 = vmatpush1.msra.mxu0 %v2660
      %3310 = vmatprep.subr.mxu0 %v2657
      %3311 = vmatpush1.msra.mxu0 %v2656
      %3312 = vmatprep.subr.mxu0 %v2653
      %3313 = vmatpush1.msra.mxu0 %v2652
      %3314 = vmatprep.subr.mxu0 %v2649
      %3315 = vmatpush1.msra.mxu0 %v2648
      %3316 = vmatprep.subr.mxu0 %v2645
      %3317 = vmatpush1.msra.mxu0 %v2644
      %3318 = vmatprep.subr.mxu0 %v2769
      %3319 = vmatpush2.msra.mxu0 %v2768
      %3320 = vmatprep.subr.mxu0 %v2765
      %3321 = vmatpush2.msra.mxu0 %v2764
      %3322 = vmatprep.subr.mxu0 %v2761
      %3323 = vmatpush2.msra.mxu0 %v2760
      %3324 = vmatprep.subr.mxu0 %v2757
      %3325 = vmatpush2.msra.mxu0 %v2756
      %3326 = vmatprep.subr.mxu0 %v2753
      %3327 = vmatpush2.msra.mxu0 %v2752
      %3328 = vmatprep.subr.mxu0 %v2749
      %3329 = vmatpush2.msra.mxu0 %v2748
      %3330 = vmatprep.subr.mxu0 %v2745
      %3331 = vmatpush2.msra.mxu0 %v2744
      %3332 = vmatprep.subr.mxu0 %v2741
      %3333 = vmatpush2.msra.mxu0 %v2740
      %3334 = vmatprep.subr.mxu0 %v2737
      %3335 = vmatpush2.msra.mxu0 %v2736
      %3336 = vmatprep.subr.mxu0 %v2733
      %3337 = vmatpush2.msra.mxu0 %v2732
      %3338 = vmatprep.subr.mxu0 %v2729
      %3339 = vmatpush2.msra.mxu0 %v2728
      %3340 = vmatprep.subr.mxu0 %v2725
      %3341 = vmatpush2.msra.mxu0 %v2724
      %3342 = vmatprep.subr.mxu0 %v2721
      %3343 = vmatpush2.msra.mxu0 %v2720
      %3344 = vmatprep.subr.mxu0 %v2717
      %3345 = vmatpush2.msra.mxu0 %v2716
      %3346 = vmatprep.subr.mxu0 %v2713
      %3347 = vmatpush2.msra.mxu0 %v2712
      %3348 = vmatprep.subr.mxu0 %v2709
      %3349 = vmatpush2.msra.mxu0 %v2708
      %3350 = vmatprep.mubr.f32.mxu0 %v2510
      %3351 = vmatmul.mubr.f32.gmra.mxu0 %v2509
      %v3352 = vpop.f32.mrf.mxu0
      %v3353 = vadd.f32 %v3282, %v3352
      %v3354 = vpop.f32.mrf.mxu0
      %v3355 = vadd.f32 %v3284, %v3354
      %3356 = vdwg.mxu0
      %3357 = vmatprep.subr.mxu0 %v2833
      %3358 = vmatpush1.msra.mxu0 %v2832
      %3359 = vmatprep.subr.mxu0 %v2829
      %3360 = vmatpush1.msra.mxu0 %v2828
      %3361 = vmatprep.subr.mxu0 %v2825
      %3362 = vmatpush1.msra.mxu0 %v2824
      %3363 = vmatprep.subr.mxu0 %v2821
      %3364 = vmatpush1.msra.mxu0 %v2820
      %3365 = vmatprep.subr.mxu0 %v2817
      %3366 = vmatpush1.msra.mxu0 %v2816
      %3367 = vmatprep.subr.mxu0 %v2813
      %3368 = vmatpush1.msra.mxu0 %v2812
      %3369 = vmatprep.subr.mxu0 %v2809
      %3370 = vmatpush1.msra.mxu0 %v2808
      %3371 = vmatprep.subr.mxu0 %v2805
      %3372 = vmatpush1.msra.mxu0 %v2804
      %3373 = vmatprep.subr.mxu0 %v2801
      %3374 = vmatpush1.msra.mxu0 %v2800
      %3375 = vmatprep.subr.mxu0 %v2797
      %3376 = vmatpush1.msra.mxu0 %v2796
      %3377 = vmatprep.subr.mxu0 %v2793
      %3378 = vmatpush1.msra.mxu0 %v2792
      %3379 = vmatprep.subr.mxu0 %v2789
      %3380 = vmatpush1.msra.mxu0 %v2788
      %3381 = vmatprep.subr.mxu0 %v2785
      %3382 = vmatpush1.msra.mxu0 %v2784
      %3383 = vmatprep.subr.mxu0 %v2781
      %3384 = vmatpush1.msra.mxu0 %v2780
      %3385 = vmatprep.subr.mxu0 %v2777
      %3386 = vmatpush1.msra.mxu0 %v2776
      %3387 = vmatprep.subr.mxu0 %v2773
      %3388 = vmatpush1.msra.mxu0 %v2772
      %3389 = vmatprep.subr.mxu0 %v2897
      %3390 = vmatpush2.msra.mxu0 %v2896
      %3391 = vmatprep.subr.mxu0 %v2893
      %3392 = vmatpush2.msra.mxu0 %v2892
      %3393 = vmatprep.subr.mxu0 %v2889
      %3394 = vmatpush2.msra.mxu0 %v2888
      %3395 = vmatprep.subr.mxu0 %v2885
      %3396 = vmatpush2.msra.mxu0 %v2884
      %3397 = vmatprep.subr.mxu0 %v2881
      %3398 = vmatpush2.msra.mxu0 %v2880
      %3399 = vmatprep.subr.mxu0 %v2877
      %3400 = vmatpush2.msra.mxu0 %v2876
      %3401 = vmatprep.subr.mxu0 %v2873
      %3402 = vmatpush2.msra.mxu0 %v2872
      %3403 = vmatprep.subr.mxu0 %v2869
      %3404 = vmatpush2.msra.mxu0 %v2868
      %3405 = vmatprep.subr.mxu0 %v2865
      %3406 = vmatpush2.msra.mxu0 %v2864
      %3407 = vmatprep.subr.mxu0 %v2861
      %3408 = vmatpush2.msra.mxu0 %v2860
      %3409 = vmatprep.subr.mxu0 %v2857
      %3410 = vmatpush2.msra.mxu0 %v2856
      %3411 = vmatprep.subr.mxu0 %v2853
      %3412 = vmatpush2.msra.mxu0 %v2852
      %3413 = vmatprep.subr.mxu0 %v2849
      %3414 = vmatpush2.msra.mxu0 %v2848
      %3415 = vmatprep.subr.mxu0 %v2845
      %3416 = vmatpush2.msra.mxu0 %v2844
      %3417 = vmatprep.subr.mxu0 %v2841
      %3418 = vmatpush2.msra.mxu0 %v2840
      %3419 = vmatprep.subr.mxu0 %v2837
      %3420 = vmatpush2.msra.mxu0 %v2836
      %3421 = vmatprep.mubr.f32.mxu0 %v2512
      %3422 = vmatmul.mubr.f32.gmra.mxu0 %v2511
      %v3423 = vpop.f32.mrf.mxu0
      %v3424 = vadd.f32 %v3353, %v3423
      %v3425 = vpop.f32.mrf.mxu0
      %v3426 = vadd.f32 %v3355, %v3425
      %3427 = vdwg.mxu0
      %3428 = vmatprep.subr.mxu0 0.0
      %3429 = vmatpush1.msra.mxu0 0.0
      %3430 = vmatprep.subr.mxu0 0.0
      %3431 = vmatpush1.msra.mxu0 0.0
      %3432 = vmatprep.subr.mxu0 0.0
      %3433 = vmatpush1.msra.mxu0 0.0
      %3434 = vmatprep.subr.mxu0 0.0
      %3435 = vmatpush1.msra.mxu0 0.0
      %3436 = vmatprep.subr.mxu0 0.0
      %3437 = vmatpush1.msra.mxu0 0.0
      %3438 = vmatprep.subr.mxu0 0.0
      %3439 = vmatpush1.msra.mxu0 0.0
      %3440 = vmatprep.subr.mxu0 0.0
      %3441 = vmatpush1.msra.mxu0 0.0
      %3442 = vmatprep.subr.mxu0 0.0
      %3443 = vmatpush1.msra.mxu0 0.0
      %3444 = vmatprep.subr.mxu0 0.0
      %3445 = vmatpush1.msra.mxu0 0.0
      %3446 = vmatprep.subr.mxu0 0.0
      %3447 = vmatpush1.msra.mxu0 0.0
      %3448 = vmatprep.subr.mxu0 0.0
      %3449 = vmatpush1.msra.mxu0 0.0
      %3450 = vmatprep.subr.mxu0 0.0
      %3451 = vmatpush1.msra.mxu0 0.0
      %3452 = vmatprep.subr.mxu0 0.0
      %3453 = vmatpush1.msra.mxu0 0.0
      %3454 = vmatprep.subr.mxu0 0.0
      %3455 = vmatpush1.msra.mxu0 0.0
      %3456 = vmatprep.subr.mxu0 %v2905
      %3457 = vmatpush1.msra.mxu0 %v2904
      %3458 = vmatprep.subr.mxu0 %v2901
      %3459 = vmatpush1.msra.mxu0 %v2900
      %3460 = vmatprep.subr.mxu0 0.0
      %3461 = vmatpush2.msra.mxu0 0.0
      %3462 = vmatprep.subr.mxu0 0.0
      %3463 = vmatpush2.msra.mxu0 0.0
      %3464 = vmatprep.subr.mxu0 0.0
      %3465 = vmatpush2.msra.mxu0 0.0
      %3466 = vmatprep.subr.mxu0 0.0
      %3467 = vmatpush2.msra.mxu0 0.0
      %3468 = vmatprep.subr.mxu0 0.0
      %3469 = vmatpush2.msra.mxu0 0.0
      %3470 = vmatprep.subr.mxu0 0.0
      %3471 = vmatpush2.msra.mxu0 0.0
      %3472 = vmatprep.subr.mxu0 0.0
      %3473 = vmatpush2.msra.mxu0 0.0
      %3474 = vmatprep.subr.mxu0 0.0
      %3475 = vmatpush2.msra.mxu0 0.0
      %3476 = vmatprep.subr.mxu0 0.0
      %3477 = vmatpush2.msra.mxu0 0.0
      %3478 = vmatprep.subr.mxu0 0.0
      %3479 = vmatpush2.msra.mxu0 0.0
      %3480 = vmatprep.subr.mxu0 0.0
      %3481 = vmatpush2.msra.mxu0 0.0
      %3482 = vmatprep.subr.mxu0 0.0
      %3483 = vmatpush2.msra.mxu0 0.0
      %3484 = vmatprep.subr.mxu0 0.0
      %3485 = vmatpush2.msra.mxu0 0.0
      %3486 = vmatprep.subr.mxu0 0.0
      %3487 = vmatpush2.msra.mxu0 0.0
      %3488 = vmatprep.subr.mxu0 0.0
      %3489 = vmatpush2.msra.mxu0 0.0
      %3490 = vmatprep.subr.mxu0 0.0
      %3491 = vmatpush2.msra.mxu0 0.0
      %3492 = vmatprep.mubr.f32.mxu0 0.0
      %3493 = vmatmul.mubr.f32.gmra.mxu0 %v2929
      %v3494 = vpop.f32.mrf.mxu0
      %v3495 = vadd.f32 %v3424, %v3494
      %v3496 = vpop.f32.mrf.mxu0
      %v3497 = vadd.f32 %v3426, %v3496
      %3498 = vdwg.mxu0
      %v3499 = vadd.f32 %v3211, %v3213
      %v3500 = vadd.f32 %v3499, %v3495
      %vm3501 = vcmask 64512
      %v3502 = vsel %vm3501, %v3497, 0.0
      %v3503 = vadd.f32 %v3500, %v3502
      %3504 = vadd.xlane.f32.xlu0 %v3503
      %v3505 = vpop.xlane.xlu0 %3504
      %v3506 = vrcp.pop 392.0
      %v3507 = vmul.f32 %v3505, %v3506
      %v3508 = vsub.f32 %v3211, %v3507
      %v3509 = vsub.f32 %v3213, %v3507
      %v3510 = vsub.f32 %v3495, %v3507
      %v3511 = vsub.f32 %v3497, %v3507
      %v3512 = vmul.f32 %v3508, %v3508
      %v3513 = vmul.f32 %v3509, %v3509
      %v3514 = vmul.f32 %v3510, %v3510
      %v3515 = vmul.f32 %v3511, %v3511
      %v3516 = vadd.f32 %v3512, %v3513
      %v3517 = vadd.f32 %v3516, %v3514
      %v3518 = vsel %vm3501, %v3515, 0.0
      %v3519 = vadd.f32 %v3517, %v3518
      %3520 = vadd.xlane.f32.xlu0 %v3519
      %v3521 = vpop.xlane.xlu0 %3520
      %v3522 = vmul.f32 %v3521, %v3506
      %v3523 = vadd.f32 %v3522, 1e-05
      %v3524 = vrsqrt.pop %v3523
      %v3525 = vmul.f32 %v3508, %v3524
      %v3526 = vmul.f32 %v3509, %v3524
      %v3527 = vmul.f32 %v3510, %v3524
      %v3528 = vmul.f32 %v3511, %v3524
      %v3529 = vld [vmem:[%s7] sm:$0xf]
      %v3531 = vlaneseq
      %v3532 = vshrl.u32 %v3531, 7
      %v3533 = vsub.s32 0, %v3532
      %v3534 = vrot.slane %v3529, %v3533
      %v3535 = vlaneseq
      %v3536 = vshrl.u32 %v3535, 7
      %v3537 = vsub.s32 1, %v3536
      %v3538 = vrot.slane %v3529, %v3537
      %v3539 = vlaneseq
      %v3540 = vshrl.u32 %v3539, 7
      %v3541 = vsub.s32 2, %v3540
      %v3542 = vrot.slane %v3529, %v3541
      %v3543 = vlaneseq
      %v3544 = vshrl.u32 %v3543, 7
      %v3545 = vsub.s32 3, %v3544
      %v3546 = vrot.slane %v3529, %v3545
      %v3551 = vmul.f32 %v3525, %v3534
      %v3552 = vmul.f32 %v3526, %v3538
      %v3553 = vmul.f32 %v3527, %v3542
      %v3554 = vmul.f32 %v3528, %v3546
      %v3555 = vld [vmem:[%s8] sm:$0xf]
      %v3557 = vlaneseq
      %v3558 = vshrl.u32 %v3557, 7
      %v3559 = vsub.s32 0, %v3558
      %v3560 = vrot.slane %v3555, %v3559
      %v3561 = vlaneseq
      %v3562 = vshrl.u32 %v3561, 7
      %v3563 = vsub.s32 1, %v3562
      %v3564 = vrot.slane %v3555, %v3563
      %v3565 = vlaneseq
      %v3566 = vshrl.u32 %v3565, 7
      %v3567 = vsub.s32 2, %v3566
      %v3568 = vrot.slane %v3555, %v3567
      %v3569 = vlaneseq
      %v3570 = vshrl.u32 %v3569, 7
      %v3571 = vsub.s32 3, %v3570
      %v3572 = vrot.slane %v3555, %v3571
      %v3577 = vadd.f32 %v3551, %v3560
      %v3578 = vadd.f32 %v3552, %v3564
      %v3579 = vadd.f32 %v3553, %v3568
      %v3580 = vadd.f32 %v3554, %v3572
      %vm3581 = vcmp.ge.f32.partialorder %v3577, 0.0
      %vm3582 = vcmp.ge.f32.partialorder %v3578, 0.0
      %vm3583 = vcmp.ge.f32.partialorder %v3579, 0.0
      %vm3584 = vcmp.ge.f32.partialorder %v3580, 0.0
      %v3585 = vmul.f32 %v3577, 0.2
      %v3586 = vmul.f32 %v3578, 0.2
      %v3587 = vmul.f32 %v3579, 0.2
      %v3588 = vmul.f32 %v3580, 0.2
      %v3589 = vsel %vm3581, %v3577, %v3585
      %v3590 = vsel %vm3582, %v3578, %v3586
      %v3591 = vsel %vm3583, %v3579, %v3587
      %v3592 = vsel %vm3584, %v3580, %v3588
      %v3593 = vld [vmem:[%s9] sm:$0xff]
      %v3594 = vld [vmem:[%s9 + $0x8] sm:$0xff]
      %v3595 = vld [vmem:[%s9 + $0x10] sm:$0xff]
      %v3596 = vld [vmem:[%s9 + $0x18] sm:$0xff]
      %v3597 = vld [vmem:[%s9 + $0x20] sm:$0xff]
      %v3598 = vld [vmem:[%s9 + $0x28] sm:$0xff]
      %v3599 = vld [vmem:[%s9 + $0x30] sm:$0xff]
      %v3600 = vld [vmem:[%s9 + $0x38] sm:$0xff]
      %v3601 = vld [vmem:[%s9 + $0x40] sm:$0xff]
      %v3602 = vld [vmem:[%s9 + $0x48] sm:$0xff]
      %v3603 = vld [vmem:[%s9 + $0x50] sm:$0xff]
      %v3604 = vld [vmem:[%s9 + $0x58] sm:$0xff]
      %v3605 = vld [vmem:[%s9 + $0x60] sm:$0xff]
      %v3606 = vld [vmem:[%s9 + $0x68] sm:$0xff]
      %v3607 = vld [vmem:[%s9 + $0x70] sm:$0xff]
      %v3608 = vld [vmem:[%s9 + $0x78] sm:$0xff]
      %v3609 = vld [vmem:[%s9 + $0x80] sm:$0xff]
      %v3610 = vld [vmem:[%s9 + $0x88] sm:$0xff]
      %v3611 = vld [vmem:[%s9 + $0x90] sm:$0xff]
      %v3612 = vld [vmem:[%s9 + $0x98] sm:$0xff]
      %v3613 = vld [vmem:[%s9 + $0xa0] sm:$0xff]
      %v3614 = vld [vmem:[%s9 + $0xa8] sm:$0xff]
      %v3615 = vld [vmem:[%s9 + $0xb0] sm:$0xff]
      %v3616 = vld [vmem:[%s9 + $0xb8] sm:$0xff]
      %v3617 = vld [vmem:[%s9 + $0xc0] sm:$0xff]
      %v3618 = vld [vmem:[%s9 + $0xc8] sm:$0xff]
      %v3619 = vld [vmem:[%s9 + $0xd0] sm:$0xff]
      %v3620 = vld [vmem:[%s9 + $0xd8] sm:$0xff]
      %v3621 = vld [vmem:[%s9 + $0xe0] sm:$0xff]
      %v3622 = vld [vmem:[%s9 + $0xe8] sm:$0xff]
      %v3623 = vld [vmem:[%s9 + $0xf0] sm:$0xff]
      %v3624 = vld [vmem:[%s9 + $0xf8] sm:$0xff]
      %v3625 = vld [vmem:[%s9 + $0x100] sm:$0xff]
      %v3626 = vld [vmem:[%s9 + $0x108] sm:$0xff]
      %v3627 = vld [vmem:[%s9 + $0x110] sm:$0xff]
      %v3628 = vld [vmem:[%s9 + $0x118] sm:$0xff]
      %v3629 = vld [vmem:[%s9 + $0x120] sm:$0xff]
      %v3630 = vld [vmem:[%s9 + $0x128] sm:$0xff]
      %v3631 = vld [vmem:[%s9 + $0x130] sm:$0xff]
      %v3632 = vld [vmem:[%s9 + $0x138] sm:$0xff]
      %v3633 = vld [vmem:[%s9 + $0x140] sm:$0xff]
      %v3634 = vld [vmem:[%s9 + $0x148] sm:$0xff]
      %v3635 = vld [vmem:[%s9 + $0x150] sm:$0xff]
      %v3636 = vld [vmem:[%s9 + $0x158] sm:$0xff]
      %v3637 = vld [vmem:[%s9 + $0x160] sm:$0xff]
      %v3638 = vld [vmem:[%s9 + $0x168] sm:$0xff]
      %v3639 = vld [vmem:[%s9 + $0x170] sm:$0xff]
      %v3640 = vld [vmem:[%s9 + $0x178] sm:$0xff]
      %v3641 = vld [vmem:[%s9 + $0x180] sm:$0xff]
      %v3642 = vld [vmem:[%s10] sm:$0x1]
      %v3644 = vlaneseq
      %v3645 = vshrl.u32 %v3644, 7
      %v3646 = vsub.s32 0, %v3645
      %v3647 = vrot.slane %v3642, %v3646
      %v3650 = vsel %vm3501, %v3592, 0
      %3652 = vmatprep.subr.mxu0 0.0
      %3653 = vmatpush1.msra.mxu0 %v3608
      %3654 = vmatprep.subr.mxu0 0.0
      %3655 = vmatpush1.msra.mxu0 %v3607
      %3656 = vmatprep.subr.mxu0 0.0
      %3657 = vmatpush1.msra.mxu0 %v3606
      %3658 = vmatprep.subr.mxu0 0.0
      %3659 = vmatpush1.msra.mxu0 %v3605
      %3660 = vmatprep.subr.mxu0 0.0
      %3661 = vmatpush1.msra.mxu0 %v3604
      %3662 = vmatprep.subr.mxu0 0.0
      %3663 = vmatpush1.msra.mxu0 %v3603
      %3664 = vmatprep.subr.mxu0 0.0
      %3665 = vmatpush1.msra.mxu0 %v3602
      %3666 = vmatprep.subr.mxu0 0.0
      %3667 = vmatpush1.msra.mxu0 %v3601
      %3668 = vmatprep.subr.mxu0 0.0
      %3669 = vmatpush1.msra.mxu0 %v3600
      %3670 = vmatprep.subr.mxu0 0.0
      %3671 = vmatpush1.msra.mxu0 %v3599
      %3672 = vmatprep.subr.mxu0 0.0
      %3673 = vmatpush1.msra.mxu0 %v3598
      %3674 = vmatprep.subr.mxu0 0.0
      %3675 = vmatpush1.msra.mxu0 %v3597
      %3676 = vmatprep.subr.mxu0 0.0
      %3677 = vmatpush1.msra.mxu0 %v3596
      %3678 = vmatprep.subr.mxu0 0.0
      %3679 = vmatpush1.msra.mxu0 %v3595
      %3680 = vmatprep.subr.mxu0 0.0
      %3681 = vmatpush1.msra.mxu0 %v3594
      %3682 = vmatprep.subr.mxu0 0.0
      %3683 = vmatpush1.msra.mxu0 %v3593
      %3684 = vmatprep.subr.mxu0 0.0
      %3685 = vmatpush2.msra.mxu0 %v3624
      %3686 = vmatprep.subr.mxu0 0.0
      %3687 = vmatpush2.msra.mxu0 %v3623
      %3688 = vmatprep.subr.mxu0 0.0
      %3689 = vmatpush2.msra.mxu0 %v3622
      %3690 = vmatprep.subr.mxu0 0.0
      %3691 = vmatpush2.msra.mxu0 %v3621
      %3692 = vmatprep.subr.mxu0 0.0
      %3693 = vmatpush2.msra.mxu0 %v3620
      %3694 = vmatprep.subr.mxu0 0.0
      %3695 = vmatpush2.msra.mxu0 %v3619
      %3696 = vmatprep.subr.mxu0 0.0
      %3697 = vmatpush2.msra.mxu0 %v3618
      %3698 = vmatprep.subr.mxu0 0.0
      %3699 = vmatpush2.msra.mxu0 %v3617
      %3700 = vmatprep.subr.mxu0 0.0
      %3701 = vmatpush2.msra.mxu0 %v3616
      %3702 = vmatprep.subr.mxu0 0.0
      %3703 = vmatpush2.msra.mxu0 %v3615
      %3704 = vmatprep.subr.mxu0 0.0
      %3705 = vmatpush2.msra.mxu0 %v3614
      %3706 = vmatprep.subr.mxu0 0.0
      %3707 = vmatpush2.msra.mxu0 %v3613
      %3708 = vmatprep.subr.mxu0 0.0
      %3709 = vmatpush2.msra.mxu0 %v3612
      %3710 = vmatprep.subr.mxu0 0.0
      %3711 = vmatpush2.msra.mxu0 %v3611
      %3712 = vmatprep.subr.mxu0 0.0
      %3713 = vmatpush2.msra.mxu0 %v3610
      %3714 = vmatprep.subr.mxu0 0.0
      %3715 = vmatpush2.msra.mxu0 %v3609
      %3716 = vmatprep.mubr.f32.mxu0 %v3590
      %3717 = vmatmul.mubr.f32.gmra.mxu0 %v3589
      %v3718 = vpop.f32.mrf.mxu0
      %v3719 = vadd.f32 %v3647, %v3718
      %v3720 = vpop.f32.mrf.mxu0
      %3721 = vdwg.mxu0
      %3722 = vmatprep.subr.mxu0 0.0
      %3723 = vmatpush1.msra.mxu0 %v3640
      %3724 = vmatprep.subr.mxu0 0.0
      %3725 = vmatpush1.msra.mxu0 %v3639
      %3726 = vmatprep.subr.mxu0 0.0
      %3727 = vmatpush1.msra.mxu0 %v3638
      %3728 = vmatprep.subr.mxu0 0.0
      %3729 = vmatpush1.msra.mxu0 %v3637
      %3730 = vmatprep.subr.mxu0 0.0
      %3731 = vmatpush1.msra.mxu0 %v3636
      %3732 = vmatprep.subr.mxu0 0.0
      %3733 = vmatpush1.msra.mxu0 %v3635
      %3734 = vmatprep.subr.mxu0 0.0
      %3735 = vmatpush1.msra.mxu0 %v3634
      %3736 = vmatprep.subr.mxu0 0.0
      %3737 = vmatpush1.msra.mxu0 %v3633
      %3738 = vmatprep.subr.mxu0 0.0
      %3739 = vmatpush1.msra.mxu0 %v3632
      %3740 = vmatprep.subr.mxu0 0.0
      %3741 = vmatpush1.msra.mxu0 %v3631
      %3742 = vmatprep.subr.mxu0 0.0
      %3743 = vmatpush1.msra.mxu0 %v3630
      %3744 = vmatprep.subr.mxu0 0.0
      %3745 = vmatpush1.msra.mxu0 %v3629
      %3746 = vmatprep.subr.mxu0 0.0
      %3747 = vmatpush1.msra.mxu0 %v3628
      %3748 = vmatprep.subr.mxu0 0.0
      %3749 = vmatpush1.msra.mxu0 %v3627
      %3750 = vmatprep.subr.mxu0 0.0
      %3751 = vmatpush1.msra.mxu0 %v3626
      %3752 = vmatprep.subr.mxu0 0.0
      %3753 = vmatpush1.msra.mxu0 %v3625
      %3754 = vmatprep.subr.mxu0 0.0
      %3755 = vmatpush2.msra.mxu0 0.0
      %3756 = vmatprep.subr.mxu0 0.0
      %3757 = vmatpush2.msra.mxu0 0.0
      %3758 = vmatprep.subr.mxu0 0.0
      %3759 = vmatpush2.msra.mxu0 0.0
      %3760 = vmatprep.subr.mxu0 0.0
      %3761 = vmatpush2.msra.mxu0 0.0
      %3762 = vmatprep.subr.mxu0 0.0
      %3763 = vmatpush2.msra.mxu0 0.0
      %3764 = vmatprep.subr.mxu0 0.0
      %3765 = vmatpush2.msra.mxu0 0.0
      %3766 = vmatprep.subr.mxu0 0.0
      %3767 = vmatpush2.msra.mxu0 0.0
      %3768 = vmatprep.subr.mxu0 0.0
      %3769 = vmatpush2.msra.mxu0 0.0
      %3770 = vmatprep.subr.mxu0 0.0
      %3771 = vmatpush2.msra.mxu0 0.0
      %3772 = vmatprep.subr.mxu0 0.0
      %3773 = vmatpush2.msra.mxu0 0.0
      %3774 = vmatprep.subr.mxu0 0.0
      %3775 = vmatpush2.msra.mxu0 0.0
      %3776 = vmatprep.subr.mxu0 0.0
      %3777 = vmatpush2.msra.mxu0 0.0
      %3778 = vmatprep.subr.mxu0 0.0
      %3779 = vmatpush2.msra.mxu0 0.0
      %3780 = vmatprep.subr.mxu0 0.0
      %3781 = vmatpush2.msra.mxu0 0.0
      %3782 = vmatprep.subr.mxu0 0.0
      %3783 = vmatpush2.msra.mxu0 0.0
      %3784 = vmatprep.subr.mxu0 0.0
      %3785 = vmatpush2.msra.mxu0 %v3641
      %3786 = vmatprep.mubr.f32.mxu0 %v3650
      %3787 = vmatmul.mubr.f32.gmra.mxu0 %v3591
      %v3788 = vpop.f32.mrf.mxu0
      %v3789 = vadd.f32 %v3719, %v3788
      %v3790 = vpop.f32.mrf.mxu0
      %3791 = vdwg.mxu0
      %v3792 = vsel %vm1225, %v3789, 0.0
      %3793 = vadd.xlane.f32.xlu0 %v3792
      %v3794 = vpop.xlane.xlu0 %3793
      %v3795 = vrcp.pop 16.0
      %v3796 = vmul.f32 %v3794, %v3795
      %v3797 = vsub.f32 %v3789, %v3796
      %v3798 = vmul.f32 %v3797, %v3797
      %v3799 = vsel %vm1225, %v3798, 0.0
      %3800 = vadd.xlane.f32.xlu0 %v3799
      %v3801 = vpop.xlane.xlu0 %3800
      %v3802 = vmul.f32 %v3801, %v3795
      %v3803 = vadd.f32 %v3802, 1e-05
      %v3804 = vrsqrt.pop %v3803
      %v3805 = vmul.f32 %v3797, %v3804
      %v3806 = vld [vmem:[%s11] sm:$0x1]
      %v3808 = vlaneseq
      %v3809 = vshrl.u32 %v3808, 7
      %v3810 = vsub.s32 0, %v3809
      %v3811 = vrot.slane %v3806, %v3810
      %v3813 = vmul.f32 %v3805, %v3811
      %v3814 = vld [vmem:[%s12] sm:$0x1]
      %v3816 = vlaneseq
      %v3817 = vshrl.u32 %v3816, 7
      %v3818 = vsub.s32 0, %v3817
      %v3819 = vrot.slane %v3814, %v3818
      %v3821 = vadd.f32 %v3813, %v3819
      %vm3822 = vcmp.ge.f32.partialorder %v3821, 0.0
      %v3823 = vmul.f32 %v3821, 0.2
      %v3824 = vsel %vm3822, %v3821, %v3823
      %v3825 = vld [vmem:[%s13] sm:$0xff]
      %v3826 = vld [vmem:[%s13 + $0x8] sm:$0xff]
      %v3827 = vld [vmem:[#allocation2] sm:$0x1]
      %v3829 = vlaneseq
      %v3830 = vshrl.u32 %v3829, 7
      %v3831 = vsub.s32 0, %v3830
      %v3832 = vrot.slane %v3827, %v3831
      %v3835 = vsel %vm1225, %v3824, 0
      %3837 = vmatprep.subr.mxu0 0.0
      %3838 = vmatpush1.msra.mxu0 0.0
      %3839 = vmatprep.subr.mxu0 0.0
      %3840 = vmatpush1.msra.mxu0 0.0
      %3841 = vmatprep.subr.mxu0 0.0
      %3842 = vmatpush1.msra.mxu0 0.0
      %3843 = vmatprep.subr.mxu0 0.0
      %3844 = vmatpush1.msra.mxu0 0.0
      %3845 = vmatprep.subr.mxu0 0.0
      %3846 = vmatpush1.msra.mxu0 0.0
      %3847 = vmatprep.subr.mxu0 0.0
      %3848 = vmatpush1.msra.mxu0 0.0
      %3849 = vmatprep.subr.mxu0 0.0
      %3850 = vmatpush1.msra.mxu0 0.0
      %3851 = vmatprep.subr.mxu0 0.0
      %3852 = vmatpush1.msra.mxu0 0.0
      %3853 = vmatprep.subr.mxu0 0.0
      %3854 = vmatpush1.msra.mxu0 0.0
      %3855 = vmatprep.subr.mxu0 0.0
      %3856 = vmatpush1.msra.mxu0 0.0
      %3857 = vmatprep.subr.mxu0 0.0
      %3858 = vmatpush1.msra.mxu0 0.0
      %3859 = vmatprep.subr.mxu0 0.0
      %3860 = vmatpush1.msra.mxu0 0.0
      %3861 = vmatprep.subr.mxu0 0.0
      %3862 = vmatpush1.msra.mxu0 0.0
      %3863 = vmatprep.subr.mxu0 0.0
      %3864 = vmatpush1.msra.mxu0 0.0
      %3865 = vmatprep.subr.mxu0 0.0
      %3866 = vmatpush1.msra.mxu0 %v3826
      %3867 = vmatprep.subr.mxu0 0.0
      %3868 = vmatpush1.msra.mxu0 %v3825
      %3869 = vmatprep.subr.mxu0 0.0
      %3870 = vmatpush2.msra.mxu0 0.0
      %3871 = vmatprep.subr.mxu0 0.0
      %3872 = vmatpush2.msra.mxu0 0.0
      %3873 = vmatprep.subr.mxu0 0.0
      %3874 = vmatpush2.msra.mxu0 0.0
      %3875 = vmatprep.subr.mxu0 0.0
      %3876 = vmatpush2.msra.mxu0 0.0
      %3877 = vmatprep.subr.mxu0 0.0
      %3878 = vmatpush2.msra.mxu0 0.0
      %3879 = vmatprep.subr.mxu0 0.0
      %3880 = vmatpush2.msra.mxu0 0.0
      %3881 = vmatprep.subr.mxu0 0.0
      %3882 = vmatpush2.msra.mxu0 0.0
      %3883 = vmatprep.subr.mxu0 0.0
      %3884 = vmatpush2.msra.mxu0 0.0
      %3885 = vmatprep.subr.mxu0 0.0
      %3886 = vmatpush2.msra.mxu0 0.0
      %3887 = vmatprep.subr.mxu0 0.0
      %3888 = vmatpush2.msra.mxu0 0.0
      %3889 = vmatprep.subr.mxu0 0.0
      %3890 = vmatpush2.msra.mxu0 0.0
      %3891 = vmatprep.subr.mxu0 0.0
      %3892 = vmatpush2.msra.mxu0 0.0
      %3893 = vmatprep.subr.mxu0 0.0
      %3894 = vmatpush2.msra.mxu0 0.0
      %3895 = vmatprep.subr.mxu0 0.0
      %3896 = vmatpush2.msra.mxu0 0.0
      %3897 = vmatprep.subr.mxu0 0.0
      %3898 = vmatpush2.msra.mxu0 0.0
      %3899 = vmatprep.subr.mxu0 0.0
      %3900 = vmatpush2.msra.mxu0 0.0
      %3901 = vmatprep.mubr.f32.mxu0 0.0
      %3902 = vmatmul.mubr.f32.gmra.mxu0 %v3835
      %v3903 = vpop.f32.mrf.mxu0
      %v3904 = vadd.f32 %v3832, %v3903
      %v3905 = vpop.f32.mrf.mxu0
      %3906 = vdwg.mxu0
      %vm3907 = vcmask 7168
      %3908 = vst.msk [vmem:[%s494] sm:$0xff] %vm3907, %v3904
      %p3909 = scmp.lt.s32.totalorder %s28, 1
      %s3910 = scalar_select %p3909, %s28, 1
      %s3911 = smul.addr %s3910, 8
      %s3912 = scalar_lea.vmem %s15, %s3911
      // Predicated region
      $region81: #{discriminator_forward.1} parent=79 // pred_check
        %p3913 = pneg %p366
      $region82: #{discriminator_forward.1} parent=79 // pred_check_branch
        %3915 = sbr.rel (%p3913) target = $region84
      $region83: #{discriminator_forward.1} parent=79 // pred_region
        _
      $region84: #{discriminator_forward.1} parent=79 // pred_fallthru
        _
    $region80: #{discriminator_forward.1} parent=5 // pred_fallthru
      _
    %p3916 = scmp.le.s32.totalorder 2, %s23
    // Predicated region
    $region85: #{discriminator_forward.1} parent=5 // pred_check
      %p3917 = pneg %p3916
    $region86: #{discriminator_forward.1} parent=5 // pred_check_branch
      %3919 = sbr.rel (%p3917) target = $region88
    $region87: #{discriminator_forward.1} parent=5 // pred_region
      %s3920 = ssub.s32 %s23, 2
      // Predicated region
      $region89: #{discriminator_forward.1} parent=87 // pred_check
        %p3921 = pneg %p372
      $region90: #{discriminator_forward.1} parent=87 // pred_check_branch
        %3923 = sbr.rel (%p3921) target = $region92
      $region91: #{discriminator_forward.1} parent=87 // pred_region
        %p3924 = scmp.lt.s32.totalorder %s29, 1
        %s3925 = scalar_select %p3924, %s29, 1
        %s3926 = smul.addr %s3925, 8
        %s3927 = scalar_lea.vmem %s15, %s3926
      $region92: #{discriminator_forward.1} parent=87 // pred_fallthru
        _
    $region88: #{discriminator_forward.1} parent=5 // pred_fallthru
      _
  $region6: #{discriminator_forward.1} parent=0 // loop_footer
    %s27 = sadd.s32 1, %s23
  $region7: #{discriminator_forward.1} parent=0 // loop_footer_branch
    %22 = sbr.rel target = $region3
  $region8: #{discriminator_forward.1} parent=0 // loop_exit
    _

</llo_original>
